<compile_context>
chip_gen: v7x
topology: tpu7x:2x2x1
jax: 0.10.0
libtpu: 0.0.40
codegen_flags: <defaults>
</compile_context>

<pallas_src>
import jax
import jax.numpy as jnp
from jax.experimental import pallas as pl
from jax.experimental.pallas import tpu as pltpu

_MIB = 1024 * 1024


def _round_up(a, b):
    return (a + b - 1) // b * b


def _vmem_budget_bytes():
    """~80% of this chip's physical VMEM, capped at 100 MiB (v5e/v6e: 128 MiB, v7x: 64 MiB)."""
    try:
        cap = pltpu.get_tpu_info().vmem_capacity_bytes
    except Exception:
        cap = 64 * _MIB  # conservative (v7x-sized) fallback
    return int(min(cap * 4 // 5, 100 * _MIB))


def _vmem_estimate(tm, tf, d_model, x_isz, w_isz, o_isz, resident):
    wbuf = 1 if resident else 2  # constant (resident) weight blocks are single-buffered
    return (2 * tm * d_model * x_isz              # x tile (double-buffered)
            + 2 * tm * d_model * o_isz            # out tile
            + wbuf * d_model * tf * w_isz         # W1 slab
            + wbuf * tf * d_model * w_isz         # W2 slab
            + wbuf * 8 * tf * 4                   # b1 (f32, sublane-padded)
            + wbuf * 8 * d_model * 4              # b2 (f32, sublane-padded)
            + (0 if resident else tm * d_model * 4)  # f32 accumulator scratch (tiled path)
            + tm * tf * 4)                        # f32 intermediate h


def _fits(tm, tf, d_model, x_isz, w_isz, o_isz, resident, budget):
    # 20% headroom for compiler internal scratch / layout padding.
    return _vmem_estimate(tm, tf, d_model, x_isz, w_isz, o_isz, resident) * 6 // 5 <= budget


# ----------------------------- kernels -----------------------------

def ffn_kernel_resident(x_ref, w1_ref, b1_ref, w2_ref, b2_ref, o_ref):
    # Grid: (i over M tiles,).  Full W1/W2 resident in VMEM (constant block -> DMA'd once).
    h = jnp.dot(x_ref[...], w1_ref[...], preferred_element_type=jnp.float32) + b1_ref[...]
    h = jnp.maximum(h, 0.0)              # Dropout: identity (eval mode).
    y = jnp.dot(h.astype(w2_ref.dtype), w2_ref[...],
                preferred_element_type=jnp.float32) + b2_ref[...]
    o_ref[...] = y.astype(o_ref.dtype)


def ffn_kernel_tiled_f32out(x_ref, w1_ref, b1_ref, w2_ref, b2_ref, o_ref):
    # Grid: (i over M tiles ["parallel"], k over d_ff slabs ["arbitrary", reduction-last]).
    # f32 output: accumulate directly into the resident output block (no scratch).
    k = pl.program_id(1)

    @pl.when(k == 0)
    def _init():
        o_ref[...] = jnp.broadcast_to(b2_ref[...], o_ref.shape)

    h = jnp.dot(x_ref[...], w1_ref[...], preferred_element_type=jnp.float32) + b1_ref[...]
    h = jnp.maximum(h, 0.0)
    o_ref[...] += jnp.dot(h.astype(w2_ref.dtype), w2_ref[...],
                          preferred_element_type=jnp.float32)


def ffn_kernel_tiled(x_ref, w1_ref, b1_ref, w2_ref, b2_ref, o_ref, acc_ref):
    # Non-f32 output: accumulate into an f32 VMEM scratch; single cast on the last k step.
    k = pl.program_id(1)

    @pl.when(k == 0)
    def _init():
        acc_ref[...] = jnp.broadcast_to(b2_ref[...], acc_ref.shape)

    h = jnp.dot(x_ref[...], w1_ref[...], preferred_element_type=jnp.float32) + b1_ref[...]
    h = jnp.maximum(h, 0.0)
    acc_ref[...] += jnp.dot(h.astype(w2_ref.dtype), w2_ref[...],
                            preferred_element_type=jnp.float32)

    @pl.when(k == pl.num_programs(1) - 1)
    def _finalize():
        o_ref[...] = acc_ref[...].astype(o_ref.dtype)


# ----------------------------- wrapper -----------------------------

def positionwise_ffn(x, w1, b1, w2, b2, *, tm=None, tf=None, compute_dtype=jnp.bfloat16):
    """x: (B, S, d_model) -> (B, S, d_model).   y = relu(x @ W1 + b1) @ W2 + b2.

    compute_dtype: dtype fed to the MXU for x / W1 / W2 (default bf16; pass None to keep the
    input dtypes).  Biases and accumulation always stay f32.
    """
    B, S, d_model = x.shape
    d_ff = w1.shape[1]
    assert d_model % 128 == 0, "d_model must be lane-aligned (multiple of 128)"
    assert d_ff % 128 == 0, "d_ff must be lane-aligned (multiple of 128)"

    out_dtype = x.dtype
    if compute_dtype is not None:
        x = x.astype(compute_dtype)
        w1 = w1.astype(compute_dtype)
        w2 = w2.astype(compute_dtype)
    # Biases stay f32 (no DMA/VMEM benefit to narrowing; they are added to the f32 acc).
    b1_2d = b1.reshape(1, d_ff).astype(jnp.float32)
    b2_2d = b2.reshape(1, d_model).astype(jnp.float32)

    x_isz = jnp.dtype(x.dtype).itemsize
    w_isz = jnp.dtype(w1.dtype).itemsize
    o_isz = jnp.dtype(out_dtype).itemsize
    budget = _vmem_budget_bytes()

    M = B * S

    # --- tf (d_ff slab) selection: prefer full weight residency. ---
    if tf is None:
        if _fits(128, d_ff, d_model, x_isz, w_isz, o_isz, True, budget):
            tf = d_ff
        else:
            tf = d_ff - 128
            while tf > 128 and (tf % 128 != 0 or d_ff % tf != 0
                                or not _fits(128, tf, d_model, x_isz, w_isz, o_isz,
                                             False, budget)):
                tf -= 128
            tf = max(tf, 128)
    else:
        tf = min(tf, d_ff)
        while tf % 128 != 0 or d_ff % tf != 0:
            tf -= 128
        assert tf >= 128
    resident = (tf == d_ff)

    # --- tm (M tile) selection: largest 128-multiple fitting the VMEM budget. ---
    tm_target = 1024 if tm is None else _round_up(max(int(tm), 128), 128)
    tm_cap = min(tm_target, _round_up(M, 128))
    tm_sel = 128
    cand = tm_cap
    while cand >= 128:
        if _fits(cand, tf, d_model, x_isz, w_isz, o_isz, resident, budget):
            tm_sel = cand
            break
        cand -= 128
    tm = tm_sel
    # v7x has 2 TensorCores: keep >= 2 M tiles so the "parallel" axis can shard across both.
    if M > 128 and pl.cdiv(M, tm) < 2:
        tm = max(128, _round_up(pl.cdiv(M, 2), 128))
    # Avoid the jnp.pad HBM copy when a smaller 128-multiple divides M exactly.
    if M % tm != 0:
        cand = tm - 128
        while cand >= 128:
            if M % cand == 0:
                tm = cand
                break
            cand -= 128
    Mp = _round_up(M, tm)

    x2 = x.reshape(M, d_model)
    if Mp != M:
        x2 = jnp.pad(x2, ((0, Mp - M), (0, 0)))

    num_m = Mp // tm
    num_k = d_ff // tf

    # Scoped-VMEM limit from the real tile footprint (+50% headroom), capped at the budget
    # (~80% of physical VMEM) so the compiler keeps slack for internal scratch.
    est = _vmem_estimate(tm, tf, d_model, x_isz, w_isz, o_isz, resident)
    vmem_limit = int(min(budget, max(est * 3 // 2, 16 * _MIB)))

    # Advisory cost hint; weights counted once when resident, once per M tile otherwise.
    w_bytes = 2 * d_model * d_ff * w_isz
    cost = pl.CostEstimate(
        flops=4 * Mp * d_model * d_ff,
        transcendentals=0,
        bytes_accessed=(Mp * d_model * x_isz
                        + (w_bytes if resident else num_m * w_bytes)
                        + 4 * d_ff + 4 * d_model
                        + Mp * d_model * o_isz),
    )

    out_shape = jax.ShapeDtypeStruct((Mp, d_model), out_dtype)

    def _call(single_buffer_weights):
        if resident:
            def wspec(shape):
                if single_buffer_weights:
                    return pl.BlockSpec(shape, lambda i: (0, 0),
                                        pipeline_mode=pl.Buffered(1))
                return pl.BlockSpec(shape, lambda i: (0, 0))
            grid = (num_m,)
            in_specs = [
                pl.BlockSpec((tm, d_model), lambda i: (i, 0)),    # x tile
                wspec((d_model, d_ff)),                           # full W1 (resident)
                wspec((1, d_ff)),                                 # b1 (f32)
                wspec((d_ff, d_model)),                           # full W2 (resident)
                wspec((1, d_model)),                              # b2 (f32)
            ]
            out_specs = pl.BlockSpec((tm, d_model), lambda i: (i, 0))
            kernel, scratch = ffn_kernel_resident, []
            dims = ("parallel",)
        else:
            grid = (num_m, num_k)
            in_specs = [
                pl.BlockSpec((tm, d_model), lambda i, k: (i, 0)),   # x tile (constant over k)
                pl.BlockSpec((d_model, tf), lambda i, k: (0, k)),   # W1 column slab
                pl.BlockSpec((1, tf), lambda i, k: (0, k)),         # b1 slab (f32)
                pl.BlockSpec((tf, d_model), lambda i, k: (k, 0)),   # W2 row slab
                pl.BlockSpec((1, d_model), lambda i, k: (0, 0)),    # b2 (f32)
            ]
            out_specs = pl.BlockSpec((tm, d_model), lambda i, k: (i, 0))
            if jnp.dtype(out_dtype) == jnp.dtype(jnp.float32):
                kernel, scratch = ffn_kernel_tiled_f32out, []
            else:
                kernel, scratch = ffn_kernel_tiled, [pltpu.VMEM((tm, d_model), jnp.float32)]
            dims = ("parallel", "arbitrary")
        return pl.pallas_call(
            kernel,
            out_shape=out_shape,
            grid_spec=pltpu.PrefetchScalarGridSpec(
                num_scalar_prefetch=0, grid=grid,
                in_specs=in_specs, out_specs=out_specs, scratch_shapes=scratch),
            compiler_params=pltpu.CompilerParams(
                dimension_semantics=dims, vmem_limit_bytes=vmem_limit),
            cost_estimate=cost,
        )(x2, w1, b1_2d, w2, b2_2d)

    if resident:
        try:
            out2 = _call(True)       # single-buffer the constant weight blocks
        except Exception:
            out2 = _call(False)      # fall back if Buffered(1) is rejected by this JAX build
    else:
        out2 = _call(False)

    out2 = out2[:M] if Mp != M else out2
    return out2.reshape(B, S, d_model)


def init_params(key, d_model, d_ff, dtype=jnp.float32):
    # Mirror PyTorch nn.Linear default init: U(-1/sqrt(fan_in), 1/sqrt(fan_in)).
    k1, k2, k3, k4 = jax.random.split(key, 4)
    bound1 = 1.0 / (d_model ** 0.5)
    bound2 = 1.0 / (d_ff ** 0.5)
    w1 = jax.random.uniform(k1, (d_model, d_ff), dtype, -bound1, bound1)
    b1 = jax.random.uniform(k2, (d_ff,), dtype, -bound1, bound1)
    w2 = jax.random.uniform(k3, (d_ff, d_model), dtype, -bound2, bound2)
    b2 = jax.random.uniform(k4, (d_model,), dtype, -bound2, bound2)
    return w1, b1, w2, b2


if __name__ == "__main__":
    # Small shapes consistent with the module's transformer (scaled-down n_patches / d_model /
    # d_ff): B=2, S=256 tokens, d_model=128, d_ff=512.
    # Note: with d_model=128 the second matmul's N only half-fills the 256-wide v6e/v7x MXU;
    # the production model (d_model=768, d_ff=2048) fully feeds it.
    B, S, d_model, d_ff = 2, 256, 128, 512

    key = jax.random.PRNGKey(0)
    kx, kp = jax.random.split(key)
    x = jax.random.normal(kx, (B, S, d_model), jnp.float32)
    w1, b1, w2, b2 = init_params(kp, d_model, d_ff)

    # Pure-JAX reference (f32).
    ref = jnp.maximum(x @ w1 + b1, 0.0) @ w2 + b2

    # Default path: bf16 MXU inputs, full weight residency, f32 biases + accumulation.
    out = jax.block_until_ready(positionwise_ffn(x, w1, b1, w2, b2))
    assert out.shape == (B, S, d_model)
    assert jnp.allclose(out, ref, atol=5e-2, rtol=5e-2), "bf16 resident mismatch vs reference"

    # f32 MXU-input path, full weight residency.
    out_f32 = jax.block_until_ready(positionwise_ffn(x, w1, b1, w2, b2, compute_dtype=None))
    assert jnp.allclose(out_f32, ref, atol=1e-4, rtol=1e-4), "f32 resident mismatch vs reference"

    # Forced d_ff tiling (grid = (M tiles, 2 slabs)) to exercise the reduction path:
    #   f32 output -> accumulate directly into the resident output block (no scratch).
    out_tiled = jax.block_until_ready(
        positionwise_ffn(x, w1, b1, w2, b2, tf=256, compute_dtype=None))
    assert jnp.allclose(out_tiled, ref, atol=1e-4, rtol=1e-4), "f32 tiled mismatch vs reference"

    #   bf16 output -> f32 VMEM scratch accumulator, cast once on the last slab.
    out_bf16_tiled = jax.block_until_ready(
        positionwise_ffn(x.astype(jnp.bfloat16), w1, b1, w2, b2, tf=256))
    assert out_bf16_tiled.dtype == jnp.bfloat16
    assert jnp.allclose(out_bf16_tiled.astype(jnp.float32), ref, atol=5e-2, rtol=5e-2), \
        "bf16 tiled mismatch vs reference"

    print("KERNEL_OK")
</pallas_src>

<mosaic_0001>
module attributes {stable_mosaic.version = 11 : i64} {
  func.func @ffn_kernel_resident(%arg0: i32, %arg1: memref<256x128xbf16, #tpu.memory_space<vmem>>, %arg2: memref<128x512xbf16, #tpu.memory_space<vmem>>, %arg3: memref<1x512xf32, #tpu.memory_space<vmem>>, %arg4: memref<512x128xbf16, #tpu.memory_space<vmem>>, %arg5: memref<1x128xf32, #tpu.memory_space<vmem>>, %arg6: memref<256x128xf32, #tpu.memory_space<vmem>>) attributes {dimension_semantics = [#tpu.dimension_semantics<parallel>], iteration_bounds = array<i64: 2>, scalar_prefetch = 0 : i64, scratch_operands = 0 : i64, tpu.core_type = #tpu.core_type<tc>, window_params = [{transform_indices = @transform_0, window_bounds = array<i64: 256, 128>}, {pipeline_mode = #tpu.pipeline_mode<synchronous>, transform_indices = @transform_1, window_bounds = array<i64: 128, 512>}, {pipeline_mode = #tpu.pipeline_mode<synchronous>, transform_indices = @transform_2, window_bounds = array<i64: 1, 512>}, {pipeline_mode = #tpu.pipeline_mode<synchronous>, transform_indices = @transform_3, window_bounds = array<i64: 512, 128>}, {pipeline_mode = #tpu.pipeline_mode<synchronous>, transform_indices = @transform_4, window_bounds = array<i64: 1, 128>}, {transform_indices = @transform_5, window_bounds = array<i64: 256, 128>}]} {
    %c0 = arith.constant 0 : index
    %c0_0 = arith.constant 0 : index
    %0 = vector.load %arg1[%c0, %c0_0] : memref<256x128xbf16, #tpu.memory_space<vmem>>, vector<256x128xbf16>
    %c0_1 = arith.constant 0 : index
    %c0_2 = arith.constant 0 : index
    %1 = vector.load %arg2[%c0_1, %c0_2] : memref<128x512xbf16, #tpu.memory_space<vmem>>, vector<128x512xbf16>
    %cst = arith.constant dense<0.000000e+00> : vector<256x512xf32>
    %2 = tpu.matmul %0, %1, %cst {dimension_numbers = #tpu.dot_dimension_numbers<[1], [0], [0], [1], [0, 0, 1, 1], [], []>} : vector<256x128xbf16>, vector<128x512xbf16>, vector<256x512xf32> -> vector<256x512xf32>
    %c0_3 = arith.constant 0 : index
    %c0_4 = arith.constant 0 : index
    %3 = vector.load %arg3[%c0_3, %c0_4] : memref<1x512xf32, #tpu.memory_space<vmem>>, vector<1x512xf32>
    %4 = vector.broadcast %3 : vector<1x512xf32> to vector<256x512xf32>
    %5 = arith.addf %2, %4 : vector<256x512xf32>
    %cst_5 = arith.constant 0.000000e+00 : f32
    %6 = vector.broadcast %cst_5 : f32 to vector<256x512xf32>
    %7 = arith.maximumf %5, %6 : vector<256x512xf32>
    %8 = arith.truncf %7 : vector<256x512xf32> to vector<256x512xbf16>
    %c0_6 = arith.constant 0 : index
    %c0_7 = arith.constant 0 : index
    %9 = vector.load %arg4[%c0_6, %c0_7] : memref<512x128xbf16, #tpu.memory_space<vmem>>, vector<512x128xbf16>
    %cst_8 = arith.constant dense<0.000000e+00> : vector<256x128xf32>
    %10 = tpu.matmul %8, %9, %cst_8 {dimension_numbers = #tpu.dot_dimension_numbers<[1], [0], [0], [1], [0, 0, 1, 1], [], []>} : vector<256x512xbf16>, vector<512x128xbf16>, vector<256x128xf32> -> vector<256x128xf32>
    %c0_9 = arith.constant 0 : index
    %c0_10 = arith.constant 0 : index
    %11 = vector.load %arg5[%c0_9, %c0_10] : memref<1x128xf32, #tpu.memory_space<vmem>>, vector<1x128xf32>
    %12 = vector.broadcast %11 : vector<1x128xf32> to vector<256x128xf32>
    %13 = arith.addf %10, %12 : vector<256x128xf32>
    %c0_11 = arith.constant 0 : index
    %c0_12 = arith.constant 0 : index
    %14 = vector.load %arg6[%c0_11, %c0_12] : memref<256x128xf32, #tpu.memory_space<vmem>>, vector<256x128xf32>
    tpu.vector_store %arg6[%c0_11, %c0_12], %13 {strides = array<i32>} : memref<256x128xf32, #tpu.memory_space<vmem>>, vector<256x128xf32>,
    return
  }
  func.func @transform_0(%arg0: i32) -> (i32, i32) {
    %c0_i32 = arith.constant 0 : i32
    %c0_i32_0 = arith.constant 0 : i32
    return %arg0, %c0_i32 : i32, i32
  }
  func.func @transform_1(%arg0: i32) -> (i32, i32) {
    %c0_i32 = arith.constant 0 : i32
    %c0_i32_0 = arith.constant 0 : i32
    %c0_i32_1 = arith.constant 0 : i32
    return %c0_i32, %c0_i32_0 : i32, i32
  }
  func.func @transform_2(%arg0: i32) -> (i32, i32) {
    %c0_i32 = arith.constant 0 : i32
    %c0_i32_0 = arith.constant 0 : i32
    %c0_i32_1 = arith.constant 0 : i32
    return %c0_i32, %c0_i32_0 : i32, i32
  }
  func.func @transform_3(%arg0: i32) -> (i32, i32) {
    %c0_i32 = arith.constant 0 : i32
    %c0_i32_0 = arith.constant 0 : i32
    %c0_i32_1 = arith.constant 0 : i32
    return %c0_i32, %c0_i32_0 : i32, i32
  }
  func.func @transform_4(%arg0: i32) -> (i32, i32) {
    %c0_i32 = arith.constant 0 : i32
    %c0_i32_0 = arith.constant 0 : i32
    %c0_i32_1 = arith.constant 0 : i32
    return %c0_i32, %c0_i32_0 : i32, i32
  }
  func.func @transform_5(%arg0: i32) -> (i32, i32) {
    %c0_i32 = arith.constant 0 : i32
    %c0_i32_0 = arith.constant 0 : i32
    return %arg0, %c0_i32 : i32, i32
  }
}

module attributes {stable_mosaic.version = 11 : i64} {
  func.func @ffn_kernel_resident(%arg0: i32, %arg1: memref<256x128xbf16, #tpu.memory_space<vmem>>, %arg2: memref<128x512xbf16, #tpu.memory_space<vmem>>, %arg3: memref<1x512xf32, #tpu.memory_space<vmem>>, %arg4: memref<512x128xbf16, #tpu.memory_space<vmem>>, %arg5: memref<1x128xf32, #tpu.memory_space<vmem>>, %arg6: memref<256x128xf32, #tpu.memory_space<vmem>>) attributes {dimension_semantics = [#tpu.dimension_semantics<parallel>], iteration_bounds = array<i64: 2>, scalar_prefetch = 0 : i64, scratch_operands = 0 : i64, tpu.core_type = #tpu.core_type<tc>, window_params = [{transform_indices = @transform_0, window_bounds = array<i64: 256, 128>}, {pipeline_mode = #tpu.pipeline_mode<synchronous>, transform_indices = @transform_1, window_bounds = array<i64: 128, 512>}, {pipeline_mode = #tpu.pipeline_mode<synchronous>, transform_indices = @transform_2, window_bounds = array<i64: 1, 512>}, {pipeline_mode = #tpu.pipeline_mode<synchronous>, transform_indices = @transform_3, window_bounds = array<i64: 512, 128>}, {pipeline_mode = #tpu.pipeline_mode<synchronous>, transform_indices = @transform_4, window_bounds = array<i64: 1, 128>}, {transform_indices = @transform_5, window_bounds = array<i64: 256, 128>}]} {
    %c0 = arith.constant 0 : index
    %c0_0 = arith.constant 0 : index
    %0 = vector.load %arg1[%c0, %c0_0] : memref<256x128xbf16, #tpu.memory_space<vmem>>, vector<256x128xbf16>
    %c0_1 = arith.constant 0 : index
    %c0_2 = arith.constant 0 : index
    %1 = vector.load %arg2[%c0_1, %c0_2] : memref<128x512xbf16, #tpu.memory_space<vmem>>, vector<128x512xbf16>
    %cst = arith.constant dense<0.000000e+00> : vector<256x512xf32>
    %2 = tpu.matmul %0, %1, %cst {dimension_numbers = #tpu.dot_dimension_numbers<[1], [0], [0], [1], [0, 0, 1, 1], [], []>} : vector<256x128xbf16>, vector<128x512xbf16>, vector<256x512xf32> -> vector<256x512xf32>
    %c0_3 = arith.constant 0 : index
    %c0_4 = arith.constant 0 : index
    %3 = vector.load %arg3[%c0_3, %c0_4] : memref<1x512xf32, #tpu.memory_space<vmem>>, vector<1x512xf32>
    %4 = vector.broadcast %3 : vector<1x512xf32> to vector<256x512xf32>
    %5 = arith.addf %2, %4 : vector<256x512xf32>
    %cst_5 = arith.constant 0.000000e+00 : f32
    %6 = vector.broadcast %cst_5 : f32 to vector<256x512xf32>
    %7 = arith.maximumf %5, %6 : vector<256x512xf32>
    %8 = arith.truncf %7 : vector<256x512xf32> to vector<256x512xbf16>
    %c0_6 = arith.constant 0 : index
    %c0_7 = arith.constant 0 : index
    %9 = vector.load %arg4[%c0_6, %c0_7] : memref<512x128xbf16, #tpu.memory_space<vmem>>, vector<512x128xbf16>
    %cst_8 = arith.constant dense<0.000000e+00> : vector<256x128xf32>
    %10 = tpu.matmul %8, %9, %cst_8 {dimension_numbers = #tpu.dot_dimension_numbers<[1], [0], [0], [1], [0, 0, 1, 1], [], []>} : vector<256x512xbf16>, vector<512x128xbf16>, vector<256x128xf32> -> vector<256x128xf32>
    %c0_9 = arith.constant 0 : index
    %c0_10 = arith.constant 0 : index
    %11 = vector.load %arg5[%c0_9, %c0_10] : memref<1x128xf32, #tpu.memory_space<vmem>>, vector<1x128xf32>
    %12 = vector.broadcast %11 : vector<1x128xf32> to vector<256x128xf32>
    %13 = arith.addf %10, %12 : vector<256x128xf32>
    %c0_11 = arith.constant 0 : index
    %c0_12 = arith.constant 0 : index
    %14 = vector.load %arg6[%c0_11, %c0_12] : memref<256x128xf32, #tpu.memory_space<vmem>>, vector<256x128xf32>
    tpu.vector_store %arg6[%c0_11, %c0_12], %13 {strides = array<i32>} : memref<256x128xf32, #tpu.memory_space<vmem>>, vector<256x128xf32>,
    return
  }
  func.func @transform_0(%arg0: i32) -> (i32, i32) {
    %c0_i32 = arith.constant 0 : i32
    %c0_i32_0 = arith.constant 0 : i32
    return %arg0, %c0_i32 : i32, i32
  }
  func.func @transform_1(%arg0: i32) -> (i32, i32) {
    %c0_i32 = arith.constant 0 : i32
    %c0_i32_0 = arith.constant 0 : i32
    %c0_i32_1 = arith.constant 0 : i32
    return %c0_i32, %c0_i32_0 : i32, i32
  }
  func.func @transform_2(%arg0: i32) -> (i32, i32) {
    %c0_i32 = arith.constant 0 : i32
    %c0_i32_0 = arith.constant 0 : i32
    %c0_i32_1 = arith.constant 0 : i32
    return %c0_i32, %c0_i32_0 : i32, i32
  }
  func.func @transform_3(%arg0: i32) -> (i32, i32) {
    %c0_i32 = arith.constant 0 : i32
    %c0_i32_0 = arith.constant 0 : i32
    %c0_i32_1 = arith.constant 0 : i32
    return %c0_i32, %c0_i32_0 : i32, i32
  }
  func.func @transform_4(%arg0: i32) -> (i32, i32) {
    %c0_i32 = arith.constant 0 : i32
    %c0_i32_0 = arith.constant 0 : i32
    %c0_i32_1 = arith.constant 0 : i32
    return %c0_i32, %c0_i32_0 : i32, i32
  }
  func.func @transform_5(%arg0: i32) -> (i32, i32) {
    %c0_i32 = arith.constant 0 : i32
    %c0_i32_0 = arith.constant 0 : i32
    return %arg0, %c0_i32 : i32, i32
  }
}

</mosaic_0001>

<llo_original>
// kernel: tpu_custom_call.1
$region0: #{tpu_custom_call.1}
  #allocation0 [shape = 'u32[]', space=smem, size = 0x4, offset = 0x4, fixed_abs, tag = 'smem constant byte address 0x4 - core index']
  #allocation1 [shape = 'u32[144,128]{1,0:T(1,128)}', space=vmem, size = 0x12000, scoped, tag = 'internal scratch']
  %s0 = inlined_call_operand.hbm [shape: bf16[512,128], index: 0, kind: input, shape index: {}]
  %s1 = inlined_call_operand.hbm [shape: bf16[128,512], index: 1, kind: input, shape index: {}]
  %s2 = inlined_call_operand.vmem [shape: f32[1,512], index: 2, kind: input, shape index: {}]
  %s3 = inlined_call_operand.hbm [shape: bf16[512,128], index: 3, kind: input, shape index: {}]
  %s4 = inlined_call_operand.vmem [shape: f32[1,128], index: 4, kind: input, shape index: {}]
  %s5 = inlined_call_operand.hbm [shape: f32[512,128], index: 5, kind: output, shape index: {}]
  %s6 = sld [smem:[#allocation0]]
  $region65: #{tpu_custom_call.1} parent=0
    _
  %s8 = ssub.s32 1, %s6
  %s9 = scalar_select 0, %s8, %s6
  $region1: #{tpu_custom_call.1} parent=0
    #allocation2 [shape = 'u8[131072]{0}', space=vmem, size = 0x20000, scoped, tag = 'input window, operand 0']
    #allocation3 [shape = 's32[2]{0}', space=sflag, size = 0x8, scoped, tag = 'scoped memory for tpu_custom_call.1']
    #allocation4 [shape = 's32[2]{0}', space=sflag, size = 0x8, scoped, tag = 'scoped memory for tpu_custom_call.1']
    #allocation5 [shape = 'u8[131072]{0}', space=vmem, size = 0x20000, scoped, tag = 'input window, operand 1, single buffered']
    #allocation6 [shape = 's32[1]{0}', space=sflag, size = 0x4, scoped, tag = 'scoped memory for tpu_custom_call.1']
    #allocation7 [shape = 'u8[131072]{0}', space=vmem, size = 0x20000, scoped, tag = 'input window, operand 3, single buffered']
    #allocation8 [shape = 'u8[262144]{0}', space=vmem, size = 0x40000, scoped, tag = 'output window, operand 0']
    %10 = vsyncpa [#allocation3], 0
    %s11 = scalar_lea.sflag [#allocation3], 1
    %12 = vsyncpa %s11, 0
    %13 = vsyncpa [#allocation6], 0
    %14 = vsyncpa [#allocation4], 0
    %s15 = scalar_lea.sflag [#allocation4], 1
    %16 = vsyncpa %s15, 0
    loop: start=0, step=1, limit=4
    $region2: #{tpu_custom_call.1} parent=1 // loop_pre_header
      _
    $region3: #{tpu_custom_call.1} parent=1 // loop_header
      %s18 = sphi 0, %s22
      %p19 = scmp.ge.s32.totalorder %s18, 4
      %s28 = sphi 0, %s30
      %s31 = sphi 0, %s28
      %s32 = sphi 0, %s31
      %s48 = sphi 0, %s32
      %s52 = sphi 0, %s52
      %s54 = sphi 0, %s52
      %s55 = sphi 0, %s54
      %s69 = sphi 0, %s55
      %s73 = sphi 0, %s73
      %s75 = sphi 0, %s73
      %s76 = sphi 0, %s75
      %s90 = sphi 0, %s76
      %s94 = sphi 0, %s94
      %s96 = sphi 0, %s94
      %s97 = sphi 0, %s96
      %s111 = sphi 0, %s97
      %s115 = sphi 0, %s115
      %s117 = sphi 0, %s115
      %s118 = sphi 0, %s117
      %s132 = sphi 0, %s118
      %s138 = sphi 0, %s140
      %s141 = sphi 0, %s138
      %s142 = sphi 0, %s141
      %s158 = sphi 0, %s142
    $region4: #{tpu_custom_call.1} parent=1 // loop_header_branch
      %21 = sbr.rel (%p19) target = $region8
    $region5: #{tpu_custom_call.1} parent=1 // loop_body
      %s23 = ssub.s32 %s18, 1
      %s24 = ssub.s32 %s18, 2
      %s25 = sadd.s32 %s18, 1
      %s26 = ssub.s32 %s18, %s25
      %p27 = scmp.eq.s32.totalorder %s26, 0
      %s29 = sadd.s32 %s28, 1
      %s30 = scalar_select %p27, %s28, %s29
      %p33 = pneg %p27
      %p34 = scmp.eq.s32.totalorder %s18, 1
      %p35 = por %p33, %p34
      %p36 = scmp.ne.s32.totalorder %s28, %s31
      %p37 = scmp.eq.s32.totalorder %s18, 0
      %p38 = por %p36, %p37
      %p39 = scmp.ne.s32.totalorder %s28, %s31
      %p40 = scmp.eq.s32.totalorder %s23, 1
      %p41 = por %p39, %p40
      %p42 = scmp.ne.s32.totalorder %s31, %s32
      %p43 = scmp.eq.s32.totalorder %s23, 0
      %p44 = por %p42, %p43
      %p45 = scmp.ne.s32.totalorder %s31, %s32
      %p46 = scmp.eq.s32.totalorder %s24, 1
      %p47 = por %p45, %p46
      %p49 = scmp.ne.s32.totalorder %s32, %s48
      %p50 = scmp.eq.s32.totalorder %s24, 0
      %p51 = por %p49, %p50
      %s53 = sadd.s32 %s52, 1
      %p56 = scmp.eq.s32.totalorder %s18, 1
      %p57 = scmp.ne.s32.totalorder %s52, %s54
      %p58 = scmp.eq.s32.totalorder %s18, 0
      %p59 = por %p57, %p58
      %p60 = scmp.ne.s32.totalorder %s52, %s54
      %p61 = scmp.eq.s32.totalorder %s23, 1
      %p62 = por %p60, %p61
      %p63 = scmp.ne.s32.totalorder %s54, %s55
      %p64 = scmp.eq.s32.totalorder %s23, 0
      %p65 = por %p63, %p64
      %p66 = scmp.ne.s32.totalorder %s54, %s55
      %p67 = scmp.eq.s32.totalorder %s24, 1
      %p68 = por %p66, %p67
      %p70 = scmp.ne.s32.totalorder %s55, %s69
      %p71 = scmp.eq.s32.totalorder %s24, 0
      %p72 = por %p70, %p71
      %s74 = sadd.s32 %s73, 1
      %p77 = scmp.eq.s32.totalorder %s18, 1
      %p78 = scmp.ne.s32.totalorder %s73, %s75
      %p79 = scmp.eq.s32.totalorder %s18, 0
      %p80 = por %p78, %p79
      %p81 = scmp.ne.s32.totalorder %s73, %s75
      %p82 = scmp.eq.s32.totalorder %s23, 1
      %p83 = por %p81, %p82
      %p84 = scmp.ne.s32.totalorder %s75, %s76
      %p85 = scmp.eq.s32.totalorder %s23, 0
      %p86 = por %p84, %p85
      %p87 = scmp.ne.s32.totalorder %s75, %s76
      %p88 = scmp.eq.s32.totalorder %s24, 1
      %p89 = por %p87, %p88
      %p91 = scmp.ne.s32.totalorder %s76, %s90
      %p92 = scmp.eq.s32.totalorder %s24, 0
      %p93 = por %p91, %p92
      %s95 = sadd.s32 %s94, 1
      %p98 = scmp.eq.s32.totalorder %s18, 1
      %p99 = scmp.ne.s32.totalorder %s94, %s96
      %p100 = scmp.eq.s32.totalorder %s18, 0
      %p101 = por %p99, %p100
      %p102 = scmp.ne.s32.totalorder %s94, %s96
      %p103 = scmp.eq.s32.totalorder %s23, 1
      %p104 = por %p102, %p103
      %p105 = scmp.ne.s32.totalorder %s96, %s97
      %p106 = scmp.eq.s32.totalorder %s23, 0
      %p107 = por %p105, %p106
      %p108 = scmp.ne.s32.totalorder %s96, %s97
      %p109 = scmp.eq.s32.totalorder %s24, 1
      %p110 = por %p108, %p109
      %p112 = scmp.ne.s32.totalorder %s97, %s111
      %p113 = scmp.eq.s32.totalorder %s24, 0
      %p114 = por %p112, %p113
      %s116 = sadd.s32 %s115, 1
      %p119 = scmp.eq.s32.totalorder %s18, 1
      %p120 = scmp.ne.s32.totalorder %s115, %s117
      %p121 = scmp.eq.s32.totalorder %s18, 0
      %p122 = por %p120, %p121
      %p123 = scmp.ne.s32.totalorder %s115, %s117
      %p124 = scmp.eq.s32.totalorder %s23, 1
      %p125 = por %p123, %p124
      %p126 = scmp.ne.s32.totalorder %s117, %s118
      %p127 = scmp.eq.s32.totalorder %s23, 0
      %p128 = por %p126, %p127
      %p129 = scmp.ne.s32.totalorder %s117, %s118
      %p130 = scmp.eq.s32.totalorder %s24, 1
      %p131 = por %p129, %p130
      %p133 = scmp.ne.s32.totalorder %s118, %s132
      %p134 = scmp.eq.s32.totalorder %s24, 0
      %p135 = por %p133, %p134
      %s136 = ssub.s32 %s18, %s25
      %p137 = scmp.eq.s32.totalorder %s136, 0
      %s139 = sadd.s32 %s138, 1
      %s140 = scalar_select %p137, %s138, %s139
      %p143 = pneg %p137
      %p144 = scmp.eq.s32.totalorder %s18, 1
      %p145 = por %p143, %p144
      %p146 = scmp.ne.s32.totalorder %s138, %s141
      %p147 = scmp.eq.s32.totalorder %s18, 0
      %p148 = por %p146, %p147
      %p149 = scmp.ne.s32.totalorder %s138, %s141
      %p150 = scmp.eq.s32.totalorder %s23, 1
      %p151 = por %p149, %p150
      %p152 = scmp.ne.s32.totalorder %s141, %s142
      %p153 = scmp.eq.s32.totalorder %s23, 0
      %p154 = por %p152, %p153
      %p155 = scmp.ne.s32.totalorder %s141, %s142
      %p156 = scmp.eq.s32.totalorder %s24, 1
      %p157 = por %p155, %p156
      %p159 = scmp.ne.s32.totalorder %s142, %s158
      %p160 = scmp.eq.s32.totalorder %s24, 0
      %p161 = por %p159, %p160
      %p162 = scmp.le.s32.totalorder 1, %s18
      %p163 = scmp.lt.s32.totalorder %s18, 3
      %p164 = pnand %p162, %p163
      %p165 = pneg %p164
      // Predicated region
      $region9: #{tpu_custom_call.1} parent=5 // pred_check
        _
      $region10: #{tpu_custom_call.1} parent=5 // pred_check_branch
        %167 = sbr.rel (%p164) target = $region12
      $region11: #{tpu_custom_call.1} parent=5 // pred_region
        %s168 = ssub.s32 %s18, 1
        // Predicated region
        $region13: #{tpu_custom_call.1} parent=11 // pred_check
          %p169 = pneg %p65
        $region14: #{tpu_custom_call.1} parent=11 // pred_check_branch
          %171 = sbr.rel (%p169) target = $region16
        $region15: #{tpu_custom_call.1} parent=11 // pred_region
          %s173 = ssub.s32 4096, 4096
          %174 = vsyncadd [#allocation6], %s173
          %s175 = sshll.u32 [#allocation5], 4
          %s176 = int_to_ptr.vmem [resolvable:$true] %s175
          %181 = dma.hbm_to_vmem [thread:$0]  %s1, 4096, %s176, [#allocation6], 256, 256, 16
        $region16: #{tpu_custom_call.1} parent=11 // pred_fallthru
          _
        // Predicated region
        $region17: #{tpu_custom_call.1} parent=11 // pred_check
          %p182 = pneg %p86
        $region18: #{tpu_custom_call.1} parent=11 // pred_check_branch
          %184 = sbr.rel (%p182) target = $region20
        $region19: #{tpu_custom_call.1} parent=11 // pred_region
          _
        $region20: #{tpu_custom_call.1} parent=11 // pred_fallthru
          _
        // Predicated region
        $region21: #{tpu_custom_call.1} parent=11 // pred_check
          %p185 = pneg %p107
        $region22: #{tpu_custom_call.1} parent=11 // pred_check_branch
          %187 = sbr.rel (%p185) target = $region24
        $region23: #{tpu_custom_call.1} parent=11 // pred_region
          %s189 = ssub.s32 4096, 4096
          %190 = vsyncadd [#allocation6], %s189
          %s191 = sshll.u32 [#allocation7], 4
          %s192 = int_to_ptr.vmem [resolvable:$true] %s191
          %197 = dma.hbm_to_vmem [thread:$0]  %s3, 4096, %s192, [#allocation6], 64, 64, 4
        $region24: #{tpu_custom_call.1} parent=11 // pred_fallthru
          _
        // Predicated region
        $region25: #{tpu_custom_call.1} parent=11 // pred_check
          %p198 = pneg %p128
        $region26: #{tpu_custom_call.1} parent=11 // pred_check_branch
          %200 = sbr.rel (%p198) target = $region28
        $region27: #{tpu_custom_call.1} parent=11 // pred_region
          _
        $region28: #{tpu_custom_call.1} parent=11 // pred_fallthru
          _
      $region12: #{tpu_custom_call.1} parent=5 // pred_fallthru
        _
      %p201 = scmp.lt.s32.totalorder %s18, 2
      // Predicated region
      $region29: #{tpu_custom_call.1} parent=5 // pred_check
        %p202 = pneg %p201
      $region30: #{tpu_custom_call.1} parent=5 // pred_check_branch
        %204 = sbr.rel (%p202) target = $region32
      $region31: #{tpu_custom_call.1} parent=5 // pred_region
        // Predicated region
        $region33: #{tpu_custom_call.1} parent=31 // pred_check
          %p205 = pneg %p38
        $region34: #{tpu_custom_call.1} parent=31 // pred_check_branch
          %207 = sbr.rel (%p205) target = $region36
        $region35: #{tpu_custom_call.1} parent=31 // pred_region
          %s208 = sand.u32 %s28, 1
          %s209 = scalar_lea.sflag [#allocation3], %s208
          %s210 = sand.u32 %s28, 1
          %s211 = smul.addr %s210, 128
          %s212 = scalar_lea.vmem [#allocation2], %s211
          %s213 = smul.u32 32, %s18
          %s215 = ssub.s32 2048, 2048
          %216 = vsyncadd %s209, %s215
          %s217 = smul.addr %s213, 64
          %s218 = scalar_lea.hbm %s0, %s217
          %s219 = sshll.u32 %s212, 4
          %s220 = int_to_ptr.vmem [resolvable:$true] %s219
          %225 = dma.hbm_to_vmem [thread:$0]  %s218, 2048, %s220, %s209, 64, 64, 4
        $region36: #{tpu_custom_call.1} parent=31 // pred_fallthru
          _
      $region32: #{tpu_custom_call.1} parent=5 // pred_fallthru
        _
      %p226 = scmp.le.s32.totalorder 1, %s18
      %p227 = scmp.lt.s32.totalorder %s18, 3
      %p228 = pnand %p226, %p227
      %p229 = pneg %p228
      // Predicated region
      $region37: #{tpu_custom_call.1} parent=5 // pred_check
        _
      $region38: #{tpu_custom_call.1} parent=5 // pred_check_branch
        %231 = sbr.rel (%p228) target = $region40
      $region39: #{tpu_custom_call.1} parent=5 // pred_region
        %s232 = ssub.s32 %s18, 1
        %s233 = sand.u32 %s31, 1
        %s234 = scalar_lea.sflag [#allocation3], %s233
        %s235 = sand.u32 %s31, 1
        %s236 = smul.addr %s235, 128
        %s237 = scalar_lea.vmem [#allocation2], %s236
        // Predicated region
        $region41: #{tpu_custom_call.1} parent=39 // pred_check
          %p238 = pneg %p44
        $region42: #{tpu_custom_call.1} parent=39 // pred_check_branch
          %240 = sbr.rel (%p238) target = $region44
        $region43: #{tpu_custom_call.1} parent=39 // pred_region
          %241 = dma.done %s234, 2048
        $region44: #{tpu_custom_call.1} parent=39 // pred_fallthru
          _
        // Predicated region
        $region45: #{tpu_custom_call.1} parent=39 // pred_check
          %p242 = pneg %p65
        $region46: #{tpu_custom_call.1} parent=39 // pred_check_branch
          %244 = sbr.rel (%p242) target = $region48
        $region47: #{tpu_custom_call.1} parent=39 // pred_region
          %245 = dma.done [#allocation6], 4096
        $region48: #{tpu_custom_call.1} parent=39 // pred_fallthru
          _
        // Predicated region
        $region49: #{tpu_custom_call.1} parent=39 // pred_check
          %p246 = pneg %p107
        $region50: #{tpu_custom_call.1} parent=39 // pred_check_branch
          %248 = sbr.rel (%p246) target = $region52
        $region51: #{tpu_custom_call.1} parent=39 // pred_region
          %249 = dma.done [#allocation6], 4096
        $region52: #{tpu_custom_call.1} parent=39 // pred_fallthru
          _
        %s250 = sand.u32 %s31, 1
        %s251 = scalar_lea.sflag [#allocation3], %s250
        %s252 = sand.u32 %s31, 1
        %s253 = smul.addr %s252, 128
        %s254 = scalar_lea.vmem [#allocation2], %s253
        %p255 = pneg %p44
        %p256 = pneg %p41
        %p257 = pneg %p65
        %p258 = pneg %p62
        %p259 = pneg %p86
        %p260 = pneg %p83
        %p261 = pneg %p107
        %p262 = pneg %p104
        %p263 = pneg %p128
        %p264 = pneg %p125
        %p265 = pneg %p154
        %p266 = pneg %p151
        %s267 = sand.u32 %s141, 1
        %s268 = scalar_lea.sflag [#allocation4], %s267
        %s269 = sand.u32 %s141, 1
        %s270 = smul.addr %s269, 256
        %s271 = scalar_lea.vmem [#allocation8], %s270
        %s272 = smul.u32 32, %s23
        %s273 = smul.u32 32, %s23
        %v275 = vld [vmem:[%s237] sm:$0xf]
        %v276 = vld [vmem:[%s237 + $0x4] sm:$0xf]
        %v277 = vld [vmem:[%s237 + $0x8] sm:$0xf]
        %v278 = vld [vmem:[%s237 + $0xc] sm:$0xf]
        %v279 = vld [vmem:[%s237 + $0x10] sm:$0xf]
        %v280 = vld [vmem:[%s237 + $0x14] sm:$0xf]
        %v281 = vld [vmem:[%s237 + $0x18] sm:$0xf]
        %v282 = vld [vmem:[%s237 + $0x1c] sm:$0xf]
        %v283 = vld [vmem:[%s237 + $0x20] sm:$0xf]
        %v284 = vld [vmem:[%s237 + $0x24] sm:$0xf]
        %v285 = vld [vmem:[%s237 + $0x28] sm:$0xf]
        %v286 = vld [vmem:[%s237 + $0x2c] sm:$0xf]
        %v287 = vld [vmem:[%s237 + $0x30] sm:$0xf]
        %v288 = vld [vmem:[%s237 + $0x34] sm:$0xf]
        %v289 = vld [vmem:[%s237 + $0x38] sm:$0xf]
        %v290 = vld [vmem:[%s237 + $0x3c] sm:$0xf]
        %v291 = vld [vmem:[%s237 + $0x40] sm:$0xf]
        %v292 = vld [vmem:[%s237 + $0x44] sm:$0xf]
        %v293 = vld [vmem:[%s237 + $0x48] sm:$0xf]
        %v294 = vld [vmem:[%s237 + $0x4c] sm:$0xf]
        %v295 = vld [vmem:[%s237 + $0x50] sm:$0xf]
        %v296 = vld [vmem:[%s237 + $0x54] sm:$0xf]
        %v297 = vld [vmem:[%s237 + $0x58] sm:$0xf]
        %v298 = vld [vmem:[%s237 + $0x5c] sm:$0xf]
        %v299 = vld [vmem:[%s237 + $0x60] sm:$0xf]
        %v300 = vld [vmem:[%s237 + $0x64] sm:$0xf]
        %v301 = vld [vmem:[%s237 + $0x68] sm:$0xf]
        %v302 = vld [vmem:[%s237 + $0x6c] sm:$0xf]
        %v303 = vld [vmem:[%s237 + $0x70] sm:$0xf]
        %v304 = vld [vmem:[%s237 + $0x74] sm:$0xf]
        %v305 = vld [vmem:[%s237 + $0x78] sm:$0xf]
        %v306 = vld [vmem:[%s237 + $0x7c] sm:$0xf]
        %v307 = vld [vmem:[#allocation5] sm:$0xff]
        %v308 = vld [vmem:[#allocation5 + $0x8] sm:$0xff]
        %v309 = vld [vmem:[#allocation5 + $0x10] sm:$0xff]
        %v310 = vld [vmem:[#allocation5 + $0x18] sm:$0xff]
        %v311 = vld [vmem:[#allocation5 + $0x20] sm:$0xff]
        %v312 = vld [vmem:[#allocation5 + $0x28] sm:$0xff]
        %v313 = vld [vmem:[#allocation5 + $0x30] sm:$0xff]
        %v314 = vld [vmem:[#allocation5 + $0x38] sm:$0xff]
        %v315 = vld [vmem:[#allocation5 + $0x40] sm:$0xff]
        %v316 = vld [vmem:[#allocation5 + $0x48] sm:$0xff]
        %v317 = vld [vmem:[#allocation5 + $0x50] sm:$0xff]
        %v318 = vld [vmem:[#allocation5 + $0x58] sm:$0xff]
        %v319 = vld [vmem:[#allocation5 + $0x60] sm:$0xff]
        %v320 = vld [vmem:[#allocation5 + $0x68] sm:$0xff]
        %v321 = vld [vmem:[#allocation5 + $0x70] sm:$0xff]
        %v322 = vld [vmem:[#allocation5 + $0x78] sm:$0xff]
        %v323 = vld [vmem:[#allocation5 + $0x80] sm:$0xff]
        %v324 = vld [vmem:[#allocation5 + $0x88] sm:$0xff]
        %v325 = vld [vmem:[#allocation5 + $0x90] sm:$0xff]
        %v326 = vld [vmem:[#allocation5 + $0x98] sm:$0xff]
        %v327 = vld [vmem:[#allocation5 + $0xa0] sm:$0xff]
        %v328 = vld [vmem:[#allocation5 + $0xa8] sm:$0xff]
        %v329 = vld [vmem:[#allocation5 + $0xb0] sm:$0xff]
        %v330 = vld [vmem:[#allocation5 + $0xb8] sm:$0xff]
        %v331 = vld [vmem:[#allocation5 + $0xc0] sm:$0xff]
        %v332 = vld [vmem:[#allocation5 + $0xc8] sm:$0xff]
        %v333 = vld [vmem:[#allocation5 + $0xd0] sm:$0xff]
        %v334 = vld [vmem:[#allocation5 + $0xd8] sm:$0xff]
        %v335 = vld [vmem:[#allocation5 + $0xe0] sm:$0xff]
        %v336 = vld [vmem:[#allocation5 + $0xe8] sm:$0xff]
        %v337 = vld [vmem:[#allocation5 + $0xf0] sm:$0xff]
        %v338 = vld [vmem:[#allocation5 + $0xf8] sm:$0xff]
        %v339 = vld [vmem:[%s2] sm:$0xf]
        %v341 = vlaneseq
        %v342 = vshrl.u32 %v341, 7
        %v343 = vsub.s32 0, %v342
        %v344 = vrot.slane %v339, %v343
        %v345 = vlaneseq
        %v346 = vshrl.u32 %v345, 7
        %v347 = vsub.s32 1, %v346
        %v348 = vrot.slane %v339, %v347
        %v349 = vlaneseq
        %v350 = vshrl.u32 %v349, 7
        %v351 = vsub.s32 2, %v350
        %v352 = vrot.slane %v339, %v351
        %v353 = vlaneseq
        %v354 = vshrl.u32 %v353, 7
        %v355 = vsub.s32 3, %v354
        %v356 = vrot.slane %v339, %v355
        %v393 = vunpack.c.l.b16 %v275
        %v394 = vunpack.c.l.b16 %v276
        %v395 = vunpack.c.l.b16 %v277
        %v396 = vunpack.c.l.b16 %v278
        %v397 = vunpack.c.l.b16 %v279
        %v398 = vunpack.c.l.b16 %v280
        %v399 = vunpack.c.l.b16 %v281
        %v400 = vunpack.c.l.b16 %v282
        %v401 = vunpack.c.l.b16 %v283
        %v402 = vunpack.c.l.b16 %v284
        %v403 = vunpack.c.l.b16 %v285
        %v404 = vunpack.c.l.b16 %v286
        %v405 = vunpack.c.l.b16 %v287
        %v406 = vunpack.c.l.b16 %v288
        %v407 = vunpack.c.l.b16 %v289
        %v408 = vunpack.c.l.b16 %v290
        %v409 = vunpack.c.l.b16 %v291
        %v410 = vunpack.c.l.b16 %v292
        %v411 = vunpack.c.l.b16 %v293
        %v412 = vunpack.c.l.b16 %v294
        %v413 = vunpack.c.l.b16 %v295
        %v414 = vunpack.c.l.b16 %v296
        %v415 = vunpack.c.l.b16 %v297
        %v416 = vunpack.c.l.b16 %v298
        %v417 = vunpack.c.l.b16 %v299
        %v418 = vunpack.c.l.b16 %v300
        %v419 = vunpack.c.l.b16 %v301
        %v420 = vunpack.c.l.b16 %v302
        %v421 = vunpack.c.l.b16 %v303
        %v422 = vunpack.c.l.b16 %v304
        %v423 = vunpack.c.l.b16 %v305
        %v424 = vunpack.c.l.b16 %v306
        %v425 = vpack.c.b16 %v394, %v393
        %v426 = vpack.c.b16 %v396, %v395
        %v427 = vpack.c.b16 %v398, %v397
        %v428 = vpack.c.b16 %v400, %v399
        %v429 = vpack.c.b16 %v402, %v401
        %v430 = vpack.c.b16 %v404, %v403
        %v431 = vpack.c.b16 %v406, %v405
        %v432 = vpack.c.b16 %v408, %v407
        %v433 = vpack.c.b16 %v410, %v409
        %v434 = vpack.c.b16 %v412, %v411
        %v435 = vpack.c.b16 %v414, %v413
        %v436 = vpack.c.b16 %v416, %v415
        %v437 = vpack.c.b16 %v418, %v417
        %v438 = vpack.c.b16 %v420, %v419
        %v439 = vpack.c.b16 %v422, %v421
        %v440 = vpack.c.b16 %v424, %v423
        %v489 = vunpack.c.l.b16 %v307
        %v490 = vunpack.c.h.b16 %v307
        %v491 = vunpack.c.l.b16 %v308
        %v492 = vunpack.c.h.b16 %v308
        %v493 = vunpack.c.l.b16 %v309
        %v494 = vunpack.c.h.b16 %v309
        %v495 = vunpack.c.l.b16 %v310
        %v496 = vunpack.c.h.b16 %v310
        %v497 = vunpack.c.l.b16 %v311
        %v498 = vunpack.c.h.b16 %v311
        %v499 = vunpack.c.l.b16 %v312
        %v500 = vunpack.c.h.b16 %v312
        %v501 = vunpack.c.l.b16 %v313
        %v502 = vunpack.c.h.b16 %v313
        %v503 = vunpack.c.l.b16 %v314
        %v504 = vunpack.c.h.b16 %v314
        %v505 = vunpack.c.l.b16 %v315
        %v506 = vunpack.c.h.b16 %v315
        %v507 = vunpack.c.l.b16 %v316
        %v508 = vunpack.c.h.b16 %v316
        %v509 = vunpack.c.l.b16 %v317
        %v510 = vunpack.c.h.b16 %v317
        %v511 = vunpack.c.l.b16 %v318
        %v512 = vunpack.c.h.b16 %v318
        %v513 = vunpack.c.l.b16 %v319
        %v514 = vunpack.c.h.b16 %v319
        %v515 = vunpack.c.l.b16 %v320
        %v516 = vunpack.c.h.b16 %v320
        %v517 = vunpack.c.l.b16 %v321
        %v518 = vunpack.c.h.b16 %v321
        %v519 = vunpack.c.l.b16 %v322
        %v520 = vunpack.c.h.b16 %v322
        %v521 = vunpack.c.l.b16 %v323
        %v522 = vunpack.c.h.b16 %v323
        %v523 = vunpack.c.l.b16 %v324
        %v524 = vunpack.c.h.b16 %v324
        %v525 = vunpack.c.l.b16 %v325
        %v526 = vunpack.c.h.b16 %v325
        %v527 = vunpack.c.l.b16 %v326
        %v528 = vunpack.c.h.b16 %v326
        %v529 = vunpack.c.l.b16 %v327
        %v530 = vunpack.c.h.b16 %v327
        %v531 = vunpack.c.l.b16 %v328
        %v532 = vunpack.c.h.b16 %v328
        %v533 = vunpack.c.l.b16 %v329
        %v534 = vunpack.c.h.b16 %v329
        %v535 = vunpack.c.l.b16 %v330
        %v536 = vunpack.c.h.b16 %v330
        %v537 = vunpack.c.l.b16 %v331
        %v538 = vunpack.c.h.b16 %v331
        %v539 = vunpack.c.l.b16 %v332
        %v540 = vunpack.c.h.b16 %v332
        %v541 = vunpack.c.l.b16 %v333
        %v542 = vunpack.c.h.b16 %v333
        %v543 = vunpack.c.l.b16 %v334
        %v544 = vunpack.c.h.b16 %v334
        %v545 = vunpack.c.l.b16 %v335
        %v546 = vunpack.c.h.b16 %v335
        %v547 = vunpack.c.l.b16 %v336
        %v548 = vunpack.c.h.b16 %v336
        %v549 = vunpack.c.l.b16 %v337
        %v550 = vunpack.c.h.b16 %v337
        %v551 = vunpack.c.l.b16 %v338
        %v552 = vunpack.c.h.b16 %v338
        %v553 = vpack.c.b16 %v493, %v489
        %v554 = vpack.c.b16 %v494, %v490
        %v555 = vpack.c.b16 %v495, %v491
        %v556 = vpack.c.b16 %v496, %v492
        %v557 = vpack.c.b16 %v501, %v497
        %v558 = vpack.c.b16 %v502, %v498
        %v559 = vpack.c.b16 %v503, %v499
        %v560 = vpack.c.b16 %v504, %v500
        %v561 = vpack.c.b16 %v509, %v505
        %v562 = vpack.c.b16 %v510, %v506
        %v563 = vpack.c.b16 %v511, %v507
        %v564 = vpack.c.b16 %v512, %v508
        %v565 = vpack.c.b16 %v517, %v513
        %v566 = vpack.c.b16 %v518, %v514
        %v567 = vpack.c.b16 %v519, %v515
        %v568 = vpack.c.b16 %v520, %v516
        %v569 = vpack.c.b16 %v525, %v521
        %v570 = vpack.c.b16 %v526, %v522
        %v571 = vpack.c.b16 %v527, %v523
        %v572 = vpack.c.b16 %v528, %v524
        %v573 = vpack.c.b16 %v533, %v529
        %v574 = vpack.c.b16 %v534, %v530
        %v575 = vpack.c.b16 %v535, %v531
        %v576 = vpack.c.b16 %v536, %v532
        %v577 = vpack.c.b16 %v541, %v537
        %v578 = vpack.c.b16 %v542, %v538
        %v579 = vpack.c.b16 %v543, %v539
        %v580 = vpack.c.b16 %v544, %v540
        %v581 = vpack.c.b16 %v549, %v545
        %v582 = vpack.c.b16 %v550, %v546
        %v583 = vpack.c.b16 %v551, %v547
        %v584 = vpack.c.b16 %v552, %v548
        %617 = vmatprep.subr.bf16.mxu0 %v554
        %618 = vmatpush1.bf16.msra.mxu0 %v553
        %619 = vmatprep.subr.bf16.mxu0 %v558
        %620 = vmatpush1.bf16.msra.mxu0 %v557
        %621 = vmatprep.subr.bf16.mxu0 %v562
        %622 = vmatpush1.bf16.msra.mxu0 %v561
        %623 = vmatprep.subr.bf16.mxu0 %v566
        %624 = vmatpush1.bf16.msra.mxu0 %v565
        %625 = vmatprep.subr.bf16.mxu0 %v570
        %626 = vmatpush1.bf16.msra.mxu0 %v569
        %627 = vmatprep.subr.bf16.mxu0 %v574
        %628 = vmatpush1.bf16.msra.mxu0 %v573
        %629 = vmatprep.subr.bf16.mxu0 %v578
        %630 = vmatpush1.bf16.msra.mxu0 %v577
        %631 = vmatprep.subr.bf16.mxu0 %v582
        %632 = vmatpush1.bf16.msra.mxu0 %v581
        %633 = vmatprep.subr.bf16.mxu0 0
        %634 = vmatpush1.bf16.msra.mxu0 0
        %635 = vmatprep.subr.bf16.mxu0 0
        %636 = vmatpush1.bf16.msra.mxu0 0
        %637 = vmatprep.subr.bf16.mxu0 0
        %638 = vmatpush1.bf16.msra.mxu0 0
        %639 = vmatprep.subr.bf16.mxu0 0
        %640 = vmatpush1.bf16.msra.mxu0 0
        %641 = vmatprep.subr.bf16.mxu0 0
        %642 = vmatpush1.bf16.msra.mxu0 0
        %643 = vmatprep.subr.bf16.mxu0 0
        %644 = vmatpush1.bf16.msra.mxu0 0
        %645 = vmatprep.subr.bf16.mxu0 0
        %646 = vmatpush1.bf16.msra.mxu0 0
        %647 = vmatprep.subr.bf16.mxu0 0
        %648 = vmatpush1.bf16.msra.mxu0 0
        %649 = vmatprep.mubr.bf16.mxu0 0
        %650 = vmatmul.mubr.bf16.gmra.mrb[0].mxu0 %v425
        %v651 = vpop.f32.mrb[0].mxu0
        %v652 = vadd.f32 %v344, %v651
        %v653 = vpop.f32.mrb[0].mxu0
        %v654 = vadd.f32 %v348, %v653
        %v655 = vpop.f32.mrb[0].mxu0
        %v656 = vadd.f32 %v344, %v655
        %v657 = vpop.f32.mrb[0].mxu0
        %v658 = vadd.f32 %v348, %v657
        %659 = vmatprep.mubr.bf16.mxu0 0
        %660 = vmatmul.mubr.bf16.gmra.mrb[0].mxu0 %v426
        %v661 = vpop.f32.mrb[0].mxu0
        %v662 = vadd.f32 %v344, %v661
        %v663 = vpop.f32.mrb[0].mxu0
        %v664 = vadd.f32 %v348, %v663
        %v665 = vpop.f32.mrb[0].mxu0
        %v666 = vadd.f32 %v344, %v665
        %v667 = vpop.f32.mrb[0].mxu0
        %v668 = vadd.f32 %v348, %v667
        %669 = vmatprep.mubr.bf16.mxu0 0
        %670 = vmatmul.mubr.bf16.gmra.mrb[0].mxu0 %v427
        %v671 = vpop.f32.mrb[0].mxu0
        %v672 = vadd.f32 %v344, %v671
        %v673 = vpop.f32.mrb[0].mxu0
        %v674 = vadd.f32 %v348, %v673
        %v675 = vpop.f32.mrb[0].mxu0
        %v676 = vadd.f32 %v344, %v675
        %v677 = vpop.f32.mrb[0].mxu0
        %v678 = vadd.f32 %v348, %v677
        %679 = vmatprep.mubr.bf16.mxu0 0
        %680 = vmatmul.mubr.bf16.gmra.mrb[0].mxu0 %v428
        %v681 = vpop.f32.mrb[0].mxu0
        %v682 = vadd.f32 %v344, %v681
        %v683 = vpop.f32.mrb[0].mxu0
        %v684 = vadd.f32 %v348, %v683
        %v685 = vpop.f32.mrb[0].mxu0
        %v686 = vadd.f32 %v344, %v685
        %v687 = vpop.f32.mrb[0].mxu0
        %v688 = vadd.f32 %v348, %v687
        %689 = vmatprep.mubr.bf16.mxu0 0
        %690 = vmatmul.mubr.bf16.gmra.mrb[0].mxu0 %v429
        %v691 = vpop.f32.mrb[0].mxu0
        %v692 = vadd.f32 %v344, %v691
        %v693 = vpop.f32.mrb[0].mxu0
        %v694 = vadd.f32 %v348, %v693
        %v695 = vpop.f32.mrb[0].mxu0
        %v696 = vadd.f32 %v344, %v695
        %v697 = vpop.f32.mrb[0].mxu0
        %v698 = vadd.f32 %v348, %v697
        %699 = vmatprep.mubr.bf16.mxu0 0
        %700 = vmatmul.mubr.bf16.gmra.mrb[0].mxu0 %v430
        %v701 = vpop.f32.mrb[0].mxu0
        %v702 = vadd.f32 %v344, %v701
        %v703 = vpop.f32.mrb[0].mxu0
        %v704 = vadd.f32 %v348, %v703
        %v705 = vpop.f32.mrb[0].mxu0
        %v706 = vadd.f32 %v344, %v705
        %v707 = vpop.f32.mrb[0].mxu0
        %v708 = vadd.f32 %v348, %v707
        %709 = vmatprep.mubr.bf16.mxu0 0
        %710 = vmatmul.mubr.bf16.gmra.mrb[0].mxu0 %v431
        %v711 = vpop.f32.mrb[0].mxu0
        %v712 = vadd.f32 %v344, %v711
        %v713 = vpop.f32.mrb[0].mxu0
        %v714 = vadd.f32 %v348, %v713
        %v715 = vpop.f32.mrb[0].mxu0
        %v716 = vadd.f32 %v344, %v715
        %v717 = vpop.f32.mrb[0].mxu0
        %v718 = vadd.f32 %v348, %v717
        %719 = vmatprep.mubr.bf16.mxu0 0
        %720 = vmatmul.mubr.bf16.gmra.mrb[0].mxu0 %v432
        %v721 = vpop.f32.mrb[0].mxu0
        %v722 = vadd.f32 %v344, %v721
        %v723 = vpop.f32.mrb[0].mxu0
        %v724 = vadd.f32 %v348, %v723
        %v725 = vpop.f32.mrb[0].mxu0
        %v726 = vadd.f32 %v344, %v725
        %v727 = vpop.f32.mrb[0].mxu0
        %v728 = vadd.f32 %v348, %v727
        %729 = vmatprep.mubr.bf16.mxu0 0
        %730 = vmatmul.mubr.bf16.gmra.mrb[0].mxu0 %v433
        %v731 = vpop.f32.mrb[0].mxu0
        %v732 = vadd.f32 %v344, %v731
        %v733 = vpop.f32.mrb[0].mxu0
        %v734 = vadd.f32 %v348, %v733
        %v735 = vpop.f32.mrb[0].mxu0
        %v736 = vadd.f32 %v344, %v735
        %v737 = vpop.f32.mrb[0].mxu0
        %v738 = vadd.f32 %v348, %v737
        %739 = vmatprep.mubr.bf16.mxu0 0
        %740 = vmatmul.mubr.bf16.gmra.mrb[0].mxu0 %v434
        %v741 = vpop.f32.mrb[0].mxu0
        %v742 = vadd.f32 %v344, %v741
        %v743 = vpop.f32.mrb[0].mxu0
        %v744 = vadd.f32 %v348, %v743
        %v745 = vpop.f32.mrb[0].mxu0
        %v746 = vadd.f32 %v344, %v745
        %v747 = vpop.f32.mrb[0].mxu0
        %v748 = vadd.f32 %v348, %v747
        %749 = vmatprep.mubr.bf16.mxu0 0
        %750 = vmatmul.mubr.bf16.gmra.mrb[0].mxu0 %v435
        %v751 = vpop.f32.mrb[0].mxu0
        %v752 = vadd.f32 %v344, %v751
        %v753 = vpop.f32.mrb[0].mxu0
        %v754 = vadd.f32 %v348, %v753
        %v755 = vpop.f32.mrb[0].mxu0
        %v756 = vadd.f32 %v344, %v755
        %v757 = vpop.f32.mrb[0].mxu0
        %v758 = vadd.f32 %v348, %v757
        %759 = vmatprep.mubr.bf16.mxu0 0
        %760 = vmatmul.mubr.bf16.gmra.mrb[0].mxu0 %v436
        %v761 = vpop.f32.mrb[0].mxu0
        %v762 = vadd.f32 %v344, %v761
        %v763 = vpop.f32.mrb[0].mxu0
        %v764 = vadd.f32 %v348, %v763
        %v765 = vpop.f32.mrb[0].mxu0
        %v766 = vadd.f32 %v344, %v765
        %v767 = vpop.f32.mrb[0].mxu0
        %v768 = vadd.f32 %v348, %v767
        %769 = vmatprep.mubr.bf16.mxu0 0
        %770 = vmatmul.mubr.bf16.gmra.mrb[0].mxu0 %v437
        %v771 = vpop.f32.mrb[0].mxu0
        %v772 = vadd.f32 %v344, %v771
        %v773 = vpop.f32.mrb[0].mxu0
        %v774 = vadd.f32 %v348, %v773
        %v775 = vpop.f32.mrb[0].mxu0
        %v776 = vadd.f32 %v344, %v775
        %v777 = vpop.f32.mrb[0].mxu0
        %v778 = vadd.f32 %v348, %v777
        %779 = vmatprep.mubr.bf16.mxu0 0
        %780 = vmatmul.mubr.bf16.gmra.mrb[0].mxu0 %v438
        %v781 = vpop.f32.mrb[0].mxu0
        %v782 = vadd.f32 %v344, %v781
        %v783 = vpop.f32.mrb[0].mxu0
        %v784 = vadd.f32 %v348, %v783
        %v785 = vpop.f32.mrb[0].mxu0
        %v786 = vadd.f32 %v344, %v785
        %v787 = vpop.f32.mrb[0].mxu0
        %v788 = vadd.f32 %v348, %v787
        %789 = vmatprep.mubr.bf16.mxu0 0
        %790 = vmatmul.mubr.bf16.gmra.mrb[0].mxu0 %v439
        %v791 = vpop.f32.mrb[0].mxu0
        %v792 = vadd.f32 %v344, %v791
        %v793 = vpop.f32.mrb[0].mxu0
        %v794 = vadd.f32 %v348, %v793
        %v795 = vpop.f32.mrb[0].mxu0
        %v796 = vadd.f32 %v344, %v795
        %v797 = vpop.f32.mrb[0].mxu0
        %v798 = vadd.f32 %v348, %v797
        %799 = vmatprep.mubr.bf16.mxu0 0
        %800 = vmatmul.mubr.bf16.gmra.mrb[0].mxu0 %v440
        %v801 = vpop.f32.mrb[0].mxu0
        %v802 = vadd.f32 %v344, %v801
        %v803 = vpop.f32.mrb[0].mxu0
        %v804 = vadd.f32 %v348, %v803
        %v805 = vpop.f32.mrb[0].mxu0
        %v806 = vadd.f32 %v344, %v805
        %v807 = vpop.f32.mrb[0].mxu0
        %v808 = vadd.f32 %v348, %v807
        %809 = vdwg.mxu0
        %810 = vmatprep.subr.bf16.mxu0 %v556
        %811 = vmatpush1.bf16.msra.mxu0 %v555
        %812 = vmatprep.subr.bf16.mxu0 %v560
        %813 = vmatpush1.bf16.msra.mxu0 %v559
        %814 = vmatprep.subr.bf16.mxu0 %v564
        %815 = vmatpush1.bf16.msra.mxu0 %v563
        %816 = vmatprep.subr.bf16.mxu0 %v568
        %817 = vmatpush1.bf16.msra.mxu0 %v567
        %818 = vmatprep.subr.bf16.mxu0 %v572
        %819 = vmatpush1.bf16.msra.mxu0 %v571
        %820 = vmatprep.subr.bf16.mxu0 %v576
        %821 = vmatpush1.bf16.msra.mxu0 %v575
        %822 = vmatprep.subr.bf16.mxu0 %v580
        %823 = vmatpush1.bf16.msra.mxu0 %v579
        %824 = vmatprep.subr.bf16.mxu0 %v584
        %825 = vmatpush1.bf16.msra.mxu0 %v583
        %826 = vmatprep.subr.bf16.mxu0 0
        %827 = vmatpush1.bf16.msra.mxu0 0
        %828 = vmatprep.subr.bf16.mxu0 0
        %829 = vmatpush1.bf16.msra.mxu0 0
        %830 = vmatprep.subr.bf16.mxu0 0
        %831 = vmatpush1.bf16.msra.mxu0 0
        %832 = vmatprep.subr.bf16.mxu0 0
        %833 = vmatpush1.bf16.msra.mxu0 0
        %834 = vmatprep.subr.bf16.mxu0 0
        %835 = vmatpush1.bf16.msra.mxu0 0
        %836 = vmatprep.subr.bf16.mxu0 0
        %837 = vmatpush1.bf16.msra.mxu0 0
        %838 = vmatprep.subr.bf16.mxu0 0
        %839 = vmatpush1.bf16.msra.mxu0 0
        %840 = vmatprep.subr.bf16.mxu0 0
        %841 = vmatpush1.bf16.msra.mxu0 0
        %842 = vmatprep.mubr.bf16.mxu0 0
        %843 = vmatmul.mubr.bf16.gmra.mrb[0].mxu0 %v425
        %v844 = vpop.f32.mrb[0].mxu0
        %v845 = vadd.f32 %v352, %v844
        %v846 = vpop.f32.mrb[0].mxu0
        %v847 = vadd.f32 %v356, %v846
        %v848 = vpop.f32.mrb[0].mxu0
        %v849 = vadd.f32 %v352, %v848
        %v850 = vpop.f32.mrb[0].mxu0
        %v851 = vadd.f32 %v356, %v850
        %852 = vmatprep.mubr.bf16.mxu0 0
        %853 = vmatmul.mubr.bf16.gmra.mrb[0].mxu0 %v426
        %v854 = vpop.f32.mrb[0].mxu0
        %v855 = vadd.f32 %v352, %v854
        %v856 = vpop.f32.mrb[0].mxu0
        %v857 = vadd.f32 %v356, %v856
        %v858 = vpop.f32.mrb[0].mxu0
        %v859 = vadd.f32 %v352, %v858
        %v860 = vpop.f32.mrb[0].mxu0
        %v861 = vadd.f32 %v356, %v860
        %862 = vmatprep.mubr.bf16.mxu0 0
        %863 = vmatmul.mubr.bf16.gmra.mrb[0].mxu0 %v427
        %v864 = vpop.f32.mrb[0].mxu0
        %v865 = vadd.f32 %v352, %v864
        %v866 = vpop.f32.mrb[0].mxu0
        %v867 = vadd.f32 %v356, %v866
        %v868 = vpop.f32.mrb[0].mxu0
        %v869 = vadd.f32 %v352, %v868
        %v870 = vpop.f32.mrb[0].mxu0
        %v871 = vadd.f32 %v356, %v870
        %872 = vmatprep.mubr.bf16.mxu0 0
        %873 = vmatmul.mubr.bf16.gmra.mrb[0].mxu0 %v428
        %v874 = vpop.f32.mrb[0].mxu0
        %v875 = vadd.f32 %v352, %v874
        %v876 = vpop.f32.mrb[0].mxu0
        %v877 = vadd.f32 %v356, %v876
        %v878 = vpop.f32.mrb[0].mxu0
        %v879 = vadd.f32 %v352, %v878
        %v880 = vpop.f32.mrb[0].mxu0
        %v881 = vadd.f32 %v356, %v880
        %882 = vmatprep.mubr.bf16.mxu0 0
        %883 = vmatmul.mubr.bf16.gmra.mrb[0].mxu0 %v429
        %v884 = vpop.f32.mrb[0].mxu0
        %v885 = vadd.f32 %v352, %v884
        %v886 = vpop.f32.mrb[0].mxu0
        %v887 = vadd.f32 %v356, %v886
        %v888 = vpop.f32.mrb[0].mxu0
        %v889 = vadd.f32 %v352, %v888
        %v890 = vpop.f32.mrb[0].mxu0
        %v891 = vadd.f32 %v356, %v890
        %892 = vmatprep.mubr.bf16.mxu0 0
        %893 = vmatmul.mubr.bf16.gmra.mrb[0].mxu0 %v430
        %v894 = vpop.f32.mrb[0].mxu0
        %v895 = vadd.f32 %v352, %v894
        %v896 = vpop.f32.mrb[0].mxu0
        %v897 = vadd.f32 %v356, %v896
        %v898 = vpop.f32.mrb[0].mxu0
        %v899 = vadd.f32 %v352, %v898
        %v900 = vpop.f32.mrb[0].mxu0
        %v901 = vadd.f32 %v356, %v900
        %902 = vmatprep.mubr.bf16.mxu0 0
        %903 = vmatmul.mubr.bf16.gmra.mrb[0].mxu0 %v431
        %v904 = vpop.f32.mrb[0].mxu0
        %v905 = vadd.f32 %v352, %v904
        %v906 = vpop.f32.mrb[0].mxu0
        %v907 = vadd.f32 %v356, %v906
        %v908 = vpop.f32.mrb[0].mxu0
        %v909 = vadd.f32 %v352, %v908
        %v910 = vpop.f32.mrb[0].mxu0
        %v911 = vadd.f32 %v356, %v910
        %912 = vmatprep.mubr.bf16.mxu0 0
        %913 = vmatmul.mubr.bf16.gmra.mrb[0].mxu0 %v432
        %v914 = vpop.f32.mrb[0].mxu0
        %v915 = vadd.f32 %v352, %v914
        %v916 = vpop.f32.mrb[0].mxu0
        %v917 = vadd.f32 %v356, %v916
        %v918 = vpop.f32.mrb[0].mxu0
        %v919 = vadd.f32 %v352, %v918
        %v920 = vpop.f32.mrb[0].mxu0
        %v921 = vadd.f32 %v356, %v920
        %922 = vmatprep.mubr.bf16.mxu0 0
        %923 = vmatmul.mubr.bf16.gmra.mrb[0].mxu0 %v433
        %v924 = vpop.f32.mrb[0].mxu0
        %v925 = vadd.f32 %v352, %v924
        %v926 = vpop.f32.mrb[0].mxu0
        %v927 = vadd.f32 %v356, %v926
        %v928 = vpop.f32.mrb[0].mxu0
        %v929 = vadd.f32 %v352, %v928
        %v930 = vpop.f32.mrb[0].mxu0
        %v931 = vadd.f32 %v356, %v930
        %932 = vmatprep.mubr.bf16.mxu0 0
        %933 = vmatmul.mubr.bf16.gmra.mrb[0].mxu0 %v434
        %v934 = vpop.f32.mrb[0].mxu0
        %v935 = vadd.f32 %v352, %v934
        %v936 = vpop.f32.mrb[0].mxu0
        %v937 = vadd.f32 %v356, %v936
        %v938 = vpop.f32.mrb[0].mxu0
        %v939 = vadd.f32 %v352, %v938
        %v940 = vpop.f32.mrb[0].mxu0
        %v941 = vadd.f32 %v356, %v940
        %942 = vmatprep.mubr.bf16.mxu0 0
        %943 = vmatmul.mubr.bf16.gmra.mrb[0].mxu0 %v435
        %v944 = vpop.f32.mrb[0].mxu0
        %v945 = vadd.f32 %v352, %v944
        %v946 = vpop.f32.mrb[0].mxu0
        %v947 = vadd.f32 %v356, %v946
        %v948 = vpop.f32.mrb[0].mxu0
        %v949 = vadd.f32 %v352, %v948
        %v950 = vpop.f32.mrb[0].mxu0
        %v951 = vadd.f32 %v356, %v950
        %952 = vmatprep.mubr.bf16.mxu0 0
        %953 = vmatmul.mubr.bf16.gmra.mrb[0].mxu0 %v436
        %v954 = vpop.f32.mrb[0].mxu0
        %v955 = vadd.f32 %v352, %v954
        %v956 = vpop.f32.mrb[0].mxu0
        %v957 = vadd.f32 %v356, %v956
        %v958 = vpop.f32.mrb[0].mxu0
        %v959 = vadd.f32 %v352, %v958
        %v960 = vpop.f32.mrb[0].mxu0
        %v961 = vadd.f32 %v356, %v960
        %962 = vmatprep.mubr.bf16.mxu0 0
        %963 = vmatmul.mubr.bf16.gmra.mrb[0].mxu0 %v437
        %v964 = vpop.f32.mrb[0].mxu0
        %v965 = vadd.f32 %v352, %v964
        %v966 = vpop.f32.mrb[0].mxu0
        %v967 = vadd.f32 %v356, %v966
        %v968 = vpop.f32.mrb[0].mxu0
        %v969 = vadd.f32 %v352, %v968
        %v970 = vpop.f32.mrb[0].mxu0
        %v971 = vadd.f32 %v356, %v970
        %972 = vmatprep.mubr.bf16.mxu0 0
        %973 = vmatmul.mubr.bf16.gmra.mrb[0].mxu0 %v438
        %v974 = vpop.f32.mrb[0].mxu0
        %v975 = vadd.f32 %v352, %v974
        %v976 = vpop.f32.mrb[0].mxu0
        %v977 = vadd.f32 %v356, %v976
        %v978 = vpop.f32.mrb[0].mxu0
        %v979 = vadd.f32 %v352, %v978
        %v980 = vpop.f32.mrb[0].mxu0
        %v981 = vadd.f32 %v356, %v980
        %982 = vmatprep.mubr.bf16.mxu0 0
        %983 = vmatmul.mubr.bf16.gmra.mrb[0].mxu0 %v439
        %v984 = vpop.f32.mrb[0].mxu0
        %v985 = vadd.f32 %v352, %v984
        %v986 = vpop.f32.mrb[0].mxu0
        %v987 = vadd.f32 %v356, %v986
        %v988 = vpop.f32.mrb[0].mxu0
        %v989 = vadd.f32 %v352, %v988
        %v990 = vpop.f32.mrb[0].mxu0
        %v991 = vadd.f32 %v356, %v990
        %992 = vmatprep.mubr.bf16.mxu0 0
        %993 = vmatmul.mubr.bf16.gmra.mrb[0].mxu0 %v440
        %v994 = vpop.f32.mrb[0].mxu0
        %v995 = vadd.f32 %v352, %v994
        %v996 = vpop.f32.mrb[0].mxu0
        %v997 = vadd.f32 %v356, %v996
        %v998 = vpop.f32.mrb[0].mxu0
        %v999 = vadd.f32 %v352, %v998
        %v1000 = vpop.f32.mrb[0].mxu0
        %v1001 = vadd.f32 %v356, %v1000
        %1002 = vdwg.mxu0
        %v1003 = vmax.f32 %v652, 0.0
        %v1004 = vmax.f32 %v654, 0.0
        %v1005 = vmax.f32 %v845, 0.0
        %v1006 = vmax.f32 %v847, 0.0
        %v1007 = vmax.f32 %v656, 0.0
        %v1008 = vmax.f32 %v658, 0.0
        %v1009 = vmax.f32 %v849, 0.0
        %v1010 = vmax.f32 %v851, 0.0
        %v1011 = vmax.f32 %v662, 0.0
        %v1012 = vmax.f32 %v664, 0.0
        %v1013 = vmax.f32 %v855, 0.0
        %v1014 = vmax.f32 %v857, 0.0
        %v1015 = vmax.f32 %v666, 0.0
        %v1016 = vmax.f32 %v668, 0.0
        %v1017 = vmax.f32 %v859, 0.0
        %v1018 = vmax.f32 %v861, 0.0
        %v1019 = vmax.f32 %v672, 0.0
        %v1020 = vmax.f32 %v674, 0.0
        %v1021 = vmax.f32 %v865, 0.0
        %v1022 = vmax.f32 %v867, 0.0
        %v1023 = vmax.f32 %v676, 0.0
        %v1024 = vmax.f32 %v678, 0.0
        %v1025 = vmax.f32 %v869, 0.0
        %v1026 = vmax.f32 %v871, 0.0
        %v1027 = vmax.f32 %v682, 0.0
        %v1028 = vmax.f32 %v684, 0.0
        %v1029 = vmax.f32 %v875, 0.0
        %v1030 = vmax.f32 %v877, 0.0
        %v1031 = vmax.f32 %v686, 0.0
        %v1032 = vmax.f32 %v688, 0.0
        %v1033 = vmax.f32 %v879, 0.0
        %v1034 = vmax.f32 %v881, 0.0
        %v1035 = vmax.f32 %v692, 0.0
        %v1036 = vmax.f32 %v694, 0.0
        %v1037 = vmax.f32 %v885, 0.0
        %v1038 = vmax.f32 %v887, 0.0
        %v1039 = vmax.f32 %v696, 0.0
        %v1040 = vmax.f32 %v698, 0.0
        %v1041 = vmax.f32 %v889, 0.0
        %v1042 = vmax.f32 %v891, 0.0
        %v1043 = vmax.f32 %v702, 0.0
        %v1044 = vmax.f32 %v704, 0.0
        %v1045 = vmax.f32 %v895, 0.0
        %v1046 = vmax.f32 %v897, 0.0
        %v1047 = vmax.f32 %v706, 0.0
        %v1048 = vmax.f32 %v708, 0.0
        %v1049 = vmax.f32 %v899, 0.0
        %v1050 = vmax.f32 %v901, 0.0
        %v1051 = vmax.f32 %v712, 0.0
        %v1052 = vmax.f32 %v714, 0.0
        %v1053 = vmax.f32 %v905, 0.0
        %v1054 = vmax.f32 %v907, 0.0
        %v1055 = vmax.f32 %v716, 0.0
        %v1056 = vmax.f32 %v718, 0.0
        %v1057 = vmax.f32 %v909, 0.0
        %v1058 = vmax.f32 %v911, 0.0
        %v1059 = vmax.f32 %v722, 0.0
        %v1060 = vmax.f32 %v724, 0.0
        %v1061 = vmax.f32 %v915, 0.0
        %v1062 = vmax.f32 %v917, 0.0
        %v1063 = vmax.f32 %v726, 0.0
        %v1064 = vmax.f32 %v728, 0.0
        %v1065 = vmax.f32 %v919, 0.0
        %v1066 = vmax.f32 %v921, 0.0
        %v1067 = vmax.f32 %v732, 0.0
        %v1068 = vmax.f32 %v734, 0.0
        %v1069 = vmax.f32 %v925, 0.0
        %v1070 = vmax.f32 %v927, 0.0
        %v1071 = vmax.f32 %v736, 0.0
        %v1072 = vmax.f32 %v738, 0.0
        %v1073 = vmax.f32 %v929, 0.0
        %v1074 = vmax.f32 %v931, 0.0
        %v1075 = vmax.f32 %v742, 0.0
        %v1076 = vmax.f32 %v744, 0.0
        %v1077 = vmax.f32 %v935, 0.0
        %v1078 = vmax.f32 %v937, 0.0
        %v1079 = vmax.f32 %v746, 0.0
        %v1080 = vmax.f32 %v748, 0.0
        %v1081 = vmax.f32 %v939, 0.0
        %v1082 = vmax.f32 %v941, 0.0
        %v1083 = vmax.f32 %v752, 0.0
        %v1084 = vmax.f32 %v754, 0.0
        %v1085 = vmax.f32 %v945, 0.0
        %v1086 = vmax.f32 %v947, 0.0
        %v1087 = vmax.f32 %v756, 0.0
        %v1088 = vmax.f32 %v758, 0.0
        %v1089 = vmax.f32 %v949, 0.0
        %v1090 = vmax.f32 %v951, 0.0
        %v1091 = vmax.f32 %v762, 0.0
        %v1092 = vmax.f32 %v764, 0.0
        %v1093 = vmax.f32 %v955, 0.0
        %v1094 = vmax.f32 %v957, 0.0
        %v1095 = vmax.f32 %v766, 0.0
        %v1096 = vmax.f32 %v768, 0.0
        %v1097 = vmax.f32 %v959, 0.0
        %v1098 = vmax.f32 %v961, 0.0
        %v1099 = vmax.f32 %v772, 0.0
        %v1100 = vmax.f32 %v774, 0.0
        %v1101 = vmax.f32 %v965, 0.0
        %v1102 = vmax.f32 %v967, 0.0
        %v1103 = vmax.f32 %v776, 0.0
        %v1104 = vmax.f32 %v778, 0.0
        %v1105 = vmax.f32 %v969, 0.0
        %v1106 = vmax.f32 %v971, 0.0
        %v1107 = vmax.f32 %v782, 0.0
        %v1108 = vmax.f32 %v784, 0.0
        %v1109 = vmax.f32 %v975, 0.0
        %v1110 = vmax.f32 %v977, 0.0
        %v1111 = vmax.f32 %v786, 0.0
        %v1112 = vmax.f32 %v788, 0.0
        %v1113 = vmax.f32 %v979, 0.0
        %v1114 = vmax.f32 %v981, 0.0
        %v1115 = vmax.f32 %v792, 0.0
        %v1116 = vmax.f32 %v794, 0.0
        %v1117 = vmax.f32 %v985, 0.0
        %v1118 = vmax.f32 %v987, 0.0
        %v1119 = vmax.f32 %v796, 0.0
        %v1120 = vmax.f32 %v798, 0.0
        %v1121 = vmax.f32 %v989, 0.0
        %v1122 = vmax.f32 %v991, 0.0
        %v1123 = vmax.f32 %v802, 0.0
        %v1124 = vmax.f32 %v804, 0.0
        %v1125 = vmax.f32 %v995, 0.0
        %v1126 = vmax.f32 %v997, 0.0
        %v1127 = vmax.f32 %v806, 0.0
        %v1128 = vmax.f32 %v808, 0.0
        %v1129 = vmax.f32 %v999, 0.0
        %v1130 = vmax.f32 %v1001, 0.0
        %v1131 = vpack.c.bf16 %v1007, %v1003
        %v1132 = vpack.c.bf16 %v1008, %v1004
        %v1133 = vpack.c.bf16 %v1009, %v1005
        %v1134 = vpack.c.bf16 %v1010, %v1006
        %v1135 = vpack.c.bf16 %v1015, %v1011
        %v1136 = vpack.c.bf16 %v1016, %v1012
        %v1137 = vpack.c.bf16 %v1017, %v1013
        %v1138 = vpack.c.bf16 %v1018, %v1014
        %v1139 = vpack.c.bf16 %v1023, %v1019
        %v1140 = vpack.c.bf16 %v1024, %v1020
        %v1141 = vpack.c.bf16 %v1025, %v1021
        %v1142 = vpack.c.bf16 %v1026, %v1022
        %v1143 = vpack.c.bf16 %v1031, %v1027
        %v1144 = vpack.c.bf16 %v1032, %v1028
        %v1145 = vpack.c.bf16 %v1033, %v1029
        %v1146 = vpack.c.bf16 %v1034, %v1030
        %v1147 = vpack.c.bf16 %v1039, %v1035
        %v1148 = vpack.c.bf16 %v1040, %v1036
        %v1149 = vpack.c.bf16 %v1041, %v1037
        %v1150 = vpack.c.bf16 %v1042, %v1038
        %v1151 = vpack.c.bf16 %v1047, %v1043
        %v1152 = vpack.c.bf16 %v1048, %v1044
        %v1153 = vpack.c.bf16 %v1049, %v1045
        %v1154 = vpack.c.bf16 %v1050, %v1046
        %v1155 = vpack.c.bf16 %v1055, %v1051
        %v1156 = vpack.c.bf16 %v1056, %v1052
        %v1157 = vpack.c.bf16 %v1057, %v1053
        %v1158 = vpack.c.bf16 %v1058, %v1054
        %v1159 = vpack.c.bf16 %v1063, %v1059
        %v1160 = vpack.c.bf16 %v1064, %v1060
        %v1161 = vpack.c.bf16 %v1065, %v1061
        %v1162 = vpack.c.bf16 %v1066, %v1062
        %v1163 = vpack.c.bf16 %v1071, %v1067
        %v1164 = vpack.c.bf16 %v1072, %v1068
        %v1165 = vpack.c.bf16 %v1073, %v1069
        %v1166 = vpack.c.bf16 %v1074, %v1070
        %v1167 = vpack.c.bf16 %v1079, %v1075
        %v1168 = vpack.c.bf16 %v1080, %v1076
        %v1169 = vpack.c.bf16 %v1081, %v1077
        %v1170 = vpack.c.bf16 %v1082, %v1078
        %v1171 = vpack.c.bf16 %v1087, %v1083
        %v1172 = vpack.c.bf16 %v1088, %v1084
        %v1173 = vpack.c.bf16 %v1089, %v1085
        %v1174 = vpack.c.bf16 %v1090, %v1086
        %v1175 = vpack.c.bf16 %v1095, %v1091
        %v1176 = vpack.c.bf16 %v1096, %v1092
        %v1177 = vpack.c.bf16 %v1097, %v1093
        %v1178 = vpack.c.bf16 %v1098, %v1094
        %v1179 = vpack.c.bf16 %v1103, %v1099
        %v1180 = vpack.c.bf16 %v1104, %v1100
        %v1181 = vpack.c.bf16 %v1105, %v1101
        %v1182 = vpack.c.bf16 %v1106, %v1102
        %v1183 = vpack.c.bf16 %v1111, %v1107
        %v1184 = vpack.c.bf16 %v1112, %v1108
        %v1185 = vpack.c.bf16 %v1113, %v1109
        %v1186 = vpack.c.bf16 %v1114, %v1110
        %v1187 = vpack.c.bf16 %v1119, %v1115
        %v1188 = vpack.c.bf16 %v1120, %v1116
        %v1189 = vpack.c.bf16 %v1121, %v1117
        %v1190 = vpack.c.bf16 %v1122, %v1118
        %v1191 = vpack.c.bf16 %v1127, %v1123
        %v1192 = vpack.c.bf16 %v1128, %v1124
        %v1193 = vpack.c.bf16 %v1129, %v1125
        %v1194 = vpack.c.bf16 %v1130, %v1126
        %v1195 = vld [vmem:[#allocation7] sm:$0xf]
        %v1196 = vld [vmem:[#allocation7 + $0x4] sm:$0xf]
        %v1197 = vld [vmem:[#allocation7 + $0x8] sm:$0xf]
        %v1198 = vld [vmem:[#allocation7 + $0xc] sm:$0xf]
        %v1199 = vld [vmem:[#allocation7 + $0x10] sm:$0xf]
        %v1200 = vld [vmem:[#allocation7 + $0x14] sm:$0xf]
        %v1201 = vld [vmem:[#allocation7 + $0x18] sm:$0xf]
        %v1202 = vld [vmem:[#allocation7 + $0x1c] sm:$0xf]
        %v1203 = vld [vmem:[#allocation7 + $0x20] sm:$0xf]
        %v1204 = vld [vmem:[#allocation7 + $0x24] sm:$0xf]
        %v1205 = vld [vmem:[#allocation7 + $0x28] sm:$0xf]
        %v1206 = vld [vmem:[#allocation7 + $0x2c] sm:$0xf]
        %v1207 = vld [vmem:[#allocation7 + $0x30] sm:$0xf]
        %v1208 = vld [vmem:[#allocation7 + $0x34] sm:$0xf]
        %v1209 = vld [vmem:[#allocation7 + $0x38] sm:$0xf]
        %v1210 = vld [vmem:[#allocation7 + $0x3c] sm:$0xf]
        %v1211 = vld [vmem:[#allocation7 + $0x40] sm:$0xf]
        %v1212 = vld [vmem:[#allocation7 + $0x44] sm:$0xf]
        %v1213 = vld [vmem:[#allocation7 + $0x48] sm:$0xf]
        %v1214 = vld [vmem:[#allocation7 + $0x4c] sm:$0xf]
        %v1215 = vld [vmem:[#allocation7 + $0x50] sm:$0xf]
        %v1216 = vld [vmem:[#allocation7 + $0x54] sm:$0xf]
        %v1217 = vld [vmem:[#allocation7 + $0x58] sm:$0xf]
        %v1218 = vld [vmem:[#allocation7 + $0x5c] sm:$0xf]
        %v1219 = vld [vmem:[#allocation7 + $0x60] sm:$0xf]
        %v1220 = vld [vmem:[#allocation7 + $0x64] sm:$0xf]
        %v1221 = vld [vmem:[#allocation7 + $0x68] sm:$0xf]
        %v1222 = vld [vmem:[#allocation7 + $0x6c] sm:$0xf]
        %v1223 = vld [vmem:[#allocation7 + $0x70] sm:$0xf]
        %v1224 = vld [vmem:[#allocation7 + $0x74] sm:$0xf]
        %v1225 = vld [vmem:[#allocation7 + $0x78] sm:$0xf]
        %v1226 = vld [vmem:[#allocation7 + $0x7c] sm:$0xf]
        %v1227 = vld [vmem:[#allocation7 + $0x80] sm:$0xf]
        %v1228 = vld [vmem:[#allocation7 + $0x84] sm:$0xf]
        %v1229 = vld [vmem:[#allocation7 + $0x88] sm:$0xf]
        %v1230 = vld [vmem:[#allocation7 + $0x8c] sm:$0xf]
        %v1231 = vld [vmem:[#allocation7 + $0x90] sm:$0xf]
        %v1232 = vld [vmem:[#allocation7 + $0x94] sm:$0xf]
        %v1233 = vld [vmem:[#allocation7 + $0x98] sm:$0xf]
        %v1234 = vld [vmem:[#allocation7 + $0x9c] sm:$0xf]
        %v1235 = vld [vmem:[#allocation7 + $0xa0] sm:$0xf]
        %v1236 = vld [vmem:[#allocation7 + $0xa4] sm:$0xf]
        %v1237 = vld [vmem:[#allocation7 + $0xa8] sm:$0xf]
        %v1238 = vld [vmem:[#allocation7 + $0xac] sm:$0xf]
        %v1239 = vld [vmem:[#allocation7 + $0xb0] sm:$0xf]
        %v1240 = vld [vmem:[#allocation7 + $0xb4] sm:$0xf]
        %v1241 = vld [vmem:[#allocation7 + $0xb8] sm:$0xf]
        %v1242 = vld [vmem:[#allocation7 + $0xbc] sm:$0xf]
        %v1243 = vld [vmem:[#allocation7 + $0xc0] sm:$0xf]
        %v1244 = vld [vmem:[#allocation7 + $0xc4] sm:$0xf]
        %v1245 = vld [vmem:[#allocation7 + $0xc8] sm:$0xf]
        %v1246 = vld [vmem:[#allocation7 + $0xcc] sm:$0xf]
        %v1247 = vld [vmem:[#allocation7 + $0xd0] sm:$0xf]
        %v1248 = vld [vmem:[#allocation7 + $0xd4] sm:$0xf]
        %v1249 = vld [vmem:[#allocation7 + $0xd8] sm:$0xf]
        %v1250 = vld [vmem:[#allocation7 + $0xdc] sm:$0xf]
        %v1251 = vld [vmem:[#allocation7 + $0xe0] sm:$0xf]
        %v1252 = vld [vmem:[#allocation7 + $0xe4] sm:$0xf]
        %v1253 = vld [vmem:[#allocation7 + $0xe8] sm:$0xf]
        %v1254 = vld [vmem:[#allocation7 + $0xec] sm:$0xf]
        %v1255 = vld [vmem:[#allocation7 + $0xf0] sm:$0xf]
        %v1256 = vld [vmem:[#allocation7 + $0xf4] sm:$0xf]
        %v1257 = vld [vmem:[#allocation7 + $0xf8] sm:$0xf]
        %v1258 = vld [vmem:[#allocation7 + $0xfc] sm:$0xf]
        %v1259 = vld [vmem:[%s4] sm:$0x1]
        %v1261 = vlaneseq
        %v1262 = vshrl.u32 %v1261, 7
        %v1263 = vsub.s32 0, %v1262
        %v1264 = vrot.slane %v1259, %v1263
        %v1330 = vunpack.c.l.b16 %v1195
        %v1331 = vunpack.c.l.b16 %v1196
        %v1332 = vunpack.c.l.b16 %v1197
        %v1333 = vunpack.c.l.b16 %v1198
        %v1334 = vunpack.c.l.b16 %v1199
        %v1335 = vunpack.c.l.b16 %v1200
        %v1336 = vunpack.c.l.b16 %v1201
        %v1337 = vunpack.c.l.b16 %v1202
        %v1338 = vunpack.c.l.b16 %v1203
        %v1339 = vunpack.c.l.b16 %v1204
        %v1340 = vunpack.c.l.b16 %v1205
        %v1341 = vunpack.c.l.b16 %v1206
        %v1342 = vunpack.c.l.b16 %v1207
        %v1343 = vunpack.c.l.b16 %v1208
        %v1344 = vunpack.c.l.b16 %v1209
        %v1345 = vunpack.c.l.b16 %v1210
        %v1346 = vunpack.c.l.b16 %v1211
        %v1347 = vunpack.c.l.b16 %v1212
        %v1348 = vunpack.c.l.b16 %v1213
        %v1349 = vunpack.c.l.b16 %v1214
        %v1350 = vunpack.c.l.b16 %v1215
        %v1351 = vunpack.c.l.b16 %v1216
        %v1352 = vunpack.c.l.b16 %v1217
        %v1353 = vunpack.c.l.b16 %v1218
        %v1354 = vunpack.c.l.b16 %v1219
        %v1355 = vunpack.c.l.b16 %v1220
        %v1356 = vunpack.c.l.b16 %v1221
        %v1357 = vunpack.c.l.b16 %v1222
        %v1358 = vunpack.c.l.b16 %v1223
        %v1359 = vunpack.c.l.b16 %v1224
        %v1360 = vunpack.c.l.b16 %v1225
        %v1361 = vunpack.c.l.b16 %v1226
        %v1362 = vunpack.c.l.b16 %v1227
        %v1363 = vunpack.c.l.b16 %v1228
        %v1364 = vunpack.c.l.b16 %v1229
        %v1365 = vunpack.c.l.b16 %v1230
        %v1366 = vunpack.c.l.b16 %v1231
        %v1367 = vunpack.c.l.b16 %v1232
        %v1368 = vunpack.c.l.b16 %v1233
        %v1369 = vunpack.c.l.b16 %v1234
        %v1370 = vunpack.c.l.b16 %v1235
        %v1371 = vunpack.c.l.b16 %v1236
        %v1372 = vunpack.c.l.b16 %v1237
        %v1373 = vunpack.c.l.b16 %v1238
        %v1374 = vunpack.c.l.b16 %v1239
        %v1375 = vunpack.c.l.b16 %v1240
        %v1376 = vunpack.c.l.b16 %v1241
        %v1377 = vunpack.c.l.b16 %v1242
        %v1378 = vunpack.c.l.b16 %v1243
        %v1379 = vunpack.c.l.b16 %v1244
        %v1380 = vunpack.c.l.b16 %v1245
        %v1381 = vunpack.c.l.b16 %v1246
        %v1382 = vunpack.c.l.b16 %v1247
        %v1383 = vunpack.c.l.b16 %v1248
        %v1384 = vunpack.c.l.b16 %v1249
        %v1385 = vunpack.c.l.b16 %v1250
        %v1386 = vunpack.c.l.b16 %v1251
        %v1387 = vunpack.c.l.b16 %v1252
        %v1388 = vunpack.c.l.b16 %v1253
        %v1389 = vunpack.c.l.b16 %v1254
        %v1390 = vunpack.c.l.b16 %v1255
        %v1391 = vunpack.c.l.b16 %v1256
        %v1392 = vunpack.c.l.b16 %v1257
        %v1393 = vunpack.c.l.b16 %v1258
        %v1394 = vpack.c.b16 %v1331, %v1330
        %v1395 = vpack.c.b16 %v1333, %v1332
        %v1396 = vpack.c.b16 %v1335, %v1334
        %v1397 = vpack.c.b16 %v1337, %v1336
        %v1398 = vpack.c.b16 %v1339, %v1338
        %v1399 = vpack.c.b16 %v1341, %v1340
        %v1400 = vpack.c.b16 %v1343, %v1342
        %v1401 = vpack.c.b16 %v1345, %v1344
        %v1402 = vpack.c.b16 %v1347, %v1346
        %v1403 = vpack.c.b16 %v1349, %v1348
        %v1404 = vpack.c.b16 %v1351, %v1350
        %v1405 = vpack.c.b16 %v1353, %v1352
        %v1406 = vpack.c.b16 %v1355, %v1354
        %v1407 = vpack.c.b16 %v1357, %v1356
        %v1408 = vpack.c.b16 %v1359, %v1358
        %v1409 = vpack.c.b16 %v1361, %v1360
        %v1410 = vpack.c.b16 %v1363, %v1362
        %v1411 = vpack.c.b16 %v1365, %v1364
        %v1412 = vpack.c.b16 %v1367, %v1366
        %v1413 = vpack.c.b16 %v1369, %v1368
        %v1414 = vpack.c.b16 %v1371, %v1370
        %v1415 = vpack.c.b16 %v1373, %v1372
        %v1416 = vpack.c.b16 %v1375, %v1374
        %v1417 = vpack.c.b16 %v1377, %v1376
        %v1418 = vpack.c.b16 %v1379, %v1378
        %v1419 = vpack.c.b16 %v1381, %v1380
        %v1420 = vpack.c.b16 %v1383, %v1382
        %v1421 = vpack.c.b16 %v1385, %v1384
        %v1422 = vpack.c.b16 %v1387, %v1386
        %v1423 = vpack.c.b16 %v1389, %v1388
        %v1424 = vpack.c.b16 %v1391, %v1390
        %v1425 = vpack.c.b16 %v1393, %v1392
        %1458 = vmatprep.subr.bf16.mxu0 0
        %1459 = vmatpush1.bf16.msra.mxu0 %v1394
        %1460 = vmatprep.subr.bf16.mxu0 0
        %1461 = vmatpush1.bf16.msra.mxu0 %v1395
        %1462 = vmatprep.subr.bf16.mxu0 0
        %1463 = vmatpush1.bf16.msra.mxu0 %v1396
        %1464 = vmatprep.subr.bf16.mxu0 0
        %1465 = vmatpush1.bf16.msra.mxu0 %v1397
        %1466 = vmatprep.subr.bf16.mxu0 0
        %1467 = vmatpush1.bf16.msra.mxu0 %v1398
        %1468 = vmatprep.subr.bf16.mxu0 0
        %1469 = vmatpush1.bf16.msra.mxu0 %v1399
        %1470 = vmatprep.subr.bf16.mxu0 0
        %1471 = vmatpush1.bf16.msra.mxu0 %v1400
        %1472 = vmatprep.subr.bf16.mxu0 0
        %1473 = vmatpush1.bf16.msra.mxu0 %v1401
        %1474 = vmatprep.subr.bf16.mxu0 0
        %1475 = vmatpush1.bf16.msra.mxu0 %v1402
        %1476 = vmatprep.subr.bf16.mxu0 0
        %1477 = vmatpush1.bf16.msra.mxu0 %v1403
        %1478 = vmatprep.subr.bf16.mxu0 0
        %1479 = vmatpush1.bf16.msra.mxu0 %v1404
        %1480 = vmatprep.subr.bf16.mxu0 0
        %1481 = vmatpush1.bf16.msra.mxu0 %v1405
        %1482 = vmatprep.subr.bf16.mxu0 0
        %1483 = vmatpush1.bf16.msra.mxu0 %v1406
        %1484 = vmatprep.subr.bf16.mxu0 0
        %1485 = vmatpush1.bf16.msra.mxu0 %v1407
        %1486 = vmatprep.subr.bf16.mxu0 0
        %1487 = vmatpush1.bf16.msra.mxu0 %v1408
        %1488 = vmatprep.subr.bf16.mxu0 0
        %1489 = vmatpush1.bf16.msra.mxu0 %v1409
        %1490 = vmatprep.mubr.bf16.mxu0 %v1132
        %1491 = vmatmul.mubr.bf16.gmra.mrb[0].mxu0 %v1131
        %v1492 = vpop.f32.mrb[0].mxu0
        %v1493 = vadd.f32 %v1264, %v1492
        %v1494 = vpop.f32.mrb[0].mxu0
        %v1495 = vpop.f32.mrb[0].mxu0
        %v1496 = vadd.f32 %v1264, %v1495
        %v1497 = vpop.f32.mrb[0].mxu0
        %1498 = vmatprep.mubr.bf16.mxu0 %v1136
        %1499 = vmatmul.mubr.bf16.gmra.mrb[0].mxu0 %v1135
        %v1500 = vpop.f32.mrb[0].mxu0
        %v1501 = vadd.f32 %v1264, %v1500
        %v1502 = vpop.f32.mrb[0].mxu0
        %v1503 = vpop.f32.mrb[0].mxu0
        %v1504 = vadd.f32 %v1264, %v1503
        %v1505 = vpop.f32.mrb[0].mxu0
        %1506 = vmatprep.mubr.bf16.mxu0 %v1140
        %1507 = vmatmul.mubr.bf16.gmra.mrb[0].mxu0 %v1139
        %v1508 = vpop.f32.mrb[0].mxu0
        %v1509 = vadd.f32 %v1264, %v1508
        %v1510 = vpop.f32.mrb[0].mxu0
        %v1511 = vpop.f32.mrb[0].mxu0
        %v1512 = vadd.f32 %v1264, %v1511
        %v1513 = vpop.f32.mrb[0].mxu0
        %1514 = vmatprep.mubr.bf16.mxu0 %v1144
        %1515 = vmatmul.mubr.bf16.gmra.mrb[0].mxu0 %v1143
        %v1516 = vpop.f32.mrb[0].mxu0
        %v1517 = vadd.f32 %v1264, %v1516
        %v1518 = vpop.f32.mrb[0].mxu0
        %v1519 = vpop.f32.mrb[0].mxu0
        %v1520 = vadd.f32 %v1264, %v1519
        %v1521 = vpop.f32.mrb[0].mxu0
        %1522 = vmatprep.mubr.bf16.mxu0 %v1148
        %1523 = vmatmul.mubr.bf16.gmra.mrb[0].mxu0 %v1147
        %v1524 = vpop.f32.mrb[0].mxu0
        %v1525 = vadd.f32 %v1264, %v1524
        %v1526 = vpop.f32.mrb[0].mxu0
        %v1527 = vpop.f32.mrb[0].mxu0
        %v1528 = vadd.f32 %v1264, %v1527
        %v1529 = vpop.f32.mrb[0].mxu0
        %1530 = vmatprep.mubr.bf16.mxu0 %v1152
        %1531 = vmatmul.mubr.bf16.gmra.mrb[0].mxu0 %v1151
        %v1532 = vpop.f32.mrb[0].mxu0
        %v1533 = vadd.f32 %v1264, %v1532
        %v1534 = vpop.f32.mrb[0].mxu0
        %v1535 = vpop.f32.mrb[0].mxu0
        %v1536 = vadd.f32 %v1264, %v1535
        %v1537 = vpop.f32.mrb[0].mxu0
        %1538 = vmatprep.mubr.bf16.mxu0 %v1156
        %1539 = vmatmul.mubr.bf16.gmra.mrb[0].mxu0 %v1155
        %v1540 = vpop.f32.mrb[0].mxu0
        %v1541 = vadd.f32 %v1264, %v1540
        %v1542 = vpop.f32.mrb[0].mxu0
        %v1543 = vpop.f32.mrb[0].mxu0
        %v1544 = vadd.f32 %v1264, %v1543
        %v1545 = vpop.f32.mrb[0].mxu0
        %1546 = vmatprep.mubr.bf16.mxu0 %v1160
        %1547 = vmatmul.mubr.bf16.gmra.mrb[0].mxu0 %v1159
        %v1548 = vpop.f32.mrb[0].mxu0
        %v1549 = vadd.f32 %v1264, %v1548
        %v1550 = vpop.f32.mrb[0].mxu0
        %v1551 = vpop.f32.mrb[0].mxu0
        %v1552 = vadd.f32 %v1264, %v1551
        %v1553 = vpop.f32.mrb[0].mxu0
        %1554 = vmatprep.mubr.bf16.mxu0 %v1164
        %1555 = vmatmul.mubr.bf16.gmra.mrb[0].mxu0 %v1163
        %v1556 = vpop.f32.mrb[0].mxu0
        %v1557 = vadd.f32 %v1264, %v1556
        %v1558 = vpop.f32.mrb[0].mxu0
        %v1559 = vpop.f32.mrb[0].mxu0
        %v1560 = vadd.f32 %v1264, %v1559
        %v1561 = vpop.f32.mrb[0].mxu0
        %1562 = vmatprep.mubr.bf16.mxu0 %v1168
        %1563 = vmatmul.mubr.bf16.gmra.mrb[0].mxu0 %v1167
        %v1564 = vpop.f32.mrb[0].mxu0
        %v1565 = vadd.f32 %v1264, %v1564
        %v1566 = vpop.f32.mrb[0].mxu0
        %v1567 = vpop.f32.mrb[0].mxu0
        %v1568 = vadd.f32 %v1264, %v1567
        %v1569 = vpop.f32.mrb[0].mxu0
        %1570 = vmatprep.mubr.bf16.mxu0 %v1172
        %1571 = vmatmul.mubr.bf16.gmra.mrb[0].mxu0 %v1171
        %v1572 = vpop.f32.mrb[0].mxu0
        %v1573 = vadd.f32 %v1264, %v1572
        %v1574 = vpop.f32.mrb[0].mxu0
        %v1575 = vpop.f32.mrb[0].mxu0
        %v1576 = vadd.f32 %v1264, %v1575
        %v1577 = vpop.f32.mrb[0].mxu0
        %1578 = vmatprep.mubr.bf16.mxu0 %v1176
        %1579 = vmatmul.mubr.bf16.gmra.mrb[0].mxu0 %v1175
        %v1580 = vpop.f32.mrb[0].mxu0
        %v1581 = vadd.f32 %v1264, %v1580
        %v1582 = vpop.f32.mrb[0].mxu0
        %v1583 = vpop.f32.mrb[0].mxu0
        %v1584 = vadd.f32 %v1264, %v1583
        %v1585 = vpop.f32.mrb[0].mxu0
        %1586 = vmatprep.mubr.bf16.mxu0 %v1180
        %1587 = vmatmul.mubr.bf16.gmra.mrb[0].mxu0 %v1179
        %v1588 = vpop.f32.mrb[0].mxu0
        %v1589 = vadd.f32 %v1264, %v1588
        %v1590 = vpop.f32.mrb[0].mxu0
        %v1591 = vpop.f32.mrb[0].mxu0
        %v1592 = vadd.f32 %v1264, %v1591
        %v1593 = vpop.f32.mrb[0].mxu0
        %1594 = vmatprep.mubr.bf16.mxu0 %v1184
        %1595 = vmatmul.mubr.bf16.gmra.mrb[0].mxu0 %v1183
        %v1596 = vpop.f32.mrb[0].mxu0
        %v1597 = vadd.f32 %v1264, %v1596
        %v1598 = vpop.f32.mrb[0].mxu0
        %v1599 = vpop.f32.mrb[0].mxu0
        %v1600 = vadd.f32 %v1264, %v1599
        %v1601 = vpop.f32.mrb[0].mxu0
        %1602 = vmatprep.mubr.bf16.mxu0 %v1188
        %1603 = vmatmul.mubr.bf16.gmra.mrb[0].mxu0 %v1187
        %v1604 = vpop.f32.mrb[0].mxu0
        %v1605 = vadd.f32 %v1264, %v1604
        %v1606 = vpop.f32.mrb[0].mxu0
        %v1607 = vpop.f32.mrb[0].mxu0
        %v1608 = vadd.f32 %v1264, %v1607
        %v1609 = vpop.f32.mrb[0].mxu0
        %1610 = vmatprep.mubr.bf16.mxu0 %v1192
        %1611 = vmatmul.mubr.bf16.gmra.mrb[0].mxu0 %v1191
        %v1612 = vpop.f32.mrb[0].mxu0
        %v1613 = vadd.f32 %v1264, %v1612
        %v1614 = vpop.f32.mrb[0].mxu0
        %v1615 = vpop.f32.mrb[0].mxu0
        %v1616 = vadd.f32 %v1264, %v1615
        %v1617 = vpop.f32.mrb[0].mxu0
        %1618 = vdwg.mxu0
        %1619 = vmatprep.subr.bf16.mxu0 0
        %1620 = vmatpush1.bf16.msra.mxu0 %v1410
        %1621 = vmatprep.subr.bf16.mxu0 0
        %1622 = vmatpush1.bf16.msra.mxu0 %v1411
        %1623 = vmatprep.subr.bf16.mxu0 0
        %1624 = vmatpush1.bf16.msra.mxu0 %v1412
        %1625 = vmatprep.subr.bf16.mxu0 0
        %1626 = vmatpush1.bf16.msra.mxu0 %v1413
        %1627 = vmatprep.subr.bf16.mxu0 0
        %1628 = vmatpush1.bf16.msra.mxu0 %v1414
        %1629 = vmatprep.subr.bf16.mxu0 0
        %1630 = vmatpush1.bf16.msra.mxu0 %v1415
        %1631 = vmatprep.subr.bf16.mxu0 0
        %1632 = vmatpush1.bf16.msra.mxu0 %v1416
        %1633 = vmatprep.subr.bf16.mxu0 0
        %1634 = vmatpush1.bf16.msra.mxu0 %v1417
        %1635 = vmatprep.subr.bf16.mxu0 0
        %1636 = vmatpush1.bf16.msra.mxu0 %v1418
        %1637 = vmatprep.subr.bf16.mxu0 0
        %1638 = vmatpush1.bf16.msra.mxu0 %v1419
        %1639 = vmatprep.subr.bf16.mxu0 0
        %1640 = vmatpush1.bf16.msra.mxu0 %v1420
        %1641 = vmatprep.subr.bf16.mxu0 0
        %1642 = vmatpush1.bf16.msra.mxu0 %v1421
        %1643 = vmatprep.subr.bf16.mxu0 0
        %1644 = vmatpush1.bf16.msra.mxu0 %v1422
        %1645 = vmatprep.subr.bf16.mxu0 0
        %1646 = vmatpush1.bf16.msra.mxu0 %v1423
        %1647 = vmatprep.subr.bf16.mxu0 0
        %1648 = vmatpush1.bf16.msra.mxu0 %v1424
        %1649 = vmatprep.subr.bf16.mxu0 0
        %1650 = vmatpush1.bf16.msra.mxu0 %v1425
        %1651 = vmatprep.mubr.bf16.mxu0 %v1134
        %1652 = vmatmul.mubr.bf16.gmra.mrb[0].mxu0 %v1133
        %v1653 = vpop.f32.mrb[0].mxu0
        %v1654 = vadd.f32 %v1493, %v1653
        %v1655 = vpop.f32.mrb[0].mxu0
        %v1656 = vpop.f32.mrb[0].mxu0
        %v1657 = vadd.f32 %v1496, %v1656
        %v1658 = vpop.f32.mrb[0].mxu0
        %1659 = vmatprep.mubr.bf16.mxu0 %v1138
        %1660 = vmatmul.mubr.bf16.gmra.mrb[0].mxu0 %v1137
        %v1661 = vpop.f32.mrb[0].mxu0
        %v1662 = vadd.f32 %v1501, %v1661
        %v1663 = vpop.f32.mrb[0].mxu0
        %v1664 = vpop.f32.mrb[0].mxu0
        %v1665 = vadd.f32 %v1504, %v1664
        %v1666 = vpop.f32.mrb[0].mxu0
        %1667 = vmatprep.mubr.bf16.mxu0 %v1142
        %1668 = vmatmul.mubr.bf16.gmra.mrb[0].mxu0 %v1141
        %v1669 = vpop.f32.mrb[0].mxu0
        %v1670 = vadd.f32 %v1509, %v1669
        %v1671 = vpop.f32.mrb[0].mxu0
        %v1672 = vpop.f32.mrb[0].mxu0
        %v1673 = vadd.f32 %v1512, %v1672
        %v1674 = vpop.f32.mrb[0].mxu0
        %1675 = vmatprep.mubr.bf16.mxu0 %v1146
        %1676 = vmatmul.mubr.bf16.gmra.mrb[0].mxu0 %v1145
        %v1677 = vpop.f32.mrb[0].mxu0
        %v1678 = vadd.f32 %v1517, %v1677
        %v1679 = vpop.f32.mrb[0].mxu0
        %v1680 = vpop.f32.mrb[0].mxu0
        %v1681 = vadd.f32 %v1520, %v1680
        %v1682 = vpop.f32.mrb[0].mxu0
        %1683 = vmatprep.mubr.bf16.mxu0 %v1150
        %1684 = vmatmul.mubr.bf16.gmra.mrb[0].mxu0 %v1149
        %v1685 = vpop.f32.mrb[0].mxu0
        %v1686 = vadd.f32 %v1525, %v1685
        %v1687 = vpop.f32.mrb[0].mxu0
        %v1688 = vpop.f32.mrb[0].mxu0
        %v1689 = vadd.f32 %v1528, %v1688
        %v1690 = vpop.f32.mrb[0].mxu0
        %1691 = vmatprep.mubr.bf16.mxu0 %v1154
        %1692 = vmatmul.mubr.bf16.gmra.mrb[0].mxu0 %v1153
        %v1693 = vpop.f32.mrb[0].mxu0
        %v1694 = vadd.f32 %v1533, %v1693
        %v1695 = vpop.f32.mrb[0].mxu0
        %v1696 = vpop.f32.mrb[0].mxu0
        %v1697 = vadd.f32 %v1536, %v1696
        %v1698 = vpop.f32.mrb[0].mxu0
        %1699 = vmatprep.mubr.bf16.mxu0 %v1158
        %1700 = vmatmul.mubr.bf16.gmra.mrb[0].mxu0 %v1157
        %v1701 = vpop.f32.mrb[0].mxu0
        %v1702 = vadd.f32 %v1541, %v1701
        %v1703 = vpop.f32.mrb[0].mxu0
        %v1704 = vpop.f32.mrb[0].mxu0
        %v1705 = vadd.f32 %v1544, %v1704
        %v1706 = vpop.f32.mrb[0].mxu0
        %1707 = vmatprep.mubr.bf16.mxu0 %v1162
        %1708 = vmatmul.mubr.bf16.gmra.mrb[0].mxu0 %v1161
        %v1709 = vpop.f32.mrb[0].mxu0
        %v1710 = vadd.f32 %v1549, %v1709
        %v1711 = vpop.f32.mrb[0].mxu0
        %v1712 = vpop.f32.mrb[0].mxu0
        %v1713 = vadd.f32 %v1552, %v1712
        %v1714 = vpop.f32.mrb[0].mxu0
        %1715 = vmatprep.mubr.bf16.mxu0 %v1166
        %1716 = vmatmul.mubr.bf16.gmra.mrb[0].mxu0 %v1165
        %v1717 = vpop.f32.mrb[0].mxu0
        %v1718 = vadd.f32 %v1557, %v1717
        %v1719 = vpop.f32.mrb[0].mxu0
        %v1720 = vpop.f32.mrb[0].mxu0
        %v1721 = vadd.f32 %v1560, %v1720
        %v1722 = vpop.f32.mrb[0].mxu0
        %1723 = vmatprep.mubr.bf16.mxu0 %v1170
        %1724 = vmatmul.mubr.bf16.gmra.mrb[0].mxu0 %v1169
        %v1725 = vpop.f32.mrb[0].mxu0
        %v1726 = vadd.f32 %v1565, %v1725
        %v1727 = vpop.f32.mrb[0].mxu0
        %v1728 = vpop.f32.mrb[0].mxu0
        %v1729 = vadd.f32 %v1568, %v1728
        %v1730 = vpop.f32.mrb[0].mxu0
        %1731 = vmatprep.mubr.bf16.mxu0 %v1174
        %1732 = vmatmul.mubr.bf16.gmra.mrb[0].mxu0 %v1173
        %v1733 = vpop.f32.mrb[0].mxu0
        %v1734 = vadd.f32 %v1573, %v1733
        %v1735 = vpop.f32.mrb[0].mxu0
        %v1736 = vpop.f32.mrb[0].mxu0
        %v1737 = vadd.f32 %v1576, %v1736
        %v1738 = vpop.f32.mrb[0].mxu0
        %1739 = vmatprep.mubr.bf16.mxu0 %v1178
        %1740 = vmatmul.mubr.bf16.gmra.mrb[0].mxu0 %v1177
        %v1741 = vpop.f32.mrb[0].mxu0
        %v1742 = vadd.f32 %v1581, %v1741
        %v1743 = vpop.f32.mrb[0].mxu0
        %v1744 = vpop.f32.mrb[0].mxu0
        %v1745 = vadd.f32 %v1584, %v1744
        %v1746 = vpop.f32.mrb[0].mxu0
        %1747 = vmatprep.mubr.bf16.mxu0 %v1182
        %1748 = vmatmul.mubr.bf16.gmra.mrb[0].mxu0 %v1181
        %v1749 = vpop.f32.mrb[0].mxu0
        %v1750 = vadd.f32 %v1589, %v1749
        %v1751 = vpop.f32.mrb[0].mxu0
        %v1752 = vpop.f32.mrb[0].mxu0
        %v1753 = vadd.f32 %v1592, %v1752
        %v1754 = vpop.f32.mrb[0].mxu0
        %1755 = vmatprep.mubr.bf16.mxu0 %v1186
        %1756 = vmatmul.mubr.bf16.gmra.mrb[0].mxu0 %v1185
        %v1757 = vpop.f32.mrb[0].mxu0
        %v1758 = vadd.f32 %v1597, %v1757
        %v1759 = vpop.f32.mrb[0].mxu0
        %v1760 = vpop.f32.mrb[0].mxu0
        %v1761 = vadd.f32 %v1600, %v1760
        %v1762 = vpop.f32.mrb[0].mxu0
        %1763 = vmatprep.mubr.bf16.mxu0 %v1190
        %1764 = vmatmul.mubr.bf16.gmra.mrb[0].mxu0 %v1189
        %v1765 = vpop.f32.mrb[0].mxu0
        %v1766 = vadd.f32 %v1605, %v1765
        %v1767 = vpop.f32.mrb[0].mxu0
        %v1768 = vpop.f32.mrb[0].mxu0
        %v1769 = vadd.f32 %v1608, %v1768
        %v1770 = vpop.f32.mrb[0].mxu0
        %1771 = vmatprep.mubr.bf16.mxu0 %v1194
        %1772 = vmatmul.mubr.bf16.gmra.mrb[0].mxu0 %v1193
        %v1773 = vpop.f32.mrb[0].mxu0
        %v1774 = vadd.f32 %v1613, %v1773
        %v1775 = vpop.f32.mrb[0].mxu0
        %v1776 = vpop.f32.mrb[0].mxu0
        %v1777 = vadd.f32 %v1616, %v1776
        %v1778 = vpop.f32.mrb[0].mxu0
        %1779 = vdwg.mxu0
        %1780 = vst [vmem:[%s271] sm:$0xff] %v1654
        %1781 = vst [vmem:[%s271 + $0x8] sm:$0xff] %v1657
        %1782 = vst [vmem:[%s271 + $0x10] sm:$0xff] %v1662
        %1783 = vst [vmem:[%s271 + $0x18] sm:$0xff] %v1665
        %1784 = vst [vmem:[%s271 + $0x20] sm:$0xff] %v1670
        %1785 = vst [vmem:[%s271 + $0x28] sm:$0xff] %v1673
        %1786 = vst [vmem:[%s271 + $0x30] sm:$0xff] %v1678
        %1787 = vst [vmem:[%s271 + $0x38] sm:$0xff] %v1681
        %1788 = vst [vmem:[%s271 + $0x40] sm:$0xff] %v1686
        %1789 = vst [vmem:[%s271 + $0x48] sm:$0xff] %v1689
        %1790 = vst [vmem:[%s271 + $0x50] sm:$0xff] %v1694
        %1791 = vst [vmem:[%s271 + $0x58] sm:$0xff] %v1697
        %1792 = vst [vmem:[%s271 + $0x60] sm:$0xff] %v1702
        %1793 = vst [vmem:[%s271 + $0x68] sm:$0xff] %v1705
        %1794 = vst [vmem:[%s271 + $0x70] sm:$0xff] %v1710
        %1795 = vst [vmem:[%s271 + $0x78] sm:$0xff] %v1713
        %1796 = vst [vmem:[%s271 + $0x80] sm:$0xff] %v1718
        %1797 = vst [vmem:[%s271 + $0x88] sm:$0xff] %v1721
        %1798 = vst [vmem:[%s271 + $0x90] sm:$0xff] %v1726
        %1799 = vst [vmem:[%s271 + $0x98] sm:$0xff] %v1729
        %1800 = vst [vmem:[%s271 + $0xa0] sm:$0xff] %v1734
        %1801 = vst [vmem:[%s271 + $0xa8] sm:$0xff] %v1737
        %1802 = vst [vmem:[%s271 + $0xb0] sm:$0xff] %v1742
        %1803 = vst [vmem:[%s271 + $0xb8] sm:$0xff] %v1745
        %1804 = vst [vmem:[%s271 + $0xc0] sm:$0xff] %v1750
        %1805 = vst [vmem:[%s271 + $0xc8] sm:$0xff] %v1753
        %1806 = vst [vmem:[%s271 + $0xd0] sm:$0xff] %v1758
        %1807 = vst [vmem:[%s271 + $0xd8] sm:$0xff] %v1761
        %1808 = vst [vmem:[%s271 + $0xe0] sm:$0xff] %v1766
        %1809 = vst [vmem:[%s271 + $0xe8] sm:$0xff] %v1769
        %1810 = vst [vmem:[%s271 + $0xf0] sm:$0xff] %v1774
        %1811 = vst [vmem:[%s271 + $0xf8] sm:$0xff] %v1777
        %s1812 = sand.u32 %s141, 1
        %s1813 = scalar_lea.sflag [#allocation4], %s1812
        %s1814 = sand.u32 %s141, 1
        %s1815 = smul.addr %s1814, 256
        %s1816 = scalar_lea.vmem [#allocation8], %s1815
        // Predicated region
        $region53: #{tpu_custom_call.1} parent=39 // pred_check
          %p1817 = pneg %p151
        $region54: #{tpu_custom_call.1} parent=39 // pred_check_branch
          %1819 = sbr.rel (%p1817) target = $region56
        $region55: #{tpu_custom_call.1} parent=39 // pred_region
          %s1820 = smul.u32 32, %s23
          %s1822 = ssub.s32 4096, 4096
          %1823 = vsyncadd %s1813, %s1822
          %s1824 = smul.addr %s1820, 128
          %s1825 = scalar_lea.hbm %s5, %s1824
          %s1826 = sshll.u32 %s1816, 4
          %s1827 = int_to_ptr.vmem [resolvable:$true] %s1826
          %1832 = dma.vmem_to_hbm [thread:$0]  %s1827, 4096, %s1825, %s1813, 128, 128, 8
        $region56: #{tpu_custom_call.1} parent=39 // pred_fallthru
          _
      $region40: #{tpu_custom_call.1} parent=5 // pred_fallthru
        _
      %p1833 = scmp.le.s32.totalorder 2, %s18
      // Predicated region
      $region57: #{tpu_custom_call.1} parent=5 // pred_check
        %p1834 = pneg %p1833
      $region58: #{tpu_custom_call.1} parent=5 // pred_check_branch
        %1836 = sbr.rel (%p1834) target = $region60
      $region59: #{tpu_custom_call.1} parent=5 // pred_region
        %s1837 = ssub.s32 %s18, 2
        // Predicated region
        $region61: #{tpu_custom_call.1} parent=59 // pred_check
          %p1838 = pneg %p157
        $region62: #{tpu_custom_call.1} parent=59 // pred_check_branch
          %1840 = sbr.rel (%p1838) target = $region64
        $region63: #{tpu_custom_call.1} parent=59 // pred_region
          %s1841 = sand.u32 %s142, 1
          %s1842 = scalar_lea.sflag [#allocation4], %s1841
          %s1843 = sand.u32 %s142, 1
          %s1844 = smul.addr %s1843, 256
          %s1845 = scalar_lea.vmem [#allocation8], %s1844
          %1846 = dma.done %s1842, 4096
        $region64: #{tpu_custom_call.1} parent=59 // pred_fallthru
          _
      $region60: #{tpu_custom_call.1} parent=5 // pred_fallthru
        _
    $region6: #{tpu_custom_call.1} parent=1 // loop_footer
      %s22 = sadd.s32 1, %s18
    $region7: #{tpu_custom_call.1} parent=1 // loop_footer_branch
      %17 = sbr.rel target = $region3
    $region8: #{tpu_custom_call.1} parent=1 // loop_exit
      _
    %1847 = vsyncpa [#allocation3], 1
    %s1848 = scalar_lea.sflag [#allocation3], 1
    %1849 = vsyncpa %s1848, 1
    %1850 = vsyncpa [#allocation6], 1
    %1851 = vsyncpa [#allocation4], 1
    %s1852 = scalar_lea.sflag [#allocation4], 1
    %1853 = vsyncpa %s1852, 1

// kernel: tpu_custom_call.1
$region0: #{tpu_custom_call.1}
  #allocation0 [shape = 'u32[]', space=smem, size = 0x4, offset = 0x4, fixed_abs, tag = 'smem constant byte address 0x4 - core index']
  #allocation1 [shape = 'u32[144,128]{1,0:T(1,128)}', space=vmem, size = 0x12000, scoped, tag = 'internal scratch']
  %s0 = inlined_call_operand.hbm [shape: bf16[512,128], index: 0, kind: input, shape index: {}]
  %s1 = inlined_call_operand.hbm [shape: bf16[128,512], index: 1, kind: input, shape index: {}]
  %s2 = inlined_call_operand.vmem [shape: f32[1,512], index: 2, kind: input, shape index: {}]
  %s3 = inlined_call_operand.hbm [shape: bf16[512,128], index: 3, kind: input, shape index: {}]
  %s4 = inlined_call_operand.vmem [shape: f32[1,128], index: 4, kind: input, shape index: {}]
  %s5 = inlined_call_operand.hbm [shape: f32[512,128], index: 5, kind: output, shape index: {}]
  %s6 = sld [smem:[#allocation0]]
  $region65: #{tpu_custom_call.1} parent=0
    _
  %s8 = ssub.s32 1, %s6
  %s9 = scalar_select 0, %s8, %s6
  $region1: #{tpu_custom_call.1} parent=0
    #allocation2 [shape = 'u8[131072]{0}', space=vmem, size = 0x20000, scoped, tag = 'input window, operand 0']
    #allocation3 [shape = 's32[2]{0}', space=sflag, size = 0x8, scoped, tag = 'scoped memory for tpu_custom_call.1']
    #allocation4 [shape = 's32[2]{0}', space=sflag, size = 0x8, scoped, tag = 'scoped memory for tpu_custom_call.1']
    #allocation5 [shape = 'u8[131072]{0}', space=vmem, size = 0x20000, scoped, tag = 'input window, operand 1, single buffered']
    #allocation6 [shape = 's32[1]{0}', space=sflag, size = 0x4, scoped, tag = 'scoped memory for tpu_custom_call.1']
    #allocation7 [shape = 'u8[131072]{0}', space=vmem, size = 0x20000, scoped, tag = 'input window, operand 3, single buffered']
    #allocation8 [shape = 'u8[262144]{0}', space=vmem, size = 0x40000, scoped, tag = 'output window, operand 0']
    %10 = vsyncpa [#allocation3], 0
    %s11 = scalar_lea.sflag [#allocation3], 1
    %12 = vsyncpa %s11, 0
    %13 = vsyncpa [#allocation6], 0
    %14 = vsyncpa [#allocation4], 0
    %s15 = scalar_lea.sflag [#allocation4], 1
    %16 = vsyncpa %s15, 0
    loop: start=0, step=1, limit=4
    $region2: #{tpu_custom_call.1} parent=1 // loop_pre_header
      _
    $region3: #{tpu_custom_call.1} parent=1 // loop_header
      %s18 = sphi 0, %s22
      %p19 = scmp.ge.s32.totalorder %s18, 4
      %s28 = sphi 0, %s30
      %s31 = sphi 0, %s28
      %s32 = sphi 0, %s31
      %s48 = sphi 0, %s32
      %s52 = sphi 0, %s52
      %s54 = sphi 0, %s52
      %s55 = sphi 0, %s54
      %s69 = sphi 0, %s55
      %s73 = sphi 0, %s73
      %s75 = sphi 0, %s73
      %s76 = sphi 0, %s75
      %s90 = sphi 0, %s76
      %s94 = sphi 0, %s94
      %s96 = sphi 0, %s94
      %s97 = sphi 0, %s96
      %s111 = sphi 0, %s97
      %s115 = sphi 0, %s115
      %s117 = sphi 0, %s115
      %s118 = sphi 0, %s117
      %s132 = sphi 0, %s118
      %s138 = sphi 0, %s140
      %s141 = sphi 0, %s138
      %s142 = sphi 0, %s141
      %s158 = sphi 0, %s142
    $region4: #{tpu_custom_call.1} parent=1 // loop_header_branch
      %21 = sbr.rel (%p19) target = $region8
    $region5: #{tpu_custom_call.1} parent=1 // loop_body
      %s23 = ssub.s32 %s18, 1
      %s24 = ssub.s32 %s18, 2
      %s25 = sadd.s32 %s18, 1
      %s26 = ssub.s32 %s18, %s25
      %p27 = scmp.eq.s32.totalorder %s26, 0
      %s29 = sadd.s32 %s28, 1
      %s30 = scalar_select %p27, %s28, %s29
      %p33 = pneg %p27
      %p34 = scmp.eq.s32.totalorder %s18, 1
      %p35 = por %p33, %p34
      %p36 = scmp.ne.s32.totalorder %s28, %s31
      %p37 = scmp.eq.s32.totalorder %s18, 0
      %p38 = por %p36, %p37
      %p39 = scmp.ne.s32.totalorder %s28, %s31
      %p40 = scmp.eq.s32.totalorder %s23, 1
      %p41 = por %p39, %p40
      %p42 = scmp.ne.s32.totalorder %s31, %s32
      %p43 = scmp.eq.s32.totalorder %s23, 0
      %p44 = por %p42, %p43
      %p45 = scmp.ne.s32.totalorder %s31, %s32
      %p46 = scmp.eq.s32.totalorder %s24, 1
      %p47 = por %p45, %p46
      %p49 = scmp.ne.s32.totalorder %s32, %s48
      %p50 = scmp.eq.s32.totalorder %s24, 0
      %p51 = por %p49, %p50
      %s53 = sadd.s32 %s52, 1
      %p56 = scmp.eq.s32.totalorder %s18, 1
      %p57 = scmp.ne.s32.totalorder %s52, %s54
      %p58 = scmp.eq.s32.totalorder %s18, 0
      %p59 = por %p57, %p58
      %p60 = scmp.ne.s32.totalorder %s52, %s54
      %p61 = scmp.eq.s32.totalorder %s23, 1
      %p62 = por %p60, %p61
      %p63 = scmp.ne.s32.totalorder %s54, %s55
      %p64 = scmp.eq.s32.totalorder %s23, 0
      %p65 = por %p63, %p64
      %p66 = scmp.ne.s32.totalorder %s54, %s55
      %p67 = scmp.eq.s32.totalorder %s24, 1
      %p68 = por %p66, %p67
      %p70 = scmp.ne.s32.totalorder %s55, %s69
      %p71 = scmp.eq.s32.totalorder %s24, 0
      %p72 = por %p70, %p71
      %s74 = sadd.s32 %s73, 1
      %p77 = scmp.eq.s32.totalorder %s18, 1
      %p78 = scmp.ne.s32.totalorder %s73, %s75
      %p79 = scmp.eq.s32.totalorder %s18, 0
      %p80 = por %p78, %p79
      %p81 = scmp.ne.s32.totalorder %s73, %s75
      %p82 = scmp.eq.s32.totalorder %s23, 1
      %p83 = por %p81, %p82
      %p84 = scmp.ne.s32.totalorder %s75, %s76
      %p85 = scmp.eq.s32.totalorder %s23, 0
      %p86 = por %p84, %p85
      %p87 = scmp.ne.s32.totalorder %s75, %s76
      %p88 = scmp.eq.s32.totalorder %s24, 1
      %p89 = por %p87, %p88
      %p91 = scmp.ne.s32.totalorder %s76, %s90
      %p92 = scmp.eq.s32.totalorder %s24, 0
      %p93 = por %p91, %p92
      %s95 = sadd.s32 %s94, 1
      %p98 = scmp.eq.s32.totalorder %s18, 1
      %p99 = scmp.ne.s32.totalorder %s94, %s96
      %p100 = scmp.eq.s32.totalorder %s18, 0
      %p101 = por %p99, %p100
      %p102 = scmp.ne.s32.totalorder %s94, %s96
      %p103 = scmp.eq.s32.totalorder %s23, 1
      %p104 = por %p102, %p103
      %p105 = scmp.ne.s32.totalorder %s96, %s97
      %p106 = scmp.eq.s32.totalorder %s23, 0
      %p107 = por %p105, %p106
      %p108 = scmp.ne.s32.totalorder %s96, %s97
      %p109 = scmp.eq.s32.totalorder %s24, 1
      %p110 = por %p108, %p109
      %p112 = scmp.ne.s32.totalorder %s97, %s111
      %p113 = scmp.eq.s32.totalorder %s24, 0
      %p114 = por %p112, %p113
      %s116 = sadd.s32 %s115, 1
      %p119 = scmp.eq.s32.totalorder %s18, 1
      %p120 = scmp.ne.s32.totalorder %s115, %s117
      %p121 = scmp.eq.s32.totalorder %s18, 0
      %p122 = por %p120, %p121
      %p123 = scmp.ne.s32.totalorder %s115, %s117
      %p124 = scmp.eq.s32.totalorder %s23, 1
      %p125 = por %p123, %p124
      %p126 = scmp.ne.s32.totalorder %s117, %s118
      %p127 = scmp.eq.s32.totalorder %s23, 0
      %p128 = por %p126, %p127
      %p129 = scmp.ne.s32.totalorder %s117, %s118
      %p130 = scmp.eq.s32.totalorder %s24, 1
      %p131 = por %p129, %p130
      %p133 = scmp.ne.s32.totalorder %s118, %s132
      %p134 = scmp.eq.s32.totalorder %s24, 0
      %p135 = por %p133, %p134
      %s136 = ssub.s32 %s18, %s25
      %p137 = scmp.eq.s32.totalorder %s136, 0
      %s139 = sadd.s32 %s138, 1
      %s140 = scalar_select %p137, %s138, %s139
      %p143 = pneg %p137
      %p144 = scmp.eq.s32.totalorder %s18, 1
      %p145 = por %p143, %p144
      %p146 = scmp.ne.s32.totalorder %s138, %s141
      %p147 = scmp.eq.s32.totalorder %s18, 0
      %p148 = por %p146, %p147
      %p149 = scmp.ne.s32.totalorder %s138, %s141
      %p150 = scmp.eq.s32.totalorder %s23, 1
      %p151 = por %p149, %p150
      %p152 = scmp.ne.s32.totalorder %s141, %s142
      %p153 = scmp.eq.s32.totalorder %s23, 0
      %p154 = por %p152, %p153
      %p155 = scmp.ne.s32.totalorder %s141, %s142
      %p156 = scmp.eq.s32.totalorder %s24, 1
      %p157 = por %p155, %p156
      %p159 = scmp.ne.s32.totalorder %s142, %s158
      %p160 = scmp.eq.s32.totalorder %s24, 0
      %p161 = por %p159, %p160
      %p162 = scmp.le.s32.totalorder 1, %s18
      %p163 = scmp.lt.s32.totalorder %s18, 3
      %p164 = pnand %p162, %p163
      %p165 = pneg %p164
      // Predicated region
      $region9: #{tpu_custom_call.1} parent=5 // pred_check
        _
      $region10: #{tpu_custom_call.1} parent=5 // pred_check_branch
        %167 = sbr.rel (%p164) target = $region12
      $region11: #{tpu_custom_call.1} parent=5 // pred_region
        %s168 = ssub.s32 %s18, 1
        // Predicated region
        $region13: #{tpu_custom_call.1} parent=11 // pred_check
          %p169 = pneg %p65
        $region14: #{tpu_custom_call.1} parent=11 // pred_check_branch
          %171 = sbr.rel (%p169) target = $region16
        $region15: #{tpu_custom_call.1} parent=11 // pred_region
          %s173 = ssub.s32 4096, 4096
          %174 = vsyncadd [#allocation6], %s173
          %s175 = sshll.u32 [#allocation5], 4
          %s176 = int_to_ptr.vmem [resolvable:$true] %s175
          %181 = dma.hbm_to_vmem [thread:$0]  %s1, 4096, %s176, [#allocation6], 256, 256, 16
        $region16: #{tpu_custom_call.1} parent=11 // pred_fallthru
          _
        // Predicated region
        $region17: #{tpu_custom_call.1} parent=11 // pred_check
          %p182 = pneg %p86
        $region18: #{tpu_custom_call.1} parent=11 // pred_check_branch
          %184 = sbr.rel (%p182) target = $region20
        $region19: #{tpu_custom_call.1} parent=11 // pred_region
          _
        $region20: #{tpu_custom_call.1} parent=11 // pred_fallthru
          _
        // Predicated region
        $region21: #{tpu_custom_call.1} parent=11 // pred_check
          %p185 = pneg %p107
        $region22: #{tpu_custom_call.1} parent=11 // pred_check_branch
          %187 = sbr.rel (%p185) target = $region24
        $region23: #{tpu_custom_call.1} parent=11 // pred_region
          %s189 = ssub.s32 4096, 4096
          %190 = vsyncadd [#allocation6], %s189
          %s191 = sshll.u32 [#allocation7], 4
          %s192 = int_to_ptr.vmem [resolvable:$true] %s191
          %197 = dma.hbm_to_vmem [thread:$0]  %s3, 4096, %s192, [#allocation6], 64, 64, 4
        $region24: #{tpu_custom_call.1} parent=11 // pred_fallthru
          _
        // Predicated region
        $region25: #{tpu_custom_call.1} parent=11 // pred_check
          %p198 = pneg %p128
        $region26: #{tpu_custom_call.1} parent=11 // pred_check_branch
          %200 = sbr.rel (%p198) target = $region28
        $region27: #{tpu_custom_call.1} parent=11 // pred_region
          _
        $region28: #{tpu_custom_call.1} parent=11 // pred_fallthru
          _
      $region12: #{tpu_custom_call.1} parent=5 // pred_fallthru
        _
      %p201 = scmp.lt.s32.totalorder %s18, 2
      // Predicated region
      $region29: #{tpu_custom_call.1} parent=5 // pred_check
        %p202 = pneg %p201
      $region30: #{tpu_custom_call.1} parent=5 // pred_check_branch
        %204 = sbr.rel (%p202) target = $region32
      $region31: #{tpu_custom_call.1} parent=5 // pred_region
        // Predicated region
        $region33: #{tpu_custom_call.1} parent=31 // pred_check
          %p205 = pneg %p38
        $region34: #{tpu_custom_call.1} parent=31 // pred_check_branch
          %207 = sbr.rel (%p205) target = $region36
        $region35: #{tpu_custom_call.1} parent=31 // pred_region
          %s208 = sand.u32 %s28, 1
          %s209 = scalar_lea.sflag [#allocation3], %s208
          %s210 = sand.u32 %s28, 1
          %s211 = smul.addr %s210, 128
          %s212 = scalar_lea.vmem [#allocation2], %s211
          %s213 = smul.u32 32, %s18
          %s215 = ssub.s32 2048, 2048
          %216 = vsyncadd %s209, %s215
          %s217 = smul.addr %s213, 64
          %s218 = scalar_lea.hbm %s0, %s217
          %s219 = sshll.u32 %s212, 4
          %s220 = int_to_ptr.vmem [resolvable:$true] %s219
          %225 = dma.hbm_to_vmem [thread:$0]  %s218, 2048, %s220, %s209, 64, 64, 4
        $region36: #{tpu_custom_call.1} parent=31 // pred_fallthru
          _
      $region32: #{tpu_custom_call.1} parent=5 // pred_fallthru
        _
      %p226 = scmp.le.s32.totalorder 1, %s18
      %p227 = scmp.lt.s32.totalorder %s18, 3
      %p228 = pnand %p226, %p227
      %p229 = pneg %p228
      // Predicated region
      $region37: #{tpu_custom_call.1} parent=5 // pred_check
        _
      $region38: #{tpu_custom_call.1} parent=5 // pred_check_branch
        %231 = sbr.rel (%p228) target = $region40
      $region39: #{tpu_custom_call.1} parent=5 // pred_region
        %s232 = ssub.s32 %s18, 1
        %s233 = sand.u32 %s31, 1
        %s234 = scalar_lea.sflag [#allocation3], %s233
        %s235 = sand.u32 %s31, 1
        %s236 = smul.addr %s235, 128
        %s237 = scalar_lea.vmem [#allocation2], %s236
        // Predicated region
        $region41: #{tpu_custom_call.1} parent=39 // pred_check
          %p238 = pneg %p44
        $region42: #{tpu_custom_call.1} parent=39 // pred_check_branch
          %240 = sbr.rel (%p238) target = $region44
        $region43: #{tpu_custom_call.1} parent=39 // pred_region
          %241 = dma.done %s234, 2048
        $region44: #{tpu_custom_call.1} parent=39 // pred_fallthru
          _
        // Predicated region
        $region45: #{tpu_custom_call.1} parent=39 // pred_check
          %p242 = pneg %p65
        $region46: #{tpu_custom_call.1} parent=39 // pred_check_branch
          %244 = sbr.rel (%p242) target = $region48
        $region47: #{tpu_custom_call.1} parent=39 // pred_region
          %245 = dma.done [#allocation6], 4096
        $region48: #{tpu_custom_call.1} parent=39 // pred_fallthru
          _
        // Predicated region
        $region49: #{tpu_custom_call.1} parent=39 // pred_check
          %p246 = pneg %p107
        $region50: #{tpu_custom_call.1} parent=39 // pred_check_branch
          %248 = sbr.rel (%p246) target = $region52
        $region51: #{tpu_custom_call.1} parent=39 // pred_region
          %249 = dma.done [#allocation6], 4096
        $region52: #{tpu_custom_call.1} parent=39 // pred_fallthru
          _
        %s250 = sand.u32 %s31, 1
        %s251 = scalar_lea.sflag [#allocation3], %s250
        %s252 = sand.u32 %s31, 1
        %s253 = smul.addr %s252, 128
        %s254 = scalar_lea.vmem [#allocation2], %s253
        %p255 = pneg %p44
        %p256 = pneg %p41
        %p257 = pneg %p65
        %p258 = pneg %p62
        %p259 = pneg %p86
        %p260 = pneg %p83
        %p261 = pneg %p107
        %p262 = pneg %p104
        %p263 = pneg %p128
        %p264 = pneg %p125
        %p265 = pneg %p154
        %p266 = pneg %p151
        %s267 = sand.u32 %s141, 1
        %s268 = scalar_lea.sflag [#allocation4], %s267
        %s269 = sand.u32 %s141, 1
        %s270 = smul.addr %s269, 256
        %s271 = scalar_lea.vmem [#allocation8], %s270
        %s272 = smul.u32 32, %s23
        %s273 = smul.u32 32, %s23
        %v275 = vld [vmem:[%s237] sm:$0xf]
        %v276 = vld [vmem:[%s237 + $0x4] sm:$0xf]
        %v277 = vld [vmem:[%s237 + $0x8] sm:$0xf]
        %v278 = vld [vmem:[%s237 + $0xc] sm:$0xf]
        %v279 = vld [vmem:[%s237 + $0x10] sm:$0xf]
        %v280 = vld [vmem:[%s237 + $0x14] sm:$0xf]
        %v281 = vld [vmem:[%s237 + $0x18] sm:$0xf]
        %v282 = vld [vmem:[%s237 + $0x1c] sm:$0xf]
        %v283 = vld [vmem:[%s237 + $0x20] sm:$0xf]
        %v284 = vld [vmem:[%s237 + $0x24] sm:$0xf]
        %v285 = vld [vmem:[%s237 + $0x28] sm:$0xf]
        %v286 = vld [vmem:[%s237 + $0x2c] sm:$0xf]
        %v287 = vld [vmem:[%s237 + $0x30] sm:$0xf]
        %v288 = vld [vmem:[%s237 + $0x34] sm:$0xf]
        %v289 = vld [vmem:[%s237 + $0x38] sm:$0xf]
        %v290 = vld [vmem:[%s237 + $0x3c] sm:$0xf]
        %v291 = vld [vmem:[%s237 + $0x40] sm:$0xf]
        %v292 = vld [vmem:[%s237 + $0x44] sm:$0xf]
        %v293 = vld [vmem:[%s237 + $0x48] sm:$0xf]
        %v294 = vld [vmem:[%s237 + $0x4c] sm:$0xf]
        %v295 = vld [vmem:[%s237 + $0x50] sm:$0xf]
        %v296 = vld [vmem:[%s237 + $0x54] sm:$0xf]
        %v297 = vld [vmem:[%s237 + $0x58] sm:$0xf]
        %v298 = vld [vmem:[%s237 + $0x5c] sm:$0xf]
        %v299 = vld [vmem:[%s237 + $0x60] sm:$0xf]
        %v300 = vld [vmem:[%s237 + $0x64] sm:$0xf]
        %v301 = vld [vmem:[%s237 + $0x68] sm:$0xf]
        %v302 = vld [vmem:[%s237 + $0x6c] sm:$0xf]
        %v303 = vld [vmem:[%s237 + $0x70] sm:$0xf]
        %v304 = vld [vmem:[%s237 + $0x74] sm:$0xf]
        %v305 = vld [vmem:[%s237 + $0x78] sm:$0xf]
        %v306 = vld [vmem:[%s237 + $0x7c] sm:$0xf]
        %v307 = vld [vmem:[#allocation5] sm:$0xff]
        %v308 = vld [vmem:[#allocation5 + $0x8] sm:$0xff]
        %v309 = vld [vmem:[#allocation5 + $0x10] sm:$0xff]
        %v310 = vld [vmem:[#allocation5 + $0x18] sm:$0xff]
        %v311 = vld [vmem:[#allocation5 + $0x20] sm:$0xff]
        %v312 = vld [vmem:[#allocation5 + $0x28] sm:$0xff]
        %v313 = vld [vmem:[#allocation5 + $0x30] sm:$0xff]
        %v314 = vld [vmem:[#allocation5 + $0x38] sm:$0xff]
        %v315 = vld [vmem:[#allocation5 + $0x40] sm:$0xff]
        %v316 = vld [vmem:[#allocation5 + $0x48] sm:$0xff]
        %v317 = vld [vmem:[#allocation5 + $0x50] sm:$0xff]
        %v318 = vld [vmem:[#allocation5 + $0x58] sm:$0xff]
        %v319 = vld [vmem:[#allocation5 + $0x60] sm:$0xff]
        %v320 = vld [vmem:[#allocation5 + $0x68] sm:$0xff]
        %v321 = vld [vmem:[#allocation5 + $0x70] sm:$0xff]
        %v322 = vld [vmem:[#allocation5 + $0x78] sm:$0xff]
        %v323 = vld [vmem:[#allocation5 + $0x80] sm:$0xff]
        %v324 = vld [vmem:[#allocation5 + $0x88] sm:$0xff]
        %v325 = vld [vmem:[#allocation5 + $0x90] sm:$0xff]
        %v326 = vld [vmem:[#allocation5 + $0x98] sm:$0xff]
        %v327 = vld [vmem:[#allocation5 + $0xa0] sm:$0xff]
        %v328 = vld [vmem:[#allocation5 + $0xa8] sm:$0xff]
        %v329 = vld [vmem:[#allocation5 + $0xb0] sm:$0xff]
        %v330 = vld [vmem:[#allocation5 + $0xb8] sm:$0xff]
        %v331 = vld [vmem:[#allocation5 + $0xc0] sm:$0xff]
        %v332 = vld [vmem:[#allocation5 + $0xc8] sm:$0xff]
        %v333 = vld [vmem:[#allocation5 + $0xd0] sm:$0xff]
        %v334 = vld [vmem:[#allocation5 + $0xd8] sm:$0xff]
        %v335 = vld [vmem:[#allocation5 + $0xe0] sm:$0xff]
        %v336 = vld [vmem:[#allocation5 + $0xe8] sm:$0xff]
        %v337 = vld [vmem:[#allocation5 + $0xf0] sm:$0xff]
        %v338 = vld [vmem:[#allocation5 + $0xf8] sm:$0xff]
        %v339 = vld [vmem:[%s2] sm:$0xf]
        %v341 = vlaneseq
        %v342 = vshrl.u32 %v341, 7
        %v343 = vsub.s32 0, %v342
        %v344 = vrot.slane %v339, %v343
        %v345 = vlaneseq
        %v346 = vshrl.u32 %v345, 7
        %v347 = vsub.s32 1, %v346
        %v348 = vrot.slane %v339, %v347
        %v349 = vlaneseq
        %v350 = vshrl.u32 %v349, 7
        %v351 = vsub.s32 2, %v350
        %v352 = vrot.slane %v339, %v351
        %v353 = vlaneseq
        %v354 = vshrl.u32 %v353, 7
        %v355 = vsub.s32 3, %v354
        %v356 = vrot.slane %v339, %v355
        %v393 = vunpack.c.l.b16 %v275
        %v394 = vunpack.c.l.b16 %v276
        %v395 = vunpack.c.l.b16 %v277
        %v396 = vunpack.c.l.b16 %v278
        %v397 = vunpack.c.l.b16 %v279
        %v398 = vunpack.c.l.b16 %v280
        %v399 = vunpack.c.l.b16 %v281
        %v400 = vunpack.c.l.b16 %v282
        %v401 = vunpack.c.l.b16 %v283
        %v402 = vunpack.c.l.b16 %v284
        %v403 = vunpack.c.l.b16 %v285
        %v404 = vunpack.c.l.b16 %v286
        %v405 = vunpack.c.l.b16 %v287
        %v406 = vunpack.c.l.b16 %v288
        %v407 = vunpack.c.l.b16 %v289
        %v408 = vunpack.c.l.b16 %v290
        %v409 = vunpack.c.l.b16 %v291
        %v410 = vunpack.c.l.b16 %v292
        %v411 = vunpack.c.l.b16 %v293
        %v412 = vunpack.c.l.b16 %v294
        %v413 = vunpack.c.l.b16 %v295
        %v414 = vunpack.c.l.b16 %v296
        %v415 = vunpack.c.l.b16 %v297
        %v416 = vunpack.c.l.b16 %v298
        %v417 = vunpack.c.l.b16 %v299
        %v418 = vunpack.c.l.b16 %v300
        %v419 = vunpack.c.l.b16 %v301
        %v420 = vunpack.c.l.b16 %v302
        %v421 = vunpack.c.l.b16 %v303
        %v422 = vunpack.c.l.b16 %v304
        %v423 = vunpack.c.l.b16 %v305
        %v424 = vunpack.c.l.b16 %v306
        %v425 = vpack.c.b16 %v394, %v393
        %v426 = vpack.c.b16 %v396, %v395
        %v427 = vpack.c.b16 %v398, %v397
        %v428 = vpack.c.b16 %v400, %v399
        %v429 = vpack.c.b16 %v402, %v401
        %v430 = vpack.c.b16 %v404, %v403
        %v431 = vpack.c.b16 %v406, %v405
        %v432 = vpack.c.b16 %v408, %v407
        %v433 = vpack.c.b16 %v410, %v409
        %v434 = vpack.c.b16 %v412, %v411
        %v435 = vpack.c.b16 %v414, %v413
        %v436 = vpack.c.b16 %v416, %v415
        %v437 = vpack.c.b16 %v418, %v417
        %v438 = vpack.c.b16 %v420, %v419
        %v439 = vpack.c.b16 %v422, %v421
        %v440 = vpack.c.b16 %v424, %v423
        %v489 = vunpack.c.l.b16 %v307
        %v490 = vunpack.c.h.b16 %v307
        %v491 = vunpack.c.l.b16 %v308
        %v492 = vunpack.c.h.b16 %v308
        %v493 = vunpack.c.l.b16 %v309
        %v494 = vunpack.c.h.b16 %v309
        %v495 = vunpack.c.l.b16 %v310
        %v496 = vunpack.c.h.b16 %v310
        %v497 = vunpack.c.l.b16 %v311
        %v498 = vunpack.c.h.b16 %v311
        %v499 = vunpack.c.l.b16 %v312
        %v500 = vunpack.c.h.b16 %v312
        %v501 = vunpack.c.l.b16 %v313
        %v502 = vunpack.c.h.b16 %v313
        %v503 = vunpack.c.l.b16 %v314
        %v504 = vunpack.c.h.b16 %v314
        %v505 = vunpack.c.l.b16 %v315
        %v506 = vunpack.c.h.b16 %v315
        %v507 = vunpack.c.l.b16 %v316
        %v508 = vunpack.c.h.b16 %v316
        %v509 = vunpack.c.l.b16 %v317
        %v510 = vunpack.c.h.b16 %v317
        %v511 = vunpack.c.l.b16 %v318
        %v512 = vunpack.c.h.b16 %v318
        %v513 = vunpack.c.l.b16 %v319
        %v514 = vunpack.c.h.b16 %v319
        %v515 = vunpack.c.l.b16 %v320
        %v516 = vunpack.c.h.b16 %v320
        %v517 = vunpack.c.l.b16 %v321
        %v518 = vunpack.c.h.b16 %v321
        %v519 = vunpack.c.l.b16 %v322
        %v520 = vunpack.c.h.b16 %v322
        %v521 = vunpack.c.l.b16 %v323
        %v522 = vunpack.c.h.b16 %v323
        %v523 = vunpack.c.l.b16 %v324
        %v524 = vunpack.c.h.b16 %v324
        %v525 = vunpack.c.l.b16 %v325
        %v526 = vunpack.c.h.b16 %v325
        %v527 = vunpack.c.l.b16 %v326
        %v528 = vunpack.c.h.b16 %v326
        %v529 = vunpack.c.l.b16 %v327
        %v530 = vunpack.c.h.b16 %v327
        %v531 = vunpack.c.l.b16 %v328
        %v532 = vunpack.c.h.b16 %v328
        %v533 = vunpack.c.l.b16 %v329
        %v534 = vunpack.c.h.b16 %v329
        %v535 = vunpack.c.l.b16 %v330
        %v536 = vunpack.c.h.b16 %v330
        %v537 = vunpack.c.l.b16 %v331
        %v538 = vunpack.c.h.b16 %v331
        %v539 = vunpack.c.l.b16 %v332
        %v540 = vunpack.c.h.b16 %v332
        %v541 = vunpack.c.l.b16 %v333
        %v542 = vunpack.c.h.b16 %v333
        %v543 = vunpack.c.l.b16 %v334
        %v544 = vunpack.c.h.b16 %v334
        %v545 = vunpack.c.l.b16 %v335
        %v546 = vunpack.c.h.b16 %v335
        %v547 = vunpack.c.l.b16 %v336
        %v548 = vunpack.c.h.b16 %v336
        %v549 = vunpack.c.l.b16 %v337
        %v550 = vunpack.c.h.b16 %v337
        %v551 = vunpack.c.l.b16 %v338
        %v552 = vunpack.c.h.b16 %v338
        %v553 = vpack.c.b16 %v493, %v489
        %v554 = vpack.c.b16 %v494, %v490
        %v555 = vpack.c.b16 %v495, %v491
        %v556 = vpack.c.b16 %v496, %v492
        %v557 = vpack.c.b16 %v501, %v497
        %v558 = vpack.c.b16 %v502, %v498
        %v559 = vpack.c.b16 %v503, %v499
        %v560 = vpack.c.b16 %v504, %v500
        %v561 = vpack.c.b16 %v509, %v505
        %v562 = vpack.c.b16 %v510, %v506
        %v563 = vpack.c.b16 %v511, %v507
        %v564 = vpack.c.b16 %v512, %v508
        %v565 = vpack.c.b16 %v517, %v513
        %v566 = vpack.c.b16 %v518, %v514
        %v567 = vpack.c.b16 %v519, %v515
        %v568 = vpack.c.b16 %v520, %v516
        %v569 = vpack.c.b16 %v525, %v521
        %v570 = vpack.c.b16 %v526, %v522
        %v571 = vpack.c.b16 %v527, %v523
        %v572 = vpack.c.b16 %v528, %v524
        %v573 = vpack.c.b16 %v533, %v529
        %v574 = vpack.c.b16 %v534, %v530
        %v575 = vpack.c.b16 %v535, %v531
        %v576 = vpack.c.b16 %v536, %v532
        %v577 = vpack.c.b16 %v541, %v537
        %v578 = vpack.c.b16 %v542, %v538
        %v579 = vpack.c.b16 %v543, %v539
        %v580 = vpack.c.b16 %v544, %v540
        %v581 = vpack.c.b16 %v549, %v545
        %v582 = vpack.c.b16 %v550, %v546
        %v583 = vpack.c.b16 %v551, %v547
        %v584 = vpack.c.b16 %v552, %v548
        %617 = vmatprep.subr.bf16.mxu0 %v554
        %618 = vmatpush1.bf16.msra.mxu0 %v553
        %619 = vmatprep.subr.bf16.mxu0 %v558
        %620 = vmatpush1.bf16.msra.mxu0 %v557
        %621 = vmatprep.subr.bf16.mxu0 %v562
        %622 = vmatpush1.bf16.msra.mxu0 %v561
        %623 = vmatprep.subr.bf16.mxu0 %v566
        %624 = vmatpush1.bf16.msra.mxu0 %v565
        %625 = vmatprep.subr.bf16.mxu0 %v570
        %626 = vmatpush1.bf16.msra.mxu0 %v569
        %627 = vmatprep.subr.bf16.mxu0 %v574
        %628 = vmatpush1.bf16.msra.mxu0 %v573
        %629 = vmatprep.subr.bf16.mxu0 %v578
        %630 = vmatpush1.bf16.msra.mxu0 %v577
        %631 = vmatprep.subr.bf16.mxu0 %v582
        %632 = vmatpush1.bf16.msra.mxu0 %v581
        %633 = vmatprep.subr.bf16.mxu0 0
        %634 = vmatpush1.bf16.msra.mxu0 0
        %635 = vmatprep.subr.bf16.mxu0 0
        %636 = vmatpush1.bf16.msra.mxu0 0
        %637 = vmatprep.subr.bf16.mxu0 0
        %638 = vmatpush1.bf16.msra.mxu0 0
        %639 = vmatprep.subr.bf16.mxu0 0
        %640 = vmatpush1.bf16.msra.mxu0 0
        %641 = vmatprep.subr.bf16.mxu0 0
        %642 = vmatpush1.bf16.msra.mxu0 0
        %643 = vmatprep.subr.bf16.mxu0 0
        %644 = vmatpush1.bf16.msra.mxu0 0
        %645 = vmatprep.subr.bf16.mxu0 0
        %646 = vmatpush1.bf16.msra.mxu0 0
        %647 = vmatprep.subr.bf16.mxu0 0
        %648 = vmatpush1.bf16.msra.mxu0 0
        %649 = vmatprep.mubr.bf16.mxu0 0
        %650 = vmatmul.mubr.bf16.gmra.mrb[0].mxu0 %v425
        %v651 = vpop.f32.mrb[0].mxu0
        %v652 = vadd.f32 %v344, %v651
        %v653 = vpop.f32.mrb[0].mxu0
        %v654 = vadd.f32 %v348, %v653
        %v655 = vpop.f32.mrb[0].mxu0
        %v656 = vadd.f32 %v344, %v655
        %v657 = vpop.f32.mrb[0].mxu0
        %v658 = vadd.f32 %v348, %v657
        %659 = vmatprep.mubr.bf16.mxu0 0
        %660 = vmatmul.mubr.bf16.gmra.mrb[0].mxu0 %v426
        %v661 = vpop.f32.mrb[0].mxu0
        %v662 = vadd.f32 %v344, %v661
        %v663 = vpop.f32.mrb[0].mxu0
        %v664 = vadd.f32 %v348, %v663
        %v665 = vpop.f32.mrb[0].mxu0
        %v666 = vadd.f32 %v344, %v665
        %v667 = vpop.f32.mrb[0].mxu0
        %v668 = vadd.f32 %v348, %v667
        %669 = vmatprep.mubr.bf16.mxu0 0
        %670 = vmatmul.mubr.bf16.gmra.mrb[0].mxu0 %v427
        %v671 = vpop.f32.mrb[0].mxu0
        %v672 = vadd.f32 %v344, %v671
        %v673 = vpop.f32.mrb[0].mxu0
        %v674 = vadd.f32 %v348, %v673
        %v675 = vpop.f32.mrb[0].mxu0
        %v676 = vadd.f32 %v344, %v675
        %v677 = vpop.f32.mrb[0].mxu0
        %v678 = vadd.f32 %v348, %v677
        %679 = vmatprep.mubr.bf16.mxu0 0
        %680 = vmatmul.mubr.bf16.gmra.mrb[0].mxu0 %v428
        %v681 = vpop.f32.mrb[0].mxu0
        %v682 = vadd.f32 %v344, %v681
        %v683 = vpop.f32.mrb[0].mxu0
        %v684 = vadd.f32 %v348, %v683
        %v685 = vpop.f32.mrb[0].mxu0
        %v686 = vadd.f32 %v344, %v685
        %v687 = vpop.f32.mrb[0].mxu0
        %v688 = vadd.f32 %v348, %v687
        %689 = vmatprep.mubr.bf16.mxu0 0
        %690 = vmatmul.mubr.bf16.gmra.mrb[0].mxu0 %v429
        %v691 = vpop.f32.mrb[0].mxu0
        %v692 = vadd.f32 %v344, %v691
        %v693 = vpop.f32.mrb[0].mxu0
        %v694 = vadd.f32 %v348, %v693
        %v695 = vpop.f32.mrb[0].mxu0
        %v696 = vadd.f32 %v344, %v695
        %v697 = vpop.f32.mrb[0].mxu0
        %v698 = vadd.f32 %v348, %v697
        %699 = vmatprep.mubr.bf16.mxu0 0
        %700 = vmatmul.mubr.bf16.gmra.mrb[0].mxu0 %v430
        %v701 = vpop.f32.mrb[0].mxu0
        %v702 = vadd.f32 %v344, %v701
        %v703 = vpop.f32.mrb[0].mxu0
        %v704 = vadd.f32 %v348, %v703
        %v705 = vpop.f32.mrb[0].mxu0
        %v706 = vadd.f32 %v344, %v705
        %v707 = vpop.f32.mrb[0].mxu0
        %v708 = vadd.f32 %v348, %v707
        %709 = vmatprep.mubr.bf16.mxu0 0
        %710 = vmatmul.mubr.bf16.gmra.mrb[0].mxu0 %v431
        %v711 = vpop.f32.mrb[0].mxu0
        %v712 = vadd.f32 %v344, %v711
        %v713 = vpop.f32.mrb[0].mxu0
        %v714 = vadd.f32 %v348, %v713
        %v715 = vpop.f32.mrb[0].mxu0
        %v716 = vadd.f32 %v344, %v715
        %v717 = vpop.f32.mrb[0].mxu0
        %v718 = vadd.f32 %v348, %v717
        %719 = vmatprep.mubr.bf16.mxu0 0
        %720 = vmatmul.mubr.bf16.gmra.mrb[0].mxu0 %v432
        %v721 = vpop.f32.mrb[0].mxu0
        %v722 = vadd.f32 %v344, %v721
        %v723 = vpop.f32.mrb[0].mxu0
        %v724 = vadd.f32 %v348, %v723
        %v725 = vpop.f32.mrb[0].mxu0
        %v726 = vadd.f32 %v344, %v725
        %v727 = vpop.f32.mrb[0].mxu0
        %v728 = vadd.f32 %v348, %v727
        %729 = vmatprep.mubr.bf16.mxu0 0
        %730 = vmatmul.mubr.bf16.gmra.mrb[0].mxu0 %v433
        %v731 = vpop.f32.mrb[0].mxu0
        %v732 = vadd.f32 %v344, %v731
        %v733 = vpop.f32.mrb[0].mxu0
        %v734 = vadd.f32 %v348, %v733
        %v735 = vpop.f32.mrb[0].mxu0
        %v736 = vadd.f32 %v344, %v735
        %v737 = vpop.f32.mrb[0].mxu0
        %v738 = vadd.f32 %v348, %v737
        %739 = vmatprep.mubr.bf16.mxu0 0
        %740 = vmatmul.mubr.bf16.gmra.mrb[0].mxu0 %v434
        %v741 = vpop.f32.mrb[0].mxu0
        %v742 = vadd.f32 %v344, %v741
        %v743 = vpop.f32.mrb[0].mxu0
        %v744 = vadd.f32 %v348, %v743
        %v745 = vpop.f32.mrb[0].mxu0
        %v746 = vadd.f32 %v344, %v745
        %v747 = vpop.f32.mrb[0].mxu0
        %v748 = vadd.f32 %v348, %v747
        %749 = vmatprep.mubr.bf16.mxu0 0
        %750 = vmatmul.mubr.bf16.gmra.mrb[0].mxu0 %v435
        %v751 = vpop.f32.mrb[0].mxu0
        %v752 = vadd.f32 %v344, %v751
        %v753 = vpop.f32.mrb[0].mxu0
        %v754 = vadd.f32 %v348, %v753
        %v755 = vpop.f32.mrb[0].mxu0
        %v756 = vadd.f32 %v344, %v755
        %v757 = vpop.f32.mrb[0].mxu0
        %v758 = vadd.f32 %v348, %v757
        %759 = vmatprep.mubr.bf16.mxu0 0
        %760 = vmatmul.mubr.bf16.gmra.mrb[0].mxu0 %v436
        %v761 = vpop.f32.mrb[0].mxu0
        %v762 = vadd.f32 %v344, %v761
        %v763 = vpop.f32.mrb[0].mxu0
        %v764 = vadd.f32 %v348, %v763
        %v765 = vpop.f32.mrb[0].mxu0
        %v766 = vadd.f32 %v344, %v765
        %v767 = vpop.f32.mrb[0].mxu0
        %v768 = vadd.f32 %v348, %v767
        %769 = vmatprep.mubr.bf16.mxu0 0
        %770 = vmatmul.mubr.bf16.gmra.mrb[0].mxu0 %v437
        %v771 = vpop.f32.mrb[0].mxu0
        %v772 = vadd.f32 %v344, %v771
        %v773 = vpop.f32.mrb[0].mxu0
        %v774 = vadd.f32 %v348, %v773
        %v775 = vpop.f32.mrb[0].mxu0
        %v776 = vadd.f32 %v344, %v775
        %v777 = vpop.f32.mrb[0].mxu0
        %v778 = vadd.f32 %v348, %v777
        %779 = vmatprep.mubr.bf16.mxu0 0
        %780 = vmatmul.mubr.bf16.gmra.mrb[0].mxu0 %v438
        %v781 = vpop.f32.mrb[0].mxu0
        %v782 = vadd.f32 %v344, %v781
        %v783 = vpop.f32.mrb[0].mxu0
        %v784 = vadd.f32 %v348, %v783
        %v785 = vpop.f32.mrb[0].mxu0
        %v786 = vadd.f32 %v344, %v785
        %v787 = vpop.f32.mrb[0].mxu0
        %v788 = vadd.f32 %v348, %v787
        %789 = vmatprep.mubr.bf16.mxu0 0
        %790 = vmatmul.mubr.bf16.gmra.mrb[0].mxu0 %v439
        %v791 = vpop.f32.mrb[0].mxu0
        %v792 = vadd.f32 %v344, %v791
        %v793 = vpop.f32.mrb[0].mxu0
        %v794 = vadd.f32 %v348, %v793
        %v795 = vpop.f32.mrb[0].mxu0
        %v796 = vadd.f32 %v344, %v795
        %v797 = vpop.f32.mrb[0].mxu0
        %v798 = vadd.f32 %v348, %v797
        %799 = vmatprep.mubr.bf16.mxu0 0
        %800 = vmatmul.mubr.bf16.gmra.mrb[0].mxu0 %v440
        %v801 = vpop.f32.mrb[0].mxu0
        %v802 = vadd.f32 %v344, %v801
        %v803 = vpop.f32.mrb[0].mxu0
        %v804 = vadd.f32 %v348, %v803
        %v805 = vpop.f32.mrb[0].mxu0
        %v806 = vadd.f32 %v344, %v805
        %v807 = vpop.f32.mrb[0].mxu0
        %v808 = vadd.f32 %v348, %v807
        %809 = vdwg.mxu0
        %810 = vmatprep.subr.bf16.mxu0 %v556
        %811 = vmatpush1.bf16.msra.mxu0 %v555
        %812 = vmatprep.subr.bf16.mxu0 %v560
        %813 = vmatpush1.bf16.msra.mxu0 %v559
        %814 = vmatprep.subr.bf16.mxu0 %v564
        %815 = vmatpush1.bf16.msra.mxu0 %v563
        %816 = vmatprep.subr.bf16.mxu0 %v568
        %817 = vmatpush1.bf16.msra.mxu0 %v567
        %818 = vmatprep.subr.bf16.mxu0 %v572
        %819 = vmatpush1.bf16.msra.mxu0 %v571
        %820 = vmatprep.subr.bf16.mxu0 %v576
        %821 = vmatpush1.bf16.msra.mxu0 %v575
        %822 = vmatprep.subr.bf16.mxu0 %v580
        %823 = vmatpush1.bf16.msra.mxu0 %v579
        %824 = vmatprep.subr.bf16.mxu0 %v584
        %825 = vmatpush1.bf16.msra.mxu0 %v583
        %826 = vmatprep.subr.bf16.mxu0 0
        %827 = vmatpush1.bf16.msra.mxu0 0
        %828 = vmatprep.subr.bf16.mxu0 0
        %829 = vmatpush1.bf16.msra.mxu0 0
        %830 = vmatprep.subr.bf16.mxu0 0
        %831 = vmatpush1.bf16.msra.mxu0 0
        %832 = vmatprep.subr.bf16.mxu0 0
        %833 = vmatpush1.bf16.msra.mxu0 0
        %834 = vmatprep.subr.bf16.mxu0 0
        %835 = vmatpush1.bf16.msra.mxu0 0
        %836 = vmatprep.subr.bf16.mxu0 0
        %837 = vmatpush1.bf16.msra.mxu0 0
        %838 = vmatprep.subr.bf16.mxu0 0
        %839 = vmatpush1.bf16.msra.mxu0 0
        %840 = vmatprep.subr.bf16.mxu0 0
        %841 = vmatpush1.bf16.msra.mxu0 0
        %842 = vmatprep.mubr.bf16.mxu0 0
        %843 = vmatmul.mubr.bf16.gmra.mrb[0].mxu0 %v425
        %v844 = vpop.f32.mrb[0].mxu0
        %v845 = vadd.f32 %v352, %v844
        %v846 = vpop.f32.mrb[0].mxu0
        %v847 = vadd.f32 %v356, %v846
        %v848 = vpop.f32.mrb[0].mxu0
        %v849 = vadd.f32 %v352, %v848
        %v850 = vpop.f32.mrb[0].mxu0
        %v851 = vadd.f32 %v356, %v850
        %852 = vmatprep.mubr.bf16.mxu0 0
        %853 = vmatmul.mubr.bf16.gmra.mrb[0].mxu0 %v426
        %v854 = vpop.f32.mrb[0].mxu0
        %v855 = vadd.f32 %v352, %v854
        %v856 = vpop.f32.mrb[0].mxu0
        %v857 = vadd.f32 %v356, %v856
        %v858 = vpop.f32.mrb[0].mxu0
        %v859 = vadd.f32 %v352, %v858
        %v860 = vpop.f32.mrb[0].mxu0
        %v861 = vadd.f32 %v356, %v860
        %862 = vmatprep.mubr.bf16.mxu0 0
        %863 = vmatmul.mubr.bf16.gmra.mrb[0].mxu0 %v427
        %v864 = vpop.f32.mrb[0].mxu0
        %v865 = vadd.f32 %v352, %v864
        %v866 = vpop.f32.mrb[0].mxu0
        %v867 = vadd.f32 %v356, %v866
        %v868 = vpop.f32.mrb[0].mxu0
        %v869 = vadd.f32 %v352, %v868
        %v870 = vpop.f32.mrb[0].mxu0
        %v871 = vadd.f32 %v356, %v870
        %872 = vmatprep.mubr.bf16.mxu0 0
        %873 = vmatmul.mubr.bf16.gmra.mrb[0].mxu0 %v428
        %v874 = vpop.f32.mrb[0].mxu0
        %v875 = vadd.f32 %v352, %v874
        %v876 = vpop.f32.mrb[0].mxu0
        %v877 = vadd.f32 %v356, %v876
        %v878 = vpop.f32.mrb[0].mxu0
        %v879 = vadd.f32 %v352, %v878
        %v880 = vpop.f32.mrb[0].mxu0
        %v881 = vadd.f32 %v356, %v880
        %882 = vmatprep.mubr.bf16.mxu0 0
        %883 = vmatmul.mubr.bf16.gmra.mrb[0].mxu0 %v429
        %v884 = vpop.f32.mrb[0].mxu0
        %v885 = vadd.f32 %v352, %v884
        %v886 = vpop.f32.mrb[0].mxu0
        %v887 = vadd.f32 %v356, %v886
        %v888 = vpop.f32.mrb[0].mxu0
        %v889 = vadd.f32 %v352, %v888
        %v890 = vpop.f32.mrb[0].mxu0
        %v891 = vadd.f32 %v356, %v890
        %892 = vmatprep.mubr.bf16.mxu0 0
        %893 = vmatmul.mubr.bf16.gmra.mrb[0].mxu0 %v430
        %v894 = vpop.f32.mrb[0].mxu0
        %v895 = vadd.f32 %v352, %v894
        %v896 = vpop.f32.mrb[0].mxu0
        %v897 = vadd.f32 %v356, %v896
        %v898 = vpop.f32.mrb[0].mxu0
        %v899 = vadd.f32 %v352, %v898
        %v900 = vpop.f32.mrb[0].mxu0
        %v901 = vadd.f32 %v356, %v900
        %902 = vmatprep.mubr.bf16.mxu0 0
        %903 = vmatmul.mubr.bf16.gmra.mrb[0].mxu0 %v431
        %v904 = vpop.f32.mrb[0].mxu0
        %v905 = vadd.f32 %v352, %v904
        %v906 = vpop.f32.mrb[0].mxu0
        %v907 = vadd.f32 %v356, %v906
        %v908 = vpop.f32.mrb[0].mxu0
        %v909 = vadd.f32 %v352, %v908
        %v910 = vpop.f32.mrb[0].mxu0
        %v911 = vadd.f32 %v356, %v910
        %912 = vmatprep.mubr.bf16.mxu0 0
        %913 = vmatmul.mubr.bf16.gmra.mrb[0].mxu0 %v432
        %v914 = vpop.f32.mrb[0].mxu0
        %v915 = vadd.f32 %v352, %v914
        %v916 = vpop.f32.mrb[0].mxu0
        %v917 = vadd.f32 %v356, %v916
        %v918 = vpop.f32.mrb[0].mxu0
        %v919 = vadd.f32 %v352, %v918
        %v920 = vpop.f32.mrb[0].mxu0
        %v921 = vadd.f32 %v356, %v920
        %922 = vmatprep.mubr.bf16.mxu0 0
        %923 = vmatmul.mubr.bf16.gmra.mrb[0].mxu0 %v433
        %v924 = vpop.f32.mrb[0].mxu0
        %v925 = vadd.f32 %v352, %v924
        %v926 = vpop.f32.mrb[0].mxu0
        %v927 = vadd.f32 %v356, %v926
        %v928 = vpop.f32.mrb[0].mxu0
        %v929 = vadd.f32 %v352, %v928
        %v930 = vpop.f32.mrb[0].mxu0
        %v931 = vadd.f32 %v356, %v930
        %932 = vmatprep.mubr.bf16.mxu0 0
        %933 = vmatmul.mubr.bf16.gmra.mrb[0].mxu0 %v434
        %v934 = vpop.f32.mrb[0].mxu0
        %v935 = vadd.f32 %v352, %v934
        %v936 = vpop.f32.mrb[0].mxu0
        %v937 = vadd.f32 %v356, %v936
        %v938 = vpop.f32.mrb[0].mxu0
        %v939 = vadd.f32 %v352, %v938
        %v940 = vpop.f32.mrb[0].mxu0
        %v941 = vadd.f32 %v356, %v940
        %942 = vmatprep.mubr.bf16.mxu0 0
        %943 = vmatmul.mubr.bf16.gmra.mrb[0].mxu0 %v435
        %v944 = vpop.f32.mrb[0].mxu0
        %v945 = vadd.f32 %v352, %v944
        %v946 = vpop.f32.mrb[0].mxu0
        %v947 = vadd.f32 %v356, %v946
        %v948 = vpop.f32.mrb[0].mxu0
        %v949 = vadd.f32 %v352, %v948
        %v950 = vpop.f32.mrb[0].mxu0
        %v951 = vadd.f32 %v356, %v950
        %952 = vmatprep.mubr.bf16.mxu0 0
        %953 = vmatmul.mubr.bf16.gmra.mrb[0].mxu0 %v436
        %v954 = vpop.f32.mrb[0].mxu0
        %v955 = vadd.f32 %v352, %v954
        %v956 = vpop.f32.mrb[0].mxu0
        %v957 = vadd.f32 %v356, %v956
        %v958 = vpop.f32.mrb[0].mxu0
        %v959 = vadd.f32 %v352, %v958
        %v960 = vpop.f32.mrb[0].mxu0
        %v961 = vadd.f32 %v356, %v960
        %962 = vmatprep.mubr.bf16.mxu0 0
        %963 = vmatmul.mubr.bf16.gmra.mrb[0].mxu0 %v437
        %v964 = vpop.f32.mrb[0].mxu0
        %v965 = vadd.f32 %v352, %v964
        %v966 = vpop.f32.mrb[0].mxu0
        %v967 = vadd.f32 %v356, %v966
        %v968 = vpop.f32.mrb[0].mxu0
        %v969 = vadd.f32 %v352, %v968
        %v970 = vpop.f32.mrb[0].mxu0
        %v971 = vadd.f32 %v356, %v970
        %972 = vmatprep.mubr.bf16.mxu0 0
        %973 = vmatmul.mubr.bf16.gmra.mrb[0].mxu0 %v438
        %v974 = vpop.f32.mrb[0].mxu0
        %v975 = vadd.f32 %v352, %v974
        %v976 = vpop.f32.mrb[0].mxu0
        %v977 = vadd.f32 %v356, %v976
        %v978 = vpop.f32.mrb[0].mxu0
        %v979 = vadd.f32 %v352, %v978
        %v980 = vpop.f32.mrb[0].mxu0
        %v981 = vadd.f32 %v356, %v980
        %982 = vmatprep.mubr.bf16.mxu0 0
        %983 = vmatmul.mubr.bf16.gmra.mrb[0].mxu0 %v439
        %v984 = vpop.f32.mrb[0].mxu0
        %v985 = vadd.f32 %v352, %v984
        %v986 = vpop.f32.mrb[0].mxu0
        %v987 = vadd.f32 %v356, %v986
        %v988 = vpop.f32.mrb[0].mxu0
        %v989 = vadd.f32 %v352, %v988
        %v990 = vpop.f32.mrb[0].mxu0
        %v991 = vadd.f32 %v356, %v990
        %992 = vmatprep.mubr.bf16.mxu0 0
        %993 = vmatmul.mubr.bf16.gmra.mrb[0].mxu0 %v440
        %v994 = vpop.f32.mrb[0].mxu0
        %v995 = vadd.f32 %v352, %v994
        %v996 = vpop.f32.mrb[0].mxu0
        %v997 = vadd.f32 %v356, %v996
        %v998 = vpop.f32.mrb[0].mxu0
        %v999 = vadd.f32 %v352, %v998
        %v1000 = vpop.f32.mrb[0].mxu0
        %v1001 = vadd.f32 %v356, %v1000
        %1002 = vdwg.mxu0
        %v1003 = vmax.f32 %v652, 0.0
        %v1004 = vmax.f32 %v654, 0.0
        %v1005 = vmax.f32 %v845, 0.0
        %v1006 = vmax.f32 %v847, 0.0
        %v1007 = vmax.f32 %v656, 0.0
        %v1008 = vmax.f32 %v658, 0.0
        %v1009 = vmax.f32 %v849, 0.0
        %v1010 = vmax.f32 %v851, 0.0
        %v1011 = vmax.f32 %v662, 0.0
        %v1012 = vmax.f32 %v664, 0.0
        %v1013 = vmax.f32 %v855, 0.0
        %v1014 = vmax.f32 %v857, 0.0
        %v1015 = vmax.f32 %v666, 0.0
        %v1016 = vmax.f32 %v668, 0.0
        %v1017 = vmax.f32 %v859, 0.0
        %v1018 = vmax.f32 %v861, 0.0
        %v1019 = vmax.f32 %v672, 0.0
        %v1020 = vmax.f32 %v674, 0.0
        %v1021 = vmax.f32 %v865, 0.0
        %v1022 = vmax.f32 %v867, 0.0
        %v1023 = vmax.f32 %v676, 0.0
        %v1024 = vmax.f32 %v678, 0.0
        %v1025 = vmax.f32 %v869, 0.0
        %v1026 = vmax.f32 %v871, 0.0
        %v1027 = vmax.f32 %v682, 0.0
        %v1028 = vmax.f32 %v684, 0.0
        %v1029 = vmax.f32 %v875, 0.0
        %v1030 = vmax.f32 %v877, 0.0
        %v1031 = vmax.f32 %v686, 0.0
        %v1032 = vmax.f32 %v688, 0.0
        %v1033 = vmax.f32 %v879, 0.0
        %v1034 = vmax.f32 %v881, 0.0
        %v1035 = vmax.f32 %v692, 0.0
        %v1036 = vmax.f32 %v694, 0.0
        %v1037 = vmax.f32 %v885, 0.0
        %v1038 = vmax.f32 %v887, 0.0
        %v1039 = vmax.f32 %v696, 0.0
        %v1040 = vmax.f32 %v698, 0.0
        %v1041 = vmax.f32 %v889, 0.0
        %v1042 = vmax.f32 %v891, 0.0
        %v1043 = vmax.f32 %v702, 0.0
        %v1044 = vmax.f32 %v704, 0.0
        %v1045 = vmax.f32 %v895, 0.0
        %v1046 = vmax.f32 %v897, 0.0
        %v1047 = vmax.f32 %v706, 0.0
        %v1048 = vmax.f32 %v708, 0.0
        %v1049 = vmax.f32 %v899, 0.0
        %v1050 = vmax.f32 %v901, 0.0
        %v1051 = vmax.f32 %v712, 0.0
        %v1052 = vmax.f32 %v714, 0.0
        %v1053 = vmax.f32 %v905, 0.0
        %v1054 = vmax.f32 %v907, 0.0
        %v1055 = vmax.f32 %v716, 0.0
        %v1056 = vmax.f32 %v718, 0.0
        %v1057 = vmax.f32 %v909, 0.0
        %v1058 = vmax.f32 %v911, 0.0
        %v1059 = vmax.f32 %v722, 0.0
        %v1060 = vmax.f32 %v724, 0.0
        %v1061 = vmax.f32 %v915, 0.0
        %v1062 = vmax.f32 %v917, 0.0
        %v1063 = vmax.f32 %v726, 0.0
        %v1064 = vmax.f32 %v728, 0.0
        %v1065 = vmax.f32 %v919, 0.0
        %v1066 = vmax.f32 %v921, 0.0
        %v1067 = vmax.f32 %v732, 0.0
        %v1068 = vmax.f32 %v734, 0.0
        %v1069 = vmax.f32 %v925, 0.0
        %v1070 = vmax.f32 %v927, 0.0
        %v1071 = vmax.f32 %v736, 0.0
        %v1072 = vmax.f32 %v738, 0.0
        %v1073 = vmax.f32 %v929, 0.0
        %v1074 = vmax.f32 %v931, 0.0
        %v1075 = vmax.f32 %v742, 0.0
        %v1076 = vmax.f32 %v744, 0.0
        %v1077 = vmax.f32 %v935, 0.0
        %v1078 = vmax.f32 %v937, 0.0
        %v1079 = vmax.f32 %v746, 0.0
        %v1080 = vmax.f32 %v748, 0.0
        %v1081 = vmax.f32 %v939, 0.0
        %v1082 = vmax.f32 %v941, 0.0
        %v1083 = vmax.f32 %v752, 0.0
        %v1084 = vmax.f32 %v754, 0.0
        %v1085 = vmax.f32 %v945, 0.0
        %v1086 = vmax.f32 %v947, 0.0
        %v1087 = vmax.f32 %v756, 0.0
        %v1088 = vmax.f32 %v758, 0.0
        %v1089 = vmax.f32 %v949, 0.0
        %v1090 = vmax.f32 %v951, 0.0
        %v1091 = vmax.f32 %v762, 0.0
        %v1092 = vmax.f32 %v764, 0.0
        %v1093 = vmax.f32 %v955, 0.0
        %v1094 = vmax.f32 %v957, 0.0
        %v1095 = vmax.f32 %v766, 0.0
        %v1096 = vmax.f32 %v768, 0.0
        %v1097 = vmax.f32 %v959, 0.0
        %v1098 = vmax.f32 %v961, 0.0
        %v1099 = vmax.f32 %v772, 0.0
        %v1100 = vmax.f32 %v774, 0.0
        %v1101 = vmax.f32 %v965, 0.0
        %v1102 = vmax.f32 %v967, 0.0
        %v1103 = vmax.f32 %v776, 0.0
        %v1104 = vmax.f32 %v778, 0.0
        %v1105 = vmax.f32 %v969, 0.0
        %v1106 = vmax.f32 %v971, 0.0
        %v1107 = vmax.f32 %v782, 0.0
        %v1108 = vmax.f32 %v784, 0.0
        %v1109 = vmax.f32 %v975, 0.0
        %v1110 = vmax.f32 %v977, 0.0
        %v1111 = vmax.f32 %v786, 0.0
        %v1112 = vmax.f32 %v788, 0.0
        %v1113 = vmax.f32 %v979, 0.0
        %v1114 = vmax.f32 %v981, 0.0
        %v1115 = vmax.f32 %v792, 0.0
        %v1116 = vmax.f32 %v794, 0.0
        %v1117 = vmax.f32 %v985, 0.0
        %v1118 = vmax.f32 %v987, 0.0
        %v1119 = vmax.f32 %v796, 0.0
        %v1120 = vmax.f32 %v798, 0.0
        %v1121 = vmax.f32 %v989, 0.0
        %v1122 = vmax.f32 %v991, 0.0
        %v1123 = vmax.f32 %v802, 0.0
        %v1124 = vmax.f32 %v804, 0.0
        %v1125 = vmax.f32 %v995, 0.0
        %v1126 = vmax.f32 %v997, 0.0
        %v1127 = vmax.f32 %v806, 0.0
        %v1128 = vmax.f32 %v808, 0.0
        %v1129 = vmax.f32 %v999, 0.0
        %v1130 = vmax.f32 %v1001, 0.0
        %v1131 = vpack.c.bf16 %v1007, %v1003
        %v1132 = vpack.c.bf16 %v1008, %v1004
        %v1133 = vpack.c.bf16 %v1009, %v1005
        %v1134 = vpack.c.bf16 %v1010, %v1006
        %v1135 = vpack.c.bf16 %v1015, %v1011
        %v1136 = vpack.c.bf16 %v1016, %v1012
        %v1137 = vpack.c.bf16 %v1017, %v1013
        %v1138 = vpack.c.bf16 %v1018, %v1014
        %v1139 = vpack.c.bf16 %v1023, %v1019
        %v1140 = vpack.c.bf16 %v1024, %v1020
        %v1141 = vpack.c.bf16 %v1025, %v1021
        %v1142 = vpack.c.bf16 %v1026, %v1022
        %v1143 = vpack.c.bf16 %v1031, %v1027
        %v1144 = vpack.c.bf16 %v1032, %v1028
        %v1145 = vpack.c.bf16 %v1033, %v1029
        %v1146 = vpack.c.bf16 %v1034, %v1030
        %v1147 = vpack.c.bf16 %v1039, %v1035
        %v1148 = vpack.c.bf16 %v1040, %v1036
        %v1149 = vpack.c.bf16 %v1041, %v1037
        %v1150 = vpack.c.bf16 %v1042, %v1038
        %v1151 = vpack.c.bf16 %v1047, %v1043
        %v1152 = vpack.c.bf16 %v1048, %v1044
        %v1153 = vpack.c.bf16 %v1049, %v1045
        %v1154 = vpack.c.bf16 %v1050, %v1046
        %v1155 = vpack.c.bf16 %v1055, %v1051
        %v1156 = vpack.c.bf16 %v1056, %v1052
        %v1157 = vpack.c.bf16 %v1057, %v1053
        %v1158 = vpack.c.bf16 %v1058, %v1054
        %v1159 = vpack.c.bf16 %v1063, %v1059
        %v1160 = vpack.c.bf16 %v1064, %v1060
        %v1161 = vpack.c.bf16 %v1065, %v1061
        %v1162 = vpack.c.bf16 %v1066, %v1062
        %v1163 = vpack.c.bf16 %v1071, %v1067
        %v1164 = vpack.c.bf16 %v1072, %v1068
        %v1165 = vpack.c.bf16 %v1073, %v1069
        %v1166 = vpack.c.bf16 %v1074, %v1070
        %v1167 = vpack.c.bf16 %v1079, %v1075
        %v1168 = vpack.c.bf16 %v1080, %v1076
        %v1169 = vpack.c.bf16 %v1081, %v1077
        %v1170 = vpack.c.bf16 %v1082, %v1078
        %v1171 = vpack.c.bf16 %v1087, %v1083
        %v1172 = vpack.c.bf16 %v1088, %v1084
        %v1173 = vpack.c.bf16 %v1089, %v1085
        %v1174 = vpack.c.bf16 %v1090, %v1086
        %v1175 = vpack.c.bf16 %v1095, %v1091
        %v1176 = vpack.c.bf16 %v1096, %v1092
        %v1177 = vpack.c.bf16 %v1097, %v1093
        %v1178 = vpack.c.bf16 %v1098, %v1094
        %v1179 = vpack.c.bf16 %v1103, %v1099
        %v1180 = vpack.c.bf16 %v1104, %v1100
        %v1181 = vpack.c.bf16 %v1105, %v1101
        %v1182 = vpack.c.bf16 %v1106, %v1102
        %v1183 = vpack.c.bf16 %v1111, %v1107
        %v1184 = vpack.c.bf16 %v1112, %v1108
        %v1185 = vpack.c.bf16 %v1113, %v1109
        %v1186 = vpack.c.bf16 %v1114, %v1110
        %v1187 = vpack.c.bf16 %v1119, %v1115
        %v1188 = vpack.c.bf16 %v1120, %v1116
        %v1189 = vpack.c.bf16 %v1121, %v1117
        %v1190 = vpack.c.bf16 %v1122, %v1118
        %v1191 = vpack.c.bf16 %v1127, %v1123
        %v1192 = vpack.c.bf16 %v1128, %v1124
        %v1193 = vpack.c.bf16 %v1129, %v1125
        %v1194 = vpack.c.bf16 %v1130, %v1126
        %v1195 = vld [vmem:[#allocation7] sm:$0xf]
        %v1196 = vld [vmem:[#allocation7 + $0x4] sm:$0xf]
        %v1197 = vld [vmem:[#allocation7 + $0x8] sm:$0xf]
        %v1198 = vld [vmem:[#allocation7 + $0xc] sm:$0xf]
        %v1199 = vld [vmem:[#allocation7 + $0x10] sm:$0xf]
        %v1200 = vld [vmem:[#allocation7 + $0x14] sm:$0xf]
        %v1201 = vld [vmem:[#allocation7 + $0x18] sm:$0xf]
        %v1202 = vld [vmem:[#allocation7 + $0x1c] sm:$0xf]
        %v1203 = vld [vmem:[#allocation7 + $0x20] sm:$0xf]
        %v1204 = vld [vmem:[#allocation7 + $0x24] sm:$0xf]
        %v1205 = vld [vmem:[#allocation7 + $0x28] sm:$0xf]
        %v1206 = vld [vmem:[#allocation7 + $0x2c] sm:$0xf]
        %v1207 = vld [vmem:[#allocation7 + $0x30] sm:$0xf]
        %v1208 = vld [vmem:[#allocation7 + $0x34] sm:$0xf]
        %v1209 = vld [vmem:[#allocation7 + $0x38] sm:$0xf]
        %v1210 = vld [vmem:[#allocation7 + $0x3c] sm:$0xf]
        %v1211 = vld [vmem:[#allocation7 + $0x40] sm:$0xf]
        %v1212 = vld [vmem:[#allocation7 + $0x44] sm:$0xf]
        %v1213 = vld [vmem:[#allocation7 + $0x48] sm:$0xf]
        %v1214 = vld [vmem:[#allocation7 + $0x4c] sm:$0xf]
        %v1215 = vld [vmem:[#allocation7 + $0x50] sm:$0xf]
        %v1216 = vld [vmem:[#allocation7 + $0x54] sm:$0xf]
        %v1217 = vld [vmem:[#allocation7 + $0x58] sm:$0xf]
        %v1218 = vld [vmem:[#allocation7 + $0x5c] sm:$0xf]
        %v1219 = vld [vmem:[#allocation7 + $0x60] sm:$0xf]
        %v1220 = vld [vmem:[#allocation7 + $0x64] sm:$0xf]
        %v1221 = vld [vmem:[#allocation7 + $0x68] sm:$0xf]
        %v1222 = vld [vmem:[#allocation7 + $0x6c] sm:$0xf]
        %v1223 = vld [vmem:[#allocation7 + $0x70] sm:$0xf]
        %v1224 = vld [vmem:[#allocation7 + $0x74] sm:$0xf]
        %v1225 = vld [vmem:[#allocation7 + $0x78] sm:$0xf]
        %v1226 = vld [vmem:[#allocation7 + $0x7c] sm:$0xf]
        %v1227 = vld [vmem:[#allocation7 + $0x80] sm:$0xf]
        %v1228 = vld [vmem:[#allocation7 + $0x84] sm:$0xf]
        %v1229 = vld [vmem:[#allocation7 + $0x88] sm:$0xf]
        %v1230 = vld [vmem:[#allocation7 + $0x8c] sm:$0xf]
        %v1231 = vld [vmem:[#allocation7 + $0x90] sm:$0xf]
        %v1232 = vld [vmem:[#allocation7 + $0x94] sm:$0xf]
        %v1233 = vld [vmem:[#allocation7 + $0x98] sm:$0xf]
        %v1234 = vld [vmem:[#allocation7 + $0x9c] sm:$0xf]
        %v1235 = vld [vmem:[#allocation7 + $0xa0] sm:$0xf]
        %v1236 = vld [vmem:[#allocation7 + $0xa4] sm:$0xf]
        %v1237 = vld [vmem:[#allocation7 + $0xa8] sm:$0xf]
        %v1238 = vld [vmem:[#allocation7 + $0xac] sm:$0xf]
        %v1239 = vld [vmem:[#allocation7 + $0xb0] sm:$0xf]
        %v1240 = vld [vmem:[#allocation7 + $0xb4] sm:$0xf]
        %v1241 = vld [vmem:[#allocation7 + $0xb8] sm:$0xf]
        %v1242 = vld [vmem:[#allocation7 + $0xbc] sm:$0xf]
        %v1243 = vld [vmem:[#allocation7 + $0xc0] sm:$0xf]
        %v1244 = vld [vmem:[#allocation7 + $0xc4] sm:$0xf]
        %v1245 = vld [vmem:[#allocation7 + $0xc8] sm:$0xf]
        %v1246 = vld [vmem:[#allocation7 + $0xcc] sm:$0xf]
        %v1247 = vld [vmem:[#allocation7 + $0xd0] sm:$0xf]
        %v1248 = vld [vmem:[#allocation7 + $0xd4] sm:$0xf]
        %v1249 = vld [vmem:[#allocation7 + $0xd8] sm:$0xf]
        %v1250 = vld [vmem:[#allocation7 + $0xdc] sm:$0xf]
        %v1251 = vld [vmem:[#allocation7 + $0xe0] sm:$0xf]
        %v1252 = vld [vmem:[#allocation7 + $0xe4] sm:$0xf]
        %v1253 = vld [vmem:[#allocation7 + $0xe8] sm:$0xf]
        %v1254 = vld [vmem:[#allocation7 + $0xec] sm:$0xf]
        %v1255 = vld [vmem:[#allocation7 + $0xf0] sm:$0xf]
        %v1256 = vld [vmem:[#allocation7 + $0xf4] sm:$0xf]
        %v1257 = vld [vmem:[#allocation7 + $0xf8] sm:$0xf]
        %v1258 = vld [vmem:[#allocation7 + $0xfc] sm:$0xf]
        %v1259 = vld [vmem:[%s4] sm:$0x1]
        %v1261 = vlaneseq
        %v1262 = vshrl.u32 %v1261, 7
        %v1263 = vsub.s32 0, %v1262
        %v1264 = vrot.slane %v1259, %v1263
        %v1330 = vunpack.c.l.b16 %v1195
        %v1331 = vunpack.c.l.b16 %v1196
        %v1332 = vunpack.c.l.b16 %v1197
        %v1333 = vunpack.c.l.b16 %v1198
        %v1334 = vunpack.c.l.b16 %v1199
        %v1335 = vunpack.c.l.b16 %v1200
        %v1336 = vunpack.c.l.b16 %v1201
        %v1337 = vunpack.c.l.b16 %v1202
        %v1338 = vunpack.c.l.b16 %v1203
        %v1339 = vunpack.c.l.b16 %v1204
        %v1340 = vunpack.c.l.b16 %v1205
        %v1341 = vunpack.c.l.b16 %v1206
        %v1342 = vunpack.c.l.b16 %v1207
        %v1343 = vunpack.c.l.b16 %v1208
        %v1344 = vunpack.c.l.b16 %v1209
        %v1345 = vunpack.c.l.b16 %v1210
        %v1346 = vunpack.c.l.b16 %v1211
        %v1347 = vunpack.c.l.b16 %v1212
        %v1348 = vunpack.c.l.b16 %v1213
        %v1349 = vunpack.c.l.b16 %v1214
        %v1350 = vunpack.c.l.b16 %v1215
        %v1351 = vunpack.c.l.b16 %v1216
        %v1352 = vunpack.c.l.b16 %v1217
        %v1353 = vunpack.c.l.b16 %v1218
        %v1354 = vunpack.c.l.b16 %v1219
        %v1355 = vunpack.c.l.b16 %v1220
        %v1356 = vunpack.c.l.b16 %v1221
        %v1357 = vunpack.c.l.b16 %v1222
        %v1358 = vunpack.c.l.b16 %v1223
        %v1359 = vunpack.c.l.b16 %v1224
        %v1360 = vunpack.c.l.b16 %v1225
        %v1361 = vunpack.c.l.b16 %v1226
        %v1362 = vunpack.c.l.b16 %v1227
        %v1363 = vunpack.c.l.b16 %v1228
        %v1364 = vunpack.c.l.b16 %v1229
        %v1365 = vunpack.c.l.b16 %v1230
        %v1366 = vunpack.c.l.b16 %v1231
        %v1367 = vunpack.c.l.b16 %v1232
        %v1368 = vunpack.c.l.b16 %v1233
        %v1369 = vunpack.c.l.b16 %v1234
        %v1370 = vunpack.c.l.b16 %v1235
        %v1371 = vunpack.c.l.b16 %v1236
        %v1372 = vunpack.c.l.b16 %v1237
        %v1373 = vunpack.c.l.b16 %v1238
        %v1374 = vunpack.c.l.b16 %v1239
        %v1375 = vunpack.c.l.b16 %v1240
        %v1376 = vunpack.c.l.b16 %v1241
        %v1377 = vunpack.c.l.b16 %v1242
        %v1378 = vunpack.c.l.b16 %v1243
        %v1379 = vunpack.c.l.b16 %v1244
        %v1380 = vunpack.c.l.b16 %v1245
        %v1381 = vunpack.c.l.b16 %v1246
        %v1382 = vunpack.c.l.b16 %v1247
        %v1383 = vunpack.c.l.b16 %v1248
        %v1384 = vunpack.c.l.b16 %v1249
        %v1385 = vunpack.c.l.b16 %v1250
        %v1386 = vunpack.c.l.b16 %v1251
        %v1387 = vunpack.c.l.b16 %v1252
        %v1388 = vunpack.c.l.b16 %v1253
        %v1389 = vunpack.c.l.b16 %v1254
        %v1390 = vunpack.c.l.b16 %v1255
        %v1391 = vunpack.c.l.b16 %v1256
        %v1392 = vunpack.c.l.b16 %v1257
        %v1393 = vunpack.c.l.b16 %v1258
        %v1394 = vpack.c.b16 %v1331, %v1330
        %v1395 = vpack.c.b16 %v1333, %v1332
        %v1396 = vpack.c.b16 %v1335, %v1334
        %v1397 = vpack.c.b16 %v1337, %v1336
        %v1398 = vpack.c.b16 %v1339, %v1338
        %v1399 = vpack.c.b16 %v1341, %v1340
        %v1400 = vpack.c.b16 %v1343, %v1342
        %v1401 = vpack.c.b16 %v1345, %v1344
        %v1402 = vpack.c.b16 %v1347, %v1346
        %v1403 = vpack.c.b16 %v1349, %v1348
        %v1404 = vpack.c.b16 %v1351, %v1350
        %v1405 = vpack.c.b16 %v1353, %v1352
        %v1406 = vpack.c.b16 %v1355, %v1354
        %v1407 = vpack.c.b16 %v1357, %v1356
        %v1408 = vpack.c.b16 %v1359, %v1358
        %v1409 = vpack.c.b16 %v1361, %v1360
        %v1410 = vpack.c.b16 %v1363, %v1362
        %v1411 = vpack.c.b16 %v1365, %v1364
        %v1412 = vpack.c.b16 %v1367, %v1366
        %v1413 = vpack.c.b16 %v1369, %v1368
        %v1414 = vpack.c.b16 %v1371, %v1370
        %v1415 = vpack.c.b16 %v1373, %v1372
        %v1416 = vpack.c.b16 %v1375, %v1374
        %v1417 = vpack.c.b16 %v1377, %v1376
        %v1418 = vpack.c.b16 %v1379, %v1378
        %v1419 = vpack.c.b16 %v1381, %v1380
        %v1420 = vpack.c.b16 %v1383, %v1382
        %v1421 = vpack.c.b16 %v1385, %v1384
        %v1422 = vpack.c.b16 %v1387, %v1386
        %v1423 = vpack.c.b16 %v1389, %v1388
        %v1424 = vpack.c.b16 %v1391, %v1390
        %v1425 = vpack.c.b16 %v1393, %v1392
        %1458 = vmatprep.subr.bf16.mxu0 0
        %1459 = vmatpush1.bf16.msra.mxu0 %v1394
        %1460 = vmatprep.subr.bf16.mxu0 0
        %1461 = vmatpush1.bf16.msra.mxu0 %v1395
        %1462 = vmatprep.subr.bf16.mxu0 0
        %1463 = vmatpush1.bf16.msra.mxu0 %v1396
        %1464 = vmatprep.subr.bf16.mxu0 0
        %1465 = vmatpush1.bf16.msra.mxu0 %v1397
        %1466 = vmatprep.subr.bf16.mxu0 0
        %1467 = vmatpush1.bf16.msra.mxu0 %v1398
        %1468 = vmatprep.subr.bf16.mxu0 0
        %1469 = vmatpush1.bf16.msra.mxu0 %v1399
        %1470 = vmatprep.subr.bf16.mxu0 0
        %1471 = vmatpush1.bf16.msra.mxu0 %v1400
        %1472 = vmatprep.subr.bf16.mxu0 0
        %1473 = vmatpush1.bf16.msra.mxu0 %v1401
        %1474 = vmatprep.subr.bf16.mxu0 0
        %1475 = vmatpush1.bf16.msra.mxu0 %v1402
        %1476 = vmatprep.subr.bf16.mxu0 0
        %1477 = vmatpush1.bf16.msra.mxu0 %v1403
        %1478 = vmatprep.subr.bf16.mxu0 0
        %1479 = vmatpush1.bf16.msra.mxu0 %v1404
        %1480 = vmatprep.subr.bf16.mxu0 0
        %1481 = vmatpush1.bf16.msra.mxu0 %v1405
        %1482 = vmatprep.subr.bf16.mxu0 0
        %1483 = vmatpush1.bf16.msra.mxu0 %v1406
        %1484 = vmatprep.subr.bf16.mxu0 0
        %1485 = vmatpush1.bf16.msra.mxu0 %v1407
        %1486 = vmatprep.subr.bf16.mxu0 0
        %1487 = vmatpush1.bf16.msra.mxu0 %v1408
        %1488 = vmatprep.subr.bf16.mxu0 0
        %1489 = vmatpush1.bf16.msra.mxu0 %v1409
        %1490 = vmatprep.mubr.bf16.mxu0 %v1132
        %1491 = vmatmul.mubr.bf16.gmra.mrb[0].mxu0 %v1131
        %v1492 = vpop.f32.mrb[0].mxu0
        %v1493 = vadd.f32 %v1264, %v1492
        %v1494 = vpop.f32.mrb[0].mxu0
        %v1495 = vpop.f32.mrb[0].mxu0
        %v1496 = vadd.f32 %v1264, %v1495
        %v1497 = vpop.f32.mrb[0].mxu0
        %1498 = vmatprep.mubr.bf16.mxu0 %v1136
        %1499 = vmatmul.mubr.bf16.gmra.mrb[0].mxu0 %v1135
        %v1500 = vpop.f32.mrb[0].mxu0
        %v1501 = vadd.f32 %v1264, %v1500
        %v1502 = vpop.f32.mrb[0].mxu0
        %v1503 = vpop.f32.mrb[0].mxu0
        %v1504 = vadd.f32 %v1264, %v1503
        %v1505 = vpop.f32.mrb[0].mxu0
        %1506 = vmatprep.mubr.bf16.mxu0 %v1140
        %1507 = vmatmul.mubr.bf16.gmra.mrb[0].mxu0 %v1139
        %v1508 = vpop.f32.mrb[0].mxu0
        %v1509 = vadd.f32 %v1264, %v1508
        %v1510 = vpop.f32.mrb[0].mxu0
        %v1511 = vpop.f32.mrb[0].mxu0
        %v1512 = vadd.f32 %v1264, %v1511
        %v1513 = vpop.f32.mrb[0].mxu0
        %1514 = vmatprep.mubr.bf16.mxu0 %v1144
        %1515 = vmatmul.mubr.bf16.gmra.mrb[0].mxu0 %v1143
        %v1516 = vpop.f32.mrb[0].mxu0
        %v1517 = vadd.f32 %v1264, %v1516
        %v1518 = vpop.f32.mrb[0].mxu0
        %v1519 = vpop.f32.mrb[0].mxu0
        %v1520 = vadd.f32 %v1264, %v1519
        %v1521 = vpop.f32.mrb[0].mxu0
        %1522 = vmatprep.mubr.bf16.mxu0 %v1148
        %1523 = vmatmul.mubr.bf16.gmra.mrb[0].mxu0 %v1147
        %v1524 = vpop.f32.mrb[0].mxu0
        %v1525 = vadd.f32 %v1264, %v1524
        %v1526 = vpop.f32.mrb[0].mxu0
        %v1527 = vpop.f32.mrb[0].mxu0
        %v1528 = vadd.f32 %v1264, %v1527
        %v1529 = vpop.f32.mrb[0].mxu0
        %1530 = vmatprep.mubr.bf16.mxu0 %v1152
        %1531 = vmatmul.mubr.bf16.gmra.mrb[0].mxu0 %v1151
        %v1532 = vpop.f32.mrb[0].mxu0
        %v1533 = vadd.f32 %v1264, %v1532
        %v1534 = vpop.f32.mrb[0].mxu0
        %v1535 = vpop.f32.mrb[0].mxu0
        %v1536 = vadd.f32 %v1264, %v1535
        %v1537 = vpop.f32.mrb[0].mxu0
        %1538 = vmatprep.mubr.bf16.mxu0 %v1156
        %1539 = vmatmul.mubr.bf16.gmra.mrb[0].mxu0 %v1155
        %v1540 = vpop.f32.mrb[0].mxu0
        %v1541 = vadd.f32 %v1264, %v1540
        %v1542 = vpop.f32.mrb[0].mxu0
        %v1543 = vpop.f32.mrb[0].mxu0
        %v1544 = vadd.f32 %v1264, %v1543
        %v1545 = vpop.f32.mrb[0].mxu0
        %1546 = vmatprep.mubr.bf16.mxu0 %v1160
        %1547 = vmatmul.mubr.bf16.gmra.mrb[0].mxu0 %v1159
        %v1548 = vpop.f32.mrb[0].mxu0
        %v1549 = vadd.f32 %v1264, %v1548
        %v1550 = vpop.f32.mrb[0].mxu0
        %v1551 = vpop.f32.mrb[0].mxu0
        %v1552 = vadd.f32 %v1264, %v1551
        %v1553 = vpop.f32.mrb[0].mxu0
        %1554 = vmatprep.mubr.bf16.mxu0 %v1164
        %1555 = vmatmul.mubr.bf16.gmra.mrb[0].mxu0 %v1163
        %v1556 = vpop.f32.mrb[0].mxu0
        %v1557 = vadd.f32 %v1264, %v1556
        %v1558 = vpop.f32.mrb[0].mxu0
        %v1559 = vpop.f32.mrb[0].mxu0
        %v1560 = vadd.f32 %v1264, %v1559
        %v1561 = vpop.f32.mrb[0].mxu0
        %1562 = vmatprep.mubr.bf16.mxu0 %v1168
        %1563 = vmatmul.mubr.bf16.gmra.mrb[0].mxu0 %v1167
        %v1564 = vpop.f32.mrb[0].mxu0
        %v1565 = vadd.f32 %v1264, %v1564
        %v1566 = vpop.f32.mrb[0].mxu0
        %v1567 = vpop.f32.mrb[0].mxu0
        %v1568 = vadd.f32 %v1264, %v1567
        %v1569 = vpop.f32.mrb[0].mxu0
        %1570 = vmatprep.mubr.bf16.mxu0 %v1172
        %1571 = vmatmul.mubr.bf16.gmra.mrb[0].mxu0 %v1171
        %v1572 = vpop.f32.mrb[0].mxu0
        %v1573 = vadd.f32 %v1264, %v1572
        %v1574 = vpop.f32.mrb[0].mxu0
        %v1575 = vpop.f32.mrb[0].mxu0
        %v1576 = vadd.f32 %v1264, %v1575
        %v1577 = vpop.f32.mrb[0].mxu0
        %1578 = vmatprep.mubr.bf16.mxu0 %v1176
        %1579 = vmatmul.mubr.bf16.gmra.mrb[0].mxu0 %v1175
        %v1580 = vpop.f32.mrb[0].mxu0
        %v1581 = vadd.f32 %v1264, %v1580
        %v1582 = vpop.f32.mrb[0].mxu0
        %v1583 = vpop.f32.mrb[0].mxu0
        %v1584 = vadd.f32 %v1264, %v1583
        %v1585 = vpop.f32.mrb[0].mxu0
        %1586 = vmatprep.mubr.bf16.mxu0 %v1180
        %1587 = vmatmul.mubr.bf16.gmra.mrb[0].mxu0 %v1179
        %v1588 = vpop.f32.mrb[0].mxu0
        %v1589 = vadd.f32 %v1264, %v1588
        %v1590 = vpop.f32.mrb[0].mxu0
        %v1591 = vpop.f32.mrb[0].mxu0
        %v1592 = vadd.f32 %v1264, %v1591
        %v1593 = vpop.f32.mrb[0].mxu0
        %1594 = vmatprep.mubr.bf16.mxu0 %v1184
        %1595 = vmatmul.mubr.bf16.gmra.mrb[0].mxu0 %v1183
        %v1596 = vpop.f32.mrb[0].mxu0
        %v1597 = vadd.f32 %v1264, %v1596
        %v1598 = vpop.f32.mrb[0].mxu0
        %v1599 = vpop.f32.mrb[0].mxu0
        %v1600 = vadd.f32 %v1264, %v1599
        %v1601 = vpop.f32.mrb[0].mxu0
        %1602 = vmatprep.mubr.bf16.mxu0 %v1188
        %1603 = vmatmul.mubr.bf16.gmra.mrb[0].mxu0 %v1187
        %v1604 = vpop.f32.mrb[0].mxu0
        %v1605 = vadd.f32 %v1264, %v1604
        %v1606 = vpop.f32.mrb[0].mxu0
        %v1607 = vpop.f32.mrb[0].mxu0
        %v1608 = vadd.f32 %v1264, %v1607
        %v1609 = vpop.f32.mrb[0].mxu0
        %1610 = vmatprep.mubr.bf16.mxu0 %v1192
        %1611 = vmatmul.mubr.bf16.gmra.mrb[0].mxu0 %v1191
        %v1612 = vpop.f32.mrb[0].mxu0
        %v1613 = vadd.f32 %v1264, %v1612
        %v1614 = vpop.f32.mrb[0].mxu0
        %v1615 = vpop.f32.mrb[0].mxu0
        %v1616 = vadd.f32 %v1264, %v1615
        %v1617 = vpop.f32.mrb[0].mxu0
        %1618 = vdwg.mxu0
        %1619 = vmatprep.subr.bf16.mxu0 0
        %1620 = vmatpush1.bf16.msra.mxu0 %v1410
        %1621 = vmatprep.subr.bf16.mxu0 0
        %1622 = vmatpush1.bf16.msra.mxu0 %v1411
        %1623 = vmatprep.subr.bf16.mxu0 0
        %1624 = vmatpush1.bf16.msra.mxu0 %v1412
        %1625 = vmatprep.subr.bf16.mxu0 0
        %1626 = vmatpush1.bf16.msra.mxu0 %v1413
        %1627 = vmatprep.subr.bf16.mxu0 0
        %1628 = vmatpush1.bf16.msra.mxu0 %v1414
        %1629 = vmatprep.subr.bf16.mxu0 0
        %1630 = vmatpush1.bf16.msra.mxu0 %v1415
        %1631 = vmatprep.subr.bf16.mxu0 0
        %1632 = vmatpush1.bf16.msra.mxu0 %v1416
        %1633 = vmatprep.subr.bf16.mxu0 0
        %1634 = vmatpush1.bf16.msra.mxu0 %v1417
        %1635 = vmatprep.subr.bf16.mxu0 0
        %1636 = vmatpush1.bf16.msra.mxu0 %v1418
        %1637 = vmatprep.subr.bf16.mxu0 0
        %1638 = vmatpush1.bf16.msra.mxu0 %v1419
        %1639 = vmatprep.subr.bf16.mxu0 0
        %1640 = vmatpush1.bf16.msra.mxu0 %v1420
        %1641 = vmatprep.subr.bf16.mxu0 0
        %1642 = vmatpush1.bf16.msra.mxu0 %v1421
        %1643 = vmatprep.subr.bf16.mxu0 0
        %1644 = vmatpush1.bf16.msra.mxu0 %v1422
        %1645 = vmatprep.subr.bf16.mxu0 0
        %1646 = vmatpush1.bf16.msra.mxu0 %v1423
        %1647 = vmatprep.subr.bf16.mxu0 0
        %1648 = vmatpush1.bf16.msra.mxu0 %v1424
        %1649 = vmatprep.subr.bf16.mxu0 0
        %1650 = vmatpush1.bf16.msra.mxu0 %v1425
        %1651 = vmatprep.mubr.bf16.mxu0 %v1134
        %1652 = vmatmul.mubr.bf16.gmra.mrb[0].mxu0 %v1133
        %v1653 = vpop.f32.mrb[0].mxu0
        %v1654 = vadd.f32 %v1493, %v1653
        %v1655 = vpop.f32.mrb[0].mxu0
        %v1656 = vpop.f32.mrb[0].mxu0
        %v1657 = vadd.f32 %v1496, %v1656
        %v1658 = vpop.f32.mrb[0].mxu0
        %1659 = vmatprep.mubr.bf16.mxu0 %v1138
        %1660 = vmatmul.mubr.bf16.gmra.mrb[0].mxu0 %v1137
        %v1661 = vpop.f32.mrb[0].mxu0
        %v1662 = vadd.f32 %v1501, %v1661
        %v1663 = vpop.f32.mrb[0].mxu0
        %v1664 = vpop.f32.mrb[0].mxu0
        %v1665 = vadd.f32 %v1504, %v1664
        %v1666 = vpop.f32.mrb[0].mxu0
        %1667 = vmatprep.mubr.bf16.mxu0 %v1142
        %1668 = vmatmul.mubr.bf16.gmra.mrb[0].mxu0 %v1141
        %v1669 = vpop.f32.mrb[0].mxu0
        %v1670 = vadd.f32 %v1509, %v1669
        %v1671 = vpop.f32.mrb[0].mxu0
        %v1672 = vpop.f32.mrb[0].mxu0
        %v1673 = vadd.f32 %v1512, %v1672
        %v1674 = vpop.f32.mrb[0].mxu0
        %1675 = vmatprep.mubr.bf16.mxu0 %v1146
        %1676 = vmatmul.mubr.bf16.gmra.mrb[0].mxu0 %v1145
        %v1677 = vpop.f32.mrb[0].mxu0
        %v1678 = vadd.f32 %v1517, %v1677
        %v1679 = vpop.f32.mrb[0].mxu0
        %v1680 = vpop.f32.mrb[0].mxu0
        %v1681 = vadd.f32 %v1520, %v1680
        %v1682 = vpop.f32.mrb[0].mxu0
        %1683 = vmatprep.mubr.bf16.mxu0 %v1150
        %1684 = vmatmul.mubr.bf16.gmra.mrb[0].mxu0 %v1149
        %v1685 = vpop.f32.mrb[0].mxu0
        %v1686 = vadd.f32 %v1525, %v1685
        %v1687 = vpop.f32.mrb[0].mxu0
        %v1688 = vpop.f32.mrb[0].mxu0
        %v1689 = vadd.f32 %v1528, %v1688
        %v1690 = vpop.f32.mrb[0].mxu0
        %1691 = vmatprep.mubr.bf16.mxu0 %v1154
        %1692 = vmatmul.mubr.bf16.gmra.mrb[0].mxu0 %v1153
        %v1693 = vpop.f32.mrb[0].mxu0
        %v1694 = vadd.f32 %v1533, %v1693
        %v1695 = vpop.f32.mrb[0].mxu0
        %v1696 = vpop.f32.mrb[0].mxu0
        %v1697 = vadd.f32 %v1536, %v1696
        %v1698 = vpop.f32.mrb[0].mxu0
        %1699 = vmatprep.mubr.bf16.mxu0 %v1158
        %1700 = vmatmul.mubr.bf16.gmra.mrb[0].mxu0 %v1157
        %v1701 = vpop.f32.mrb[0].mxu0
        %v1702 = vadd.f32 %v1541, %v1701
        %v1703 = vpop.f32.mrb[0].mxu0
        %v1704 = vpop.f32.mrb[0].mxu0
        %v1705 = vadd.f32 %v1544, %v1704
        %v1706 = vpop.f32.mrb[0].mxu0
        %1707 = vmatprep.mubr.bf16.mxu0 %v1162
        %1708 = vmatmul.mubr.bf16.gmra.mrb[0].mxu0 %v1161
        %v1709 = vpop.f32.mrb[0].mxu0
        %v1710 = vadd.f32 %v1549, %v1709
        %v1711 = vpop.f32.mrb[0].mxu0
        %v1712 = vpop.f32.mrb[0].mxu0
        %v1713 = vadd.f32 %v1552, %v1712
        %v1714 = vpop.f32.mrb[0].mxu0
        %1715 = vmatprep.mubr.bf16.mxu0 %v1166
        %1716 = vmatmul.mubr.bf16.gmra.mrb[0].mxu0 %v1165
        %v1717 = vpop.f32.mrb[0].mxu0
        %v1718 = vadd.f32 %v1557, %v1717
        %v1719 = vpop.f32.mrb[0].mxu0
        %v1720 = vpop.f32.mrb[0].mxu0
        %v1721 = vadd.f32 %v1560, %v1720
        %v1722 = vpop.f32.mrb[0].mxu0
        %1723 = vmatprep.mubr.bf16.mxu0 %v1170
        %1724 = vmatmul.mubr.bf16.gmra.mrb[0].mxu0 %v1169
        %v1725 = vpop.f32.mrb[0].mxu0
        %v1726 = vadd.f32 %v1565, %v1725
        %v1727 = vpop.f32.mrb[0].mxu0
        %v1728 = vpop.f32.mrb[0].mxu0
        %v1729 = vadd.f32 %v1568, %v1728
        %v1730 = vpop.f32.mrb[0].mxu0
        %1731 = vmatprep.mubr.bf16.mxu0 %v1174
        %1732 = vmatmul.mubr.bf16.gmra.mrb[0].mxu0 %v1173
        %v1733 = vpop.f32.mrb[0].mxu0
        %v1734 = vadd.f32 %v1573, %v1733
        %v1735 = vpop.f32.mrb[0].mxu0
        %v1736 = vpop.f32.mrb[0].mxu0
        %v1737 = vadd.f32 %v1576, %v1736
        %v1738 = vpop.f32.mrb[0].mxu0
        %1739 = vmatprep.mubr.bf16.mxu0 %v1178
        %1740 = vmatmul.mubr.bf16.gmra.mrb[0].mxu0 %v1177
        %v1741 = vpop.f32.mrb[0].mxu0
        %v1742 = vadd.f32 %v1581, %v1741
        %v1743 = vpop.f32.mrb[0].mxu0
        %v1744 = vpop.f32.mrb[0].mxu0
        %v1745 = vadd.f32 %v1584, %v1744
        %v1746 = vpop.f32.mrb[0].mxu0
        %1747 = vmatprep.mubr.bf16.mxu0 %v1182
        %1748 = vmatmul.mubr.bf16.gmra.mrb[0].mxu0 %v1181
        %v1749 = vpop.f32.mrb[0].mxu0
        %v1750 = vadd.f32 %v1589, %v1749
        %v1751 = vpop.f32.mrb[0].mxu0
        %v1752 = vpop.f32.mrb[0].mxu0
        %v1753 = vadd.f32 %v1592, %v1752
        %v1754 = vpop.f32.mrb[0].mxu0
        %1755 = vmatprep.mubr.bf16.mxu0 %v1186
        %1756 = vmatmul.mubr.bf16.gmra.mrb[0].mxu0 %v1185
        %v1757 = vpop.f32.mrb[0].mxu0
        %v1758 = vadd.f32 %v1597, %v1757
        %v1759 = vpop.f32.mrb[0].mxu0
        %v1760 = vpop.f32.mrb[0].mxu0
        %v1761 = vadd.f32 %v1600, %v1760
        %v1762 = vpop.f32.mrb[0].mxu0
        %1763 = vmatprep.mubr.bf16.mxu0 %v1190
        %1764 = vmatmul.mubr.bf16.gmra.mrb[0].mxu0 %v1189
        %v1765 = vpop.f32.mrb[0].mxu0
        %v1766 = vadd.f32 %v1605, %v1765
        %v1767 = vpop.f32.mrb[0].mxu0
        %v1768 = vpop.f32.mrb[0].mxu0
        %v1769 = vadd.f32 %v1608, %v1768
        %v1770 = vpop.f32.mrb[0].mxu0
        %1771 = vmatprep.mubr.bf16.mxu0 %v1194
        %1772 = vmatmul.mubr.bf16.gmra.mrb[0].mxu0 %v1193
        %v1773 = vpop.f32.mrb[0].mxu0
        %v1774 = vadd.f32 %v1613, %v1773
        %v1775 = vpop.f32.mrb[0].mxu0
        %v1776 = vpop.f32.mrb[0].mxu0
        %v1777 = vadd.f32 %v1616, %v1776
        %v1778 = vpop.f32.mrb[0].mxu0
        %1779 = vdwg.mxu0
        %1780 = vst [vmem:[%s271] sm:$0xff] %v1654
        %1781 = vst [vmem:[%s271 + $0x8] sm:$0xff] %v1657
        %1782 = vst [vmem:[%s271 + $0x10] sm:$0xff] %v1662
        %1783 = vst [vmem:[%s271 + $0x18] sm:$0xff] %v1665
        %1784 = vst [vmem:[%s271 + $0x20] sm:$0xff] %v1670
        %1785 = vst [vmem:[%s271 + $0x28] sm:$0xff] %v1673
        %1786 = vst [vmem:[%s271 + $0x30] sm:$0xff] %v1678
        %1787 = vst [vmem:[%s271 + $0x38] sm:$0xff] %v1681
        %1788 = vst [vmem:[%s271 + $0x40] sm:$0xff] %v1686
        %1789 = vst [vmem:[%s271 + $0x48] sm:$0xff] %v1689
        %1790 = vst [vmem:[%s271 + $0x50] sm:$0xff] %v1694
        %1791 = vst [vmem:[%s271 + $0x58] sm:$0xff] %v1697
        %1792 = vst [vmem:[%s271 + $0x60] sm:$0xff] %v1702
        %1793 = vst [vmem:[%s271 + $0x68] sm:$0xff] %v1705
        %1794 = vst [vmem:[%s271 + $0x70] sm:$0xff] %v1710
        %1795 = vst [vmem:[%s271 + $0x78] sm:$0xff] %v1713
        %1796 = vst [vmem:[%s271 + $0x80] sm:$0xff] %v1718
        %1797 = vst [vmem:[%s271 + $0x88] sm:$0xff] %v1721
        %1798 = vst [vmem:[%s271 + $0x90] sm:$0xff] %v1726
        %1799 = vst [vmem:[%s271 + $0x98] sm:$0xff] %v1729
        %1800 = vst [vmem:[%s271 + $0xa0] sm:$0xff] %v1734
        %1801 = vst [vmem:[%s271 + $0xa8] sm:$0xff] %v1737
        %1802 = vst [vmem:[%s271 + $0xb0] sm:$0xff] %v1742
        %1803 = vst [vmem:[%s271 + $0xb8] sm:$0xff] %v1745
        %1804 = vst [vmem:[%s271 + $0xc0] sm:$0xff] %v1750
        %1805 = vst [vmem:[%s271 + $0xc8] sm:$0xff] %v1753
        %1806 = vst [vmem:[%s271 + $0xd0] sm:$0xff] %v1758
        %1807 = vst [vmem:[%s271 + $0xd8] sm:$0xff] %v1761
        %1808 = vst [vmem:[%s271 + $0xe0] sm:$0xff] %v1766
        %1809 = vst [vmem:[%s271 + $0xe8] sm:$0xff] %v1769
        %1810 = vst [vmem:[%s271 + $0xf0] sm:$0xff] %v1774
        %1811 = vst [vmem:[%s271 + $0xf8] sm:$0xff] %v1777
        %s1812 = sand.u32 %s141, 1
        %s1813 = scalar_lea.sflag [#allocation4], %s1812
        %s1814 = sand.u32 %s141, 1
        %s1815 = smul.addr %s1814, 256
        %s1816 = scalar_lea.vmem [#allocation8], %s1815
        // Predicated region
        $region53: #{tpu_custom_call.1} parent=39 // pred_check
          %p1817 = pneg %p151
        $region54: #{tpu_custom_call.1} parent=39 // pred_check_branch
          %1819 = sbr.rel (%p1817) target = $region56
        $region55: #{tpu_custom_call.1} parent=39 // pred_region
          %s1820 = smul.u32 32, %s23
          %s1822 = ssub.s32 4096, 4096
          %1823 = vsyncadd %s1813, %s1822
          %s1824 = smul.addr %s1820, 128
          %s1825 = scalar_lea.hbm %s5, %s1824
          %s1826 = sshll.u32 %s1816, 4
          %s1827 = int_to_ptr.vmem [resolvable:$true] %s1826
          %1832 = dma.vmem_to_hbm [thread:$0]  %s1827, 4096, %s1825, %s1813, 128, 128, 8
        $region56: #{tpu_custom_call.1} parent=39 // pred_fallthru
          _
      $region40: #{tpu_custom_call.1} parent=5 // pred_fallthru
        _
      %p1833 = scmp.le.s32.totalorder 2, %s18
      // Predicated region
      $region57: #{tpu_custom_call.1} parent=5 // pred_check
        %p1834 = pneg %p1833
      $region58: #{tpu_custom_call.1} parent=5 // pred_check_branch
        %1836 = sbr.rel (%p1834) target = $region60
      $region59: #{tpu_custom_call.1} parent=5 // pred_region
        %s1837 = ssub.s32 %s18, 2
        // Predicated region
        $region61: #{tpu_custom_call.1} parent=59 // pred_check
          %p1838 = pneg %p157
        $region62: #{tpu_custom_call.1} parent=59 // pred_check_branch
          %1840 = sbr.rel (%p1838) target = $region64
        $region63: #{tpu_custom_call.1} parent=59 // pred_region
          %s1841 = sand.u32 %s142, 1
          %s1842 = scalar_lea.sflag [#allocation4], %s1841
          %s1843 = sand.u32 %s142, 1
          %s1844 = smul.addr %s1843, 256
          %s1845 = scalar_lea.vmem [#allocation8], %s1844
          %1846 = dma.done %s1842, 4096
        $region64: #{tpu_custom_call.1} parent=59 // pred_fallthru
          _
      $region60: #{tpu_custom_call.1} parent=5 // pred_fallthru
        _
    $region6: #{tpu_custom_call.1} parent=1 // loop_footer
      %s22 = sadd.s32 1, %s18
    $region7: #{tpu_custom_call.1} parent=1 // loop_footer_branch
      %17 = sbr.rel target = $region3
    $region8: #{tpu_custom_call.1} parent=1 // loop_exit
      _
    %1847 = vsyncpa [#allocation3], 1
    %s1848 = scalar_lea.sflag [#allocation3], 1
    %1849 = vsyncpa %s1848, 1
    %1850 = vsyncpa [#allocation6], 1
    %1851 = vsyncpa [#allocation4], 1
    %s1852 = scalar_lea.sflag [#allocation4], 1
    %1853 = vsyncpa %s1852, 1

</llo_original>
